<compile_context>
chip_gen: v7x
topology: tpu7x:2x2x1
jax: 0.10.0
libtpu: 0.0.40
codegen_flags: <defaults>
</compile_context>

<pallas_src>
import functools

import jax
import jax.numpy as jnp
from jax.experimental import pallas as pl
from jax.experimental.pallas import tpu as pltpu


K_MAX_NEIGHBORS = 64
_NEG_BIG = 1e30


def _round_up(v, m):
    return (v + m - 1) // m * m


# ----------------------------- Pallas kernel -------------------------------
def pointconv_kernel(feat_ref, mask_ref, w1_ref, w2_ref, b2_ref, out_ref):
    """Per-edge MLP (bias/BN folded) + masked max aggregation over neighbors.

    feat_ref: (TM, K, Dp)  grouped [x_j, pos_j - pos_i, 1, 0-pad], zeroed on
              invalid edges (bf16 or f32)
    mask_ref: (TM, K)      1.0 for valid neighbor edges, 0.0 for padding (f32)
    w1_ref  : (Dp, H1)     layer-1 weights with b1 as the constant-channel row
    w2_ref  : (H1, H2p)    layer-2 weights with BN1 folded in, padded to 128
    b2_ref  : (1, H2p)     layer-2 bias with BN1 shift folded in, padded (f32)
    out_ref : (TM, H2p)    max-aggregated features per center (f32, lane-dense)
    """
    TM, K, Dp = feat_ref.shape
    H2p = out_ref.shape[-1]

    # (TM, K, Dp) -> (TM*K, Dp): leading-dim merge only, layout unchanged.
    x = feat_ref[...].reshape(TM * K, Dp)

    # Layer 1: Linear (+ b1 via constant channel) -> ReLU.  f32 accumulate.
    h = jnp.dot(x, w1_ref[...], preferred_element_type=jnp.float32)
    h = jnp.maximum(h, 0.0)

    # Layer 2: Linear with BN1 folded in -> ReLU.
    h = jnp.dot(h.astype(w2_ref.dtype), w2_ref[...],
                preferred_element_type=jnp.float32) + b2_ref[...]
    h = jnp.maximum(h, 0.0)

    # Masked max over the neighbor axis via a broadcast penalty add
    # (every real center has >= 1 valid neighbor: itself at distance 0).
    neg = (mask_ref[...] - 1.0) * _NEG_BIG          # 0.0 valid, -1e30 invalid
    h = h.reshape(TM, K, H2p) + neg[:, :, None]
    out_ref[...] = jnp.max(h, axis=1)


def pointconv_pallas(feat, mask, w1, w2, b2, *, tile_m):
    """feat: (M_pad, K, Dp), mask: (M_pad, K) f32 -> (M_pad, H2p) f32."""
    M_pad, K, Dp = feat.shape
    H1 = w1.shape[1]
    H2p = w2.shape[1]
    assert M_pad % tile_m == 0 and tile_m % 8 == 0

    return pl.pallas_call(
        pointconv_kernel,
        out_shape=jax.ShapeDtypeStruct((M_pad, H2p), jnp.float32),
        grid=(M_pad // tile_m,),
        in_specs=[
            pl.BlockSpec((tile_m, K, Dp), lambda i: (i, 0, 0)),
            pl.BlockSpec((tile_m, K), lambda i: (i, 0)),
            # Small weights/bias stay resident (same block every step).
            pl.BlockSpec((Dp, H1), lambda i: (0, 0)),
            pl.BlockSpec((H1, H2p), lambda i: (0, 0)),
            pl.BlockSpec((1, H2p), lambda i: (0, 0)),
        ],
        out_specs=pl.BlockSpec((tile_m, H2p), lambda i: (i, 0)),
        compiler_params=pltpu.CompilerParams(
            dimension_semantics=("parallel",),
            # Explicit budget: ~20 MiB of pipelined buffers + spilled
            # intermediates at tile_m=128; headroom for larger tiles while
            # staying under v7x's 64 MiB physical VMEM.
            vmem_limit_bytes=48 * 1024 * 1024),
    )(feat, mask, w1, w2, b2)


# --------------------------- parameter folding ------------------------------
def fold_pointconv_params(params, compute_dtype):
    """Fold b1/BN1 into the linear layers, pad output channels to 128 lanes."""
    w1, b1, s1, t1, w2, b2, s2, t2 = params
    d_in, h1 = w1.shape
    h2 = w2.shape[1]

    # b1 rides on a constant-1 input channel; pad channel count to an even
    # number so each grouped HBM row stays nicely aligned.
    w1_aug = jnp.concatenate([w1, b1[None, :]], axis=0)            # (d_in+1, h1)
    dp = _round_up(d_in + 1, 2)
    if dp > d_in + 1:
        w1_aug = jnp.concatenate(
            [w1_aug, jnp.zeros((dp - d_in - 1, h1), w1.dtype)], axis=0)

    # BN1 (scale s1, shift t1) folded into layer 2.
    w2_f = w2 * s1[:, None]
    b2_f = (b2 + t1 @ w2)[None, :]

    # Pad output channels to a multiple of 128 -> dense (unmasked) stores.
    h2p = _round_up(h2, 128)
    if h2p > h2:
        w2_f = jnp.concatenate([w2_f, jnp.zeros((h1, h2p - h2), w2_f.dtype)], 1)
        b2_f = jnp.concatenate([b2_f, jnp.zeros((1, h2p - h2), b2_f.dtype)], 1)

    return (w1_aug.astype(compute_dtype), w2_f.astype(compute_dtype),
            b2_f.astype(jnp.float32), s2, t2, dp, h2)


# ------------------------------ plain-JAX glue ------------------------------
def _fps_single(pos_b, n_sample):
    """Farthest point sampling over one batch element (deterministic start=0)."""
    N = pos_b.shape[0]

    def body(i, carry):
        dist, idxs, last = carry
        d = jnp.sum((pos_b - pos_b[last]) ** 2, axis=-1)
        dist = jnp.minimum(dist, d)
        nxt = jnp.argmax(dist).astype(jnp.int32)
        idxs = idxs.at[i].set(nxt)
        return dist, idxs, nxt

    dist0 = jnp.full((N,), jnp.inf, jnp.float32)
    idxs0 = jnp.zeros((n_sample,), jnp.int32)
    _, idxs, _ = jax.lax.fori_loop(1, n_sample, body, (dist0, idxs0, jnp.int32(0)))
    return idxs


def _radius_group(pos, batch, centers_pos, centers_batch, r, max_neighbors):
    """For each center: up to `max_neighbors` same-batch points within radius r
    (lowest point index first, deterministic), plus a validity mask.  Uses
    lax.top_k instead of a full (M, N) argsort."""
    N = pos.shape[0]
    d2 = jnp.sum((centers_pos[:, None, :] - pos[None, :, :]) ** 2, axis=-1)
    in_r = (d2 <= r * r) & (centers_batch[:, None] == batch[None, :])
    big = jnp.int32(N + 1)
    score = jnp.where(in_r, jnp.arange(N, dtype=jnp.int32)[None, :], big)
    neg_vals, order = jax.lax.top_k(-score, max_neighbors)           # (M, K)
    picked = -neg_vals
    valid = (picked < big).astype(jnp.float32)                       # (M, K)
    return order.astype(jnp.int32), valid


@functools.partial(jax.jit, static_argnames=("ratio", "r", "num_batches",
                                             "points_per_batch", "tile_m",
                                             "compute_dtype"))
def sa_module_forward(x, pos, batch, params, *, ratio, r, num_batches,
                      points_per_batch, tile_m=128,
                      compute_dtype=jnp.bfloat16):
    K = K_MAX_NEIGHBORS
    n_sample = int(ratio * points_per_batch)

    # --- fps(pos, batch, ratio) ---
    pos_per_b = pos.reshape(num_batches, points_per_batch, 3)
    idx_local = jax.vmap(lambda p: _fps_single(p, n_sample))(pos_per_b)
    offsets = jnp.arange(num_batches, dtype=jnp.int32) * points_per_batch
    idx = (idx_local + offsets[:, None]).reshape(-1)                 # (M,)

    centers_pos = pos[idx]
    centers_batch = batch[idx]

    # --- radius(pos, pos[idx], r, batch, batch[idx], max_num_neighbors=64) ---
    nbr_idx, valid = _radius_group(pos, batch, centers_pos, centers_batch, r, K)

    # --- fold MLP params (b1 -> const channel, BN1 -> W2/b2, pad to 128) ---
    w1f, w2f, b2f, s2, t2, dp, h2 = fold_pointconv_params(params, compute_dtype)
    c_in = x.shape[1]

    # --- grouped edge features [x_j, pos_j - pos_i, 1, 0-pad], zero padding ---
    x_j = x[nbr_idx]                                                 # (M, K, C)
    rel = pos[nbr_idx] - centers_pos[:, None, :]                     # (M, K, 3)
    chans = [x_j, rel, valid[:, :, None]]
    pad_c = dp - (c_in + 3 + 1)
    if pad_c:
        chans.append(jnp.zeros((x_j.shape[0], K, pad_c), jnp.float32))
    feat = jnp.concatenate(chans, axis=-1) * valid[:, :, None]       # (M, K, Dp)
    feat = feat.astype(compute_dtype)

    # --- tile selection + padding (keeps >= 2 grid steps when possible) ---
    M = num_batches * n_sample
    tile = min(tile_m, max(8, _round_up(-(-M // 2), 8)))
    M_pad = _round_up(M, tile)
    if M_pad > M:
        feat = jnp.pad(feat, ((0, M_pad - M), (0, 0), (0, 0)))
        mask = jnp.pad(valid, ((0, M_pad - M), (0, 0)))
    else:
        mask = valid

    # --- PointConv: per-edge MLP + max aggregation (Pallas kernel) ---
    out = pointconv_pallas(feat, mask, w1f, w2f, b2f, tile_m=tile)

    # BN2 applied after the max (s2 > 0, so max commutes with the positive
    # affine), hoisted out of the per-edge kernel path.
    x_out = out[:M, :h2] * s2[None, :] + t2[None, :]

    return x_out, centers_pos, centers_batch


# -------------------------- pure-JAX reference ------------------------------
def _pointconv_reference(x, pos, nbr_idx, valid, centers_pos, params):
    """Original (unfused) PointConv math in f32, for validation."""
    w1, b1, s1, t1, w2, b2, s2, t2 = params
    x_j = x[nbr_idx]
    rel = pos[nbr_idx] - centers_pos[:, None, :]
    feat = jnp.concatenate([x_j, rel], axis=-1)
    h = jnp.maximum(feat @ w1 + b1, 0.0) * s1 + t1
    h = jnp.maximum(h @ w2 + b2, 0.0) * s2 + t2
    h = jnp.where(valid[:, :, None] > 0.5, h, -jnp.inf)
    return jnp.max(h, axis=1)


def make_mlp_params(key, c_in, h1, h2):
    """MLP([c_in, h1, h2]) = Seq(Lin,ReLU,BN) x 2, deterministic init, BN in
    eval mode (running_mean=0, running_var=1) folded to scale/shift.
    Note: s2 > 0 is required for the post-max BN2 fold (true for this init)."""
    k1, k2, kb1, kb2, kg1, kg2, kt1, kt2 = jax.random.split(key, 8)
    eps = 1e-5
    w1 = jax.random.normal(k1, (c_in, h1), jnp.float32) * 0.1
    b1 = jax.random.normal(kb1, (h1,), jnp.float32) * 0.01
    g1 = 1.0 + jax.random.normal(kg1, (h1,), jnp.float32) * 0.01
    beta1 = jax.random.normal(kt1, (h1,), jnp.float32) * 0.01
    w2 = jax.random.normal(k2, (h1, h2), jnp.float32) * 0.1
    b2 = jax.random.normal(kb2, (h2,), jnp.float32) * 0.01
    g2 = 1.0 + jax.random.normal(kg2, (h2,), jnp.float32) * 0.01
    beta2 = jax.random.normal(kt2, (h2,), jnp.float32) * 0.01
    s1 = g1 / jnp.sqrt(1.0 + eps)
    t1 = beta1
    s2 = g2 / jnp.sqrt(1.0 + eps)
    t2 = beta2
    return (w1, b1, s1, t1, w2, b2, s2, t2)


if __name__ == "__main__":
    key = jax.random.PRNGKey(0)
    kx, kp, kw = jax.random.split(key, 3)

    B, N_b, C_in = 2, 64, 4          # 2 batch elements, 64 points each
    H1, H2 = 32, 64                  # MLP([C_in+3, 32, 64])
    ratio, r = 0.5, 0.3

    pos = jax.random.uniform(kp, (B * N_b, 3), jnp.float32)
    x = jax.random.normal(kx, (B * N_b, C_in), jnp.float32)
    batch = jnp.repeat(jnp.arange(B, dtype=jnp.int32), N_b)

    params = make_mlp_params(kw, C_in + 3, H1, H2)

    x_out, pos_out, batch_out = sa_module_forward(
        x, pos, batch, params,
        ratio=ratio, r=r, num_batches=B, points_per_batch=N_b)
    jax.block_until_ready((x_out, pos_out, batch_out))

    M = B * int(ratio * N_b)
    assert x_out.shape == (M, H2)
    assert pos_out.shape == (M, 3)
    assert batch_out.shape == (M,)

    # Validate the fused bf16 kernel against the original f32 math.
    n_sample = int(ratio * N_b)
    pos_per_b = pos.reshape(B, N_b, 3)
    idx_local = jax.vmap(lambda p: _fps_single(p, n_sample))(pos_per_b)
    idx = (idx_local + (jnp.arange(B, dtype=jnp.int32) * N_b)[:, None]).reshape(-1)
    nbr_idx, valid = _radius_group(pos, batch, pos[idx], batch[idx], r,
                                   K_MAX_NEIGHBORS)
    ref = _pointconv_reference(x, pos, nbr_idx, valid, pos[idx], params)
    err = float(jnp.max(jnp.abs(x_out - ref)))
    assert err < 0.1, f"kernel/reference mismatch: max abs err {err}"

    print("KERNEL_OK")
</pallas_src>

<mosaic_0001>
module attributes {stable_mosaic.version = 11 : i64} {
  func.func @pointconv_kernel(%arg0: i32, %arg1: memref<32x64x8xbf16, #tpu.memory_space<vmem>>, %arg2: memref<32x64xf32, #tpu.memory_space<vmem>>, %arg3: memref<8x32xbf16, #tpu.memory_space<vmem>>, %arg4: memref<32x128xbf16, #tpu.memory_space<vmem>>, %arg5: memref<1x128xf32, #tpu.memory_space<vmem>>, %arg6: memref<32x128xf32, #tpu.memory_space<vmem>>) attributes {dimension_semantics = [#tpu.dimension_semantics<parallel>], iteration_bounds = array<i64: 2>, scalar_prefetch = 0 : i64, scratch_operands = 0 : i64, tpu.core_type = #tpu.core_type<tc>, window_params = [{transform_indices = @transform_0, window_bounds = array<i64: 32, 64, 8>}, {transform_indices = @transform_1, window_bounds = array<i64: 32, 64>}, {pipeline_mode = #tpu.pipeline_mode<synchronous>, transform_indices = @transform_2, window_bounds = array<i64: 8, 32>}, {pipeline_mode = #tpu.pipeline_mode<synchronous>, transform_indices = @transform_3, window_bounds = array<i64: 32, 128>}, {pipeline_mode = #tpu.pipeline_mode<synchronous>, transform_indices = @transform_4, window_bounds = array<i64: 1, 128>}, {transform_indices = @transform_5, window_bounds = array<i64: 32, 128>}]} {
    %c0 = arith.constant 0 : index
    %c0_0 = arith.constant 0 : index
    %c0_1 = arith.constant 0 : index
    %0 = vector.load %arg1[%c0, %c0_0, %c0_1] : memref<32x64x8xbf16, #tpu.memory_space<vmem>>, vector<32x64x8xbf16>
    %1 = vector.shape_cast %0 : vector<32x64x8xbf16> to vector<2048x8xbf16>
    %c0_2 = arith.constant 0 : index
    %c0_3 = arith.constant 0 : index
    %2 = vector.load %arg3[%c0_2, %c0_3] : memref<8x32xbf16, #tpu.memory_space<vmem>>, vector<8x32xbf16>
    %cst = arith.constant dense<0.000000e+00> : vector<2048x32xf32>
    %3 = tpu.matmul %1, %2, %cst {dimension_numbers = #tpu.dot_dimension_numbers<[1], [0], [0], [1], [0, 0, 1, 1], [], []>} : vector<2048x8xbf16>, vector<8x32xbf16>, vector<2048x32xf32> -> vector<2048x32xf32>
    %cst_4 = arith.constant 0.000000e+00 : f32
    %4 = vector.broadcast %cst_4 : f32 to vector<2048x32xf32>
    %5 = arith.maximumf %3, %4 : vector<2048x32xf32>
    %6 = arith.truncf %5 : vector<2048x32xf32> to vector<2048x32xbf16>
    %c0_5 = arith.constant 0 : index
    %c0_6 = arith.constant 0 : index
    %7 = vector.load %arg4[%c0_5, %c0_6] : memref<32x128xbf16, #tpu.memory_space<vmem>>, vector<32x128xbf16>
    %cst_7 = arith.constant dense<0.000000e+00> : vector<2048x128xf32>
    %8 = tpu.matmul %6, %7, %cst_7 {dimension_numbers = #tpu.dot_dimension_numbers<[1], [0], [0], [1], [0, 0, 1, 1], [], []>} : vector<2048x32xbf16>, vector<32x128xbf16>, vector<2048x128xf32> -> vector<2048x128xf32>
    %c0_8 = arith.constant 0 : index
    %c0_9 = arith.constant 0 : index
    %9 = vector.load %arg5[%c0_8, %c0_9] : memref<1x128xf32, #tpu.memory_space<vmem>>, vector<1x128xf32>
    %10 = vector.broadcast %9 : vector<1x128xf32> to vector<2048x128xf32>
    %11 = arith.addf %8, %10 : vector<2048x128xf32>
    %cst_10 = arith.constant 0.000000e+00 : f32
    %12 = vector.broadcast %cst_10 : f32 to vector<2048x128xf32>
    %13 = arith.maximumf %11, %12 : vector<2048x128xf32>
    %c0_11 = arith.constant 0 : index
    %c0_12 = arith.constant 0 : index
    %14 = vector.load %arg2[%c0_11, %c0_12] : memref<32x64xf32, #tpu.memory_space<vmem>>, vector<32x64xf32>
    %cst_13 = arith.constant 1.000000e+00 : f32
    %15 = vector.broadcast %cst_13 : f32 to vector<32x64xf32>
    %16 = arith.subf %14, %15 : vector<32x64xf32>
    %cst_14 = arith.constant 1.000000e+30 : f32
    %17 = vector.broadcast %cst_14 : f32 to vector<32x64xf32>
    %18 = arith.mulf %16, %17 : vector<32x64xf32>
    %19 = vector.shape_cast %13 : vector<2048x128xf32> to vector<32x64x128xf32>
    %20 = vector.shape_cast %18 : vector<32x64xf32> to vector<32x64x1xf32>
    %21 = vector.broadcast %20 : vector<32x64x1xf32> to vector<32x64x128xf32>
    %22 = arith.addf %19, %21 : vector<32x64x128xf32>
    %cst_15 = arith.constant dense<0xFF800000> : vector<32x128xf32>
    %23 = vector.multi_reduction <maximumf>, %22, %cst_15 [1] : vector<32x64x128xf32> to vector<32x128xf32>
    %c0_16 = arith.constant 0 : index
    %c0_17 = arith.constant 0 : index
    %24 = vector.load %arg6[%c0_16, %c0_17] : memref<32x128xf32, #tpu.memory_space<vmem>>, vector<32x128xf32>
    tpu.vector_store %arg6[%c0_16, %c0_17], %23 {strides = array<i32>} : memref<32x128xf32, #tpu.memory_space<vmem>>, vector<32x128xf32>,
    return
  }
  func.func @transform_0(%arg0: i32) -> (i32, i32, i32) {
    %c0_i32 = arith.constant 0 : i32
    %c0_i32_0 = arith.constant 0 : i32
    %c0_i32_1 = arith.constant 0 : i32
    return %arg0, %c0_i32, %c0_i32_0 : i32, i32, i32
  }
  func.func @transform_1(%arg0: i32) -> (i32, i32) {
    %c0_i32 = arith.constant 0 : i32
    %c0_i32_0 = arith.constant 0 : i32
    return %arg0, %c0_i32 : i32, i32
  }
  func.func @transform_2(%arg0: i32) -> (i32, i32) {
    %c0_i32 = arith.constant 0 : i32
    %c0_i32_0 = arith.constant 0 : i32
    %c0_i32_1 = arith.constant 0 : i32
    return %c0_i32, %c0_i32_0 : i32, i32
  }
  func.func @transform_3(%arg0: i32) -> (i32, i32) {
    %c0_i32 = arith.constant 0 : i32
    %c0_i32_0 = arith.constant 0 : i32
    %c0_i32_1 = arith.constant 0 : i32
    return %c0_i32, %c0_i32_0 : i32, i32
  }
  func.func @transform_4(%arg0: i32) -> (i32, i32) {
    %c0_i32 = arith.constant 0 : i32
    %c0_i32_0 = arith.constant 0 : i32
    %c0_i32_1 = arith.constant 0 : i32
    return %c0_i32, %c0_i32_0 : i32, i32
  }
  func.func @transform_5(%arg0: i32) -> (i32, i32) {
    %c0_i32 = arith.constant 0 : i32
    %c0_i32_0 = arith.constant 0 : i32
    return %arg0, %c0_i32 : i32, i32
  }
}

</mosaic_0001>

<llo_original>
// kernel: custom-call.2
$region0: #{custom-call.2}
  %s0 = inlined_call_operand.vmem [shape: f32[2,64], index: 0, kind: output, shape index: {}]

// kernel: sa_module_forward.1
$region0: #{sa_module_forward.1}
  #allocation0 [shape = 'u32[]', space=smem, size = 0x4, offset = 0x4, fixed_abs, tag = 'smem constant byte address 0x4 - core index']
  #allocation1 [shape = 'u32[144,128]{1,0:T(1,128)}', space=vmem, size = 0x12000, scoped, tag = 'internal scratch']
  %s0 = inlined_call_operand.vmem [shape: bf16[64,64,8], index: 0, kind: input, shape index: {}]
  %s1 = inlined_call_operand.vmem [shape: f32[64,64], index: 1, kind: input, shape index: {}]
  %s2 = inlined_call_operand.vmem [shape: bf16[8,32], index: 2, kind: input, shape index: {}]
  %s3 = inlined_call_operand.vmem [shape: bf16[32,128], index: 3, kind: input, shape index: {}]
  %s4 = inlined_call_operand.vmem [shape: f32[1,128], index: 4, kind: input, shape index: {}]
  %s5 = inlined_call_operand.vmem [shape: f32[64,128], index: 5, kind: output, shape index: {}]
  %s6 = sld [smem:[#allocation0]]
  $region53: #{sa_module_forward.1} parent=0
    _
  %s8 = ssub.s32 1, %s6
  %s9 = scalar_select 0, %s8, %s6
  loop: start=0, step=1, limit=4
  $region2: #{sa_module_forward.1} parent=0 // loop_pre_header
    _
  $region3: #{sa_module_forward.1} parent=0 // loop_header
    %s11 = sphi 0, %s15
    %p12 = scmp.ge.s32.totalorder %s11, 4
    %s21 = sphi 0, %s23
    %s24 = sphi 0, %s21
    %s25 = sphi 0, %s24
    %s41 = sphi 0, %s25
    %s47 = sphi 0, %s49
    %s50 = sphi 0, %s47
    %s51 = sphi 0, %s50
    %s67 = sphi 0, %s51
    %s71 = sphi 0, %s71
    %s73 = sphi 0, %s71
    %s74 = sphi 0, %s73
    %s88 = sphi 0, %s74
    %s92 = sphi 0, %s92
    %s94 = sphi 0, %s92
    %s95 = sphi 0, %s94
    %s109 = sphi 0, %s95
    %s113 = sphi 0, %s113
    %s115 = sphi 0, %s113
    %s116 = sphi 0, %s115
    %s130 = sphi 0, %s116
    %s136 = sphi 0, %s138
    %s139 = sphi 0, %s136
    %s140 = sphi 0, %s139
    %s156 = sphi 0, %s140
  $region4: #{sa_module_forward.1} parent=0 // loop_header_branch
    %14 = sbr.rel (%p12) target = $region8
  $region5: #{sa_module_forward.1} parent=0 // loop_body
    %s16 = ssub.s32 %s11, 1
    %s17 = ssub.s32 %s11, 2
    %s18 = sadd.s32 %s11, 1
    %s19 = ssub.s32 %s11, %s18
    %p20 = scmp.eq.s32.totalorder %s19, 0
    %s22 = sadd.s32 %s21, 1
    %s23 = scalar_select %p20, %s21, %s22
    %p26 = pneg %p20
    %p27 = scmp.eq.s32.totalorder %s11, 1
    %p28 = por %p26, %p27
    %p29 = scmp.ne.s32.totalorder %s21, %s24
    %p30 = scmp.eq.s32.totalorder %s11, 0
    %p31 = por %p29, %p30
    %p32 = scmp.ne.s32.totalorder %s21, %s24
    %p33 = scmp.eq.s32.totalorder %s16, 1
    %p34 = por %p32, %p33
    %p35 = scmp.ne.s32.totalorder %s24, %s25
    %p36 = scmp.eq.s32.totalorder %s16, 0
    %p37 = por %p35, %p36
    %p38 = scmp.ne.s32.totalorder %s24, %s25
    %p39 = scmp.eq.s32.totalorder %s17, 1
    %p40 = por %p38, %p39
    %p42 = scmp.ne.s32.totalorder %s25, %s41
    %p43 = scmp.eq.s32.totalorder %s17, 0
    %p44 = por %p42, %p43
    %s45 = ssub.s32 %s11, %s18
    %p46 = scmp.eq.s32.totalorder %s45, 0
    %s48 = sadd.s32 %s47, 1
    %s49 = scalar_select %p46, %s47, %s48
    %p52 = pneg %p46
    %p53 = scmp.eq.s32.totalorder %s11, 1
    %p54 = por %p52, %p53
    %p55 = scmp.ne.s32.totalorder %s47, %s50
    %p56 = scmp.eq.s32.totalorder %s11, 0
    %p57 = por %p55, %p56
    %p58 = scmp.ne.s32.totalorder %s47, %s50
    %p59 = scmp.eq.s32.totalorder %s16, 1
    %p60 = por %p58, %p59
    %p61 = scmp.ne.s32.totalorder %s50, %s51
    %p62 = scmp.eq.s32.totalorder %s16, 0
    %p63 = por %p61, %p62
    %p64 = scmp.ne.s32.totalorder %s50, %s51
    %p65 = scmp.eq.s32.totalorder %s17, 1
    %p66 = por %p64, %p65
    %p68 = scmp.ne.s32.totalorder %s51, %s67
    %p69 = scmp.eq.s32.totalorder %s17, 0
    %p70 = por %p68, %p69
    %s72 = sadd.s32 %s71, 1
    %p75 = scmp.eq.s32.totalorder %s11, 1
    %p76 = scmp.ne.s32.totalorder %s71, %s73
    %p77 = scmp.eq.s32.totalorder %s11, 0
    %p78 = por %p76, %p77
    %p79 = scmp.ne.s32.totalorder %s71, %s73
    %p80 = scmp.eq.s32.totalorder %s16, 1
    %p81 = por %p79, %p80
    %p82 = scmp.ne.s32.totalorder %s73, %s74
    %p83 = scmp.eq.s32.totalorder %s16, 0
    %p84 = por %p82, %p83
    %p85 = scmp.ne.s32.totalorder %s73, %s74
    %p86 = scmp.eq.s32.totalorder %s17, 1
    %p87 = por %p85, %p86
    %p89 = scmp.ne.s32.totalorder %s74, %s88
    %p90 = scmp.eq.s32.totalorder %s17, 0
    %p91 = por %p89, %p90
    %s93 = sadd.s32 %s92, 1
    %p96 = scmp.eq.s32.totalorder %s11, 1
    %p97 = scmp.ne.s32.totalorder %s92, %s94
    %p98 = scmp.eq.s32.totalorder %s11, 0
    %p99 = por %p97, %p98
    %p100 = scmp.ne.s32.totalorder %s92, %s94
    %p101 = scmp.eq.s32.totalorder %s16, 1
    %p102 = por %p100, %p101
    %p103 = scmp.ne.s32.totalorder %s94, %s95
    %p104 = scmp.eq.s32.totalorder %s16, 0
    %p105 = por %p103, %p104
    %p106 = scmp.ne.s32.totalorder %s94, %s95
    %p107 = scmp.eq.s32.totalorder %s17, 1
    %p108 = por %p106, %p107
    %p110 = scmp.ne.s32.totalorder %s95, %s109
    %p111 = scmp.eq.s32.totalorder %s17, 0
    %p112 = por %p110, %p111
    %s114 = sadd.s32 %s113, 1
    %p117 = scmp.eq.s32.totalorder %s11, 1
    %p118 = scmp.ne.s32.totalorder %s113, %s115
    %p119 = scmp.eq.s32.totalorder %s11, 0
    %p120 = por %p118, %p119
    %p121 = scmp.ne.s32.totalorder %s113, %s115
    %p122 = scmp.eq.s32.totalorder %s16, 1
    %p123 = por %p121, %p122
    %p124 = scmp.ne.s32.totalorder %s115, %s116
    %p125 = scmp.eq.s32.totalorder %s16, 0
    %p126 = por %p124, %p125
    %p127 = scmp.ne.s32.totalorder %s115, %s116
    %p128 = scmp.eq.s32.totalorder %s17, 1
    %p129 = por %p127, %p128
    %p131 = scmp.ne.s32.totalorder %s116, %s130
    %p132 = scmp.eq.s32.totalorder %s17, 0
    %p133 = por %p131, %p132
    %s134 = ssub.s32 %s11, %s18
    %p135 = scmp.eq.s32.totalorder %s134, 0
    %s137 = sadd.s32 %s136, 1
    %s138 = scalar_select %p135, %s136, %s137
    %p141 = pneg %p135
    %p142 = scmp.eq.s32.totalorder %s11, 1
    %p143 = por %p141, %p142
    %p144 = scmp.ne.s32.totalorder %s136, %s139
    %p145 = scmp.eq.s32.totalorder %s11, 0
    %p146 = por %p144, %p145
    %p147 = scmp.ne.s32.totalorder %s136, %s139
    %p148 = scmp.eq.s32.totalorder %s16, 1
    %p149 = por %p147, %p148
    %p150 = scmp.ne.s32.totalorder %s139, %s140
    %p151 = scmp.eq.s32.totalorder %s16, 0
    %p152 = por %p150, %p151
    %p153 = scmp.ne.s32.totalorder %s139, %s140
    %p154 = scmp.eq.s32.totalorder %s17, 1
    %p155 = por %p153, %p154
    %p157 = scmp.ne.s32.totalorder %s140, %s156
    %p158 = scmp.eq.s32.totalorder %s17, 0
    %p159 = por %p157, %p158
    %p160 = scmp.le.s32.totalorder 1, %s11
    %p161 = scmp.lt.s32.totalorder %s11, 3
    %p162 = pnand %p160, %p161
    %p163 = pneg %p162
    // Predicated region
    $region9: #{sa_module_forward.1} parent=5 // pred_check
      _
    $region10: #{sa_module_forward.1} parent=5 // pred_check_branch
      %165 = sbr.rel (%p162) target = $region12
    $region11: #{sa_module_forward.1} parent=5 // pred_region
      %s166 = ssub.s32 %s11, 1
      // Predicated region
      $region13: #{sa_module_forward.1} parent=11 // pred_check
        %p167 = pneg %p84
      $region14: #{sa_module_forward.1} parent=11 // pred_check_branch
        %169 = sbr.rel (%p167) target = $region16
      $region15: #{sa_module_forward.1} parent=11 // pred_region
        _
      $region16: #{sa_module_forward.1} parent=11 // pred_fallthru
        _
      // Predicated region
      $region17: #{sa_module_forward.1} parent=11 // pred_check
        %p170 = pneg %p105
      $region18: #{sa_module_forward.1} parent=11 // pred_check_branch
        %172 = sbr.rel (%p170) target = $region20
      $region19: #{sa_module_forward.1} parent=11 // pred_region
        _
      $region20: #{sa_module_forward.1} parent=11 // pred_fallthru
        _
      // Predicated region
      $region21: #{sa_module_forward.1} parent=11 // pred_check
        %p173 = pneg %p126
      $region22: #{sa_module_forward.1} parent=11 // pred_check_branch
        %175 = sbr.rel (%p173) target = $region24
      $region23: #{sa_module_forward.1} parent=11 // pred_region
        _
      $region24: #{sa_module_forward.1} parent=11 // pred_fallthru
        _
    $region12: #{sa_module_forward.1} parent=5 // pred_fallthru
      _
    %p176 = scmp.lt.s32.totalorder %s11, 2
    // Predicated region
    $region25: #{sa_module_forward.1} parent=5 // pred_check
      %p177 = pneg %p176
    $region26: #{sa_module_forward.1} parent=5 // pred_check_branch
      %179 = sbr.rel (%p177) target = $region28
    $region27: #{sa_module_forward.1} parent=5 // pred_region
      // Predicated region
      $region29: #{sa_module_forward.1} parent=27 // pred_check
        %p180 = pneg %p31
      $region30: #{sa_module_forward.1} parent=27 // pred_check_branch
        %182 = sbr.rel (%p180) target = $region32
      $region31: #{sa_module_forward.1} parent=27 // pred_region
        %s183 = smul.u32 32, %s11
        %p184 = scmp.lt.s32.totalorder %s183, 63
        %s185 = scalar_select %p184, %s183, 63
        %s186 = smul.addr %s185, 8
        %s187 = smul.addr %s186, 4
        %s188 = scalar_lea.vmem %s0, %s187
        %s189 = smul.u32 32, %s11
      $region32: #{sa_module_forward.1} parent=27 // pred_fallthru
        _
      // Predicated region
      $region33: #{sa_module_forward.1} parent=27 // pred_check
        %p190 = pneg %p57
      $region34: #{sa_module_forward.1} parent=27 // pred_check_branch
        %192 = sbr.rel (%p190) target = $region36
      $region35: #{sa_module_forward.1} parent=27 // pred_region
        %s193 = smul.u32 4, %s11
        %p194 = scmp.lt.s32.totalorder %s193, 7
        %s195 = scalar_select %p194, %s193, 7
        %s196 = smul.addr %s195, 8
        %s197 = scalar_lea.vmem %s1, %s196
        %s198 = smul.u32 4, %s11
      $region36: #{sa_module_forward.1} parent=27 // pred_fallthru
        _
    $region28: #{sa_module_forward.1} parent=5 // pred_fallthru
      _
    %p199 = scmp.le.s32.totalorder 1, %s11
    %p200 = scmp.lt.s32.totalorder %s11, 3
    %p201 = pnand %p199, %p200
    %p202 = pneg %p201
    // Predicated region
    $region37: #{sa_module_forward.1} parent=5 // pred_check
      _
    $region38: #{sa_module_forward.1} parent=5 // pred_check_branch
      %204 = sbr.rel (%p201) target = $region40
    $region39: #{sa_module_forward.1} parent=5 // pred_region
      %s205 = ssub.s32 %s11, 1
      %s206 = smul.u32 32, %s16
      %p207 = scmp.lt.s32.totalorder %s206, 63
      %s208 = scalar_select %p207, %s206, 63
      %s209 = smul.addr %s208, 8
      %s210 = smul.addr %s209, 4
      %s211 = scalar_lea.vmem %s0, %s210
      %p212 = pneg %p37
      %p213 = pneg %p34
      %s214 = smul.u32 4, %s16
      %p215 = scmp.lt.s32.totalorder %s214, 7
      %s216 = scalar_select %p215, %s214, 7
      %s217 = smul.addr %s216, 8
      %s218 = scalar_lea.vmem %s1, %s217
      %p219 = pneg %p63
      %p220 = pneg %p60
      %p221 = pneg %p84
      %p222 = pneg %p81
      %p223 = pneg %p105
      %p224 = pneg %p102
      %p225 = pneg %p126
      %p226 = pneg %p123
      %p227 = pneg %p152
      %p228 = pneg %p149
      %s229 = smul.u32 4, %s16
      %p230 = scmp.lt.s32.totalorder %s229, 7
      %s231 = scalar_select %p230, %s229, 7
      %s232 = smul.addr %s231, 8
      %s233 = scalar_lea.vmem %s5, %s232
      %s234 = smul.u32 32, %s16
      %p235 = scmp.lt.s32.totalorder %s234, 63
      %s236 = scalar_select %p235, %s234, 63
      %s237 = smul.addr %s236, 8
      %s238 = smul.addr %s237, 4
      %s239 = scalar_lea.vmem %s0, %s238
      %s240 = smul.u32 32, %s16
      %s241 = smul.u32 4, %s16
      %p242 = scmp.lt.s32.totalorder %s241, 7
      %s243 = scalar_select %p242, %s241, 7
      %s244 = smul.addr %s243, 8
      %s245 = scalar_lea.vmem %s1, %s244
      %s246 = smul.u32 4, %s16
      %s247 = smul.u32 4, %s16
      %p248 = scmp.lt.s32.totalorder %s247, 7
      %s249 = scalar_select %p248, %s247, 7
      %s250 = smul.addr %s249, 8
      %s251 = scalar_lea.vmem %s5, %s250
      %s252 = smul.u32 4, %s16
      %v254 = vld [vmem:[%s239] sm:$0xf]
      %v255 = vld [vmem:[%s239 + $0x4] sm:$0xf]
      %v256 = vld [vmem:[%s239 + $0x8] sm:$0xf]
      %v257 = vld [vmem:[%s239 + $0xc] sm:$0xf]
      %v258 = vld [vmem:[%s239 + $0x10] sm:$0xf]
      %v259 = vld [vmem:[%s239 + $0x14] sm:$0xf]
      %v260 = vld [vmem:[%s239 + $0x18] sm:$0xf]
      %v261 = vld [vmem:[%s239 + $0x1c] sm:$0xf]
      %v262 = vld [vmem:[%s239 + $0x20] sm:$0xf]
      %v263 = vld [vmem:[%s239 + $0x24] sm:$0xf]
      %v264 = vld [vmem:[%s239 + $0x28] sm:$0xf]
      %v265 = vld [vmem:[%s239 + $0x2c] sm:$0xf]
      %v266 = vld [vmem:[%s239 + $0x30] sm:$0xf]
      %v267 = vld [vmem:[%s239 + $0x34] sm:$0xf]
      %v268 = vld [vmem:[%s239 + $0x38] sm:$0xf]
      %v269 = vld [vmem:[%s239 + $0x3c] sm:$0xf]
      %v270 = vld [vmem:[%s239 + $0x40] sm:$0xf]
      %v271 = vld [vmem:[%s239 + $0x44] sm:$0xf]
      %v272 = vld [vmem:[%s239 + $0x48] sm:$0xf]
      %v273 = vld [vmem:[%s239 + $0x4c] sm:$0xf]
      %v274 = vld [vmem:[%s239 + $0x50] sm:$0xf]
      %v275 = vld [vmem:[%s239 + $0x54] sm:$0xf]
      %v276 = vld [vmem:[%s239 + $0x58] sm:$0xf]
      %v277 = vld [vmem:[%s239 + $0x5c] sm:$0xf]
      %v278 = vld [vmem:[%s239 + $0x60] sm:$0xf]
      %v279 = vld [vmem:[%s239 + $0x64] sm:$0xf]
      %v280 = vld [vmem:[%s239 + $0x68] sm:$0xf]
      %v281 = vld [vmem:[%s239 + $0x6c] sm:$0xf]
      %v282 = vld [vmem:[%s239 + $0x70] sm:$0xf]
      %v283 = vld [vmem:[%s239 + $0x74] sm:$0xf]
      %v284 = vld [vmem:[%s239 + $0x78] sm:$0xf]
      %v285 = vld [vmem:[%s239 + $0x7c] sm:$0xf]
      %v286 = vld [vmem:[%s239 + $0x80] sm:$0xf]
      %v287 = vld [vmem:[%s239 + $0x84] sm:$0xf]
      %v288 = vld [vmem:[%s239 + $0x88] sm:$0xf]
      %v289 = vld [vmem:[%s239 + $0x8c] sm:$0xf]
      %v290 = vld [vmem:[%s239 + $0x90] sm:$0xf]
      %v291 = vld [vmem:[%s239 + $0x94] sm:$0xf]
      %v292 = vld [vmem:[%s239 + $0x98] sm:$0xf]
      %v293 = vld [vmem:[%s239 + $0x9c] sm:$0xf]
      %v294 = vld [vmem:[%s239 + $0xa0] sm:$0xf]
      %v295 = vld [vmem:[%s239 + $0xa4] sm:$0xf]
      %v296 = vld [vmem:[%s239 + $0xa8] sm:$0xf]
      %v297 = vld [vmem:[%s239 + $0xac] sm:$0xf]
      %v298 = vld [vmem:[%s239 + $0xb0] sm:$0xf]
      %v299 = vld [vmem:[%s239 + $0xb4] sm:$0xf]
      %v300 = vld [vmem:[%s239 + $0xb8] sm:$0xf]
      %v301 = vld [vmem:[%s239 + $0xbc] sm:$0xf]
      %v302 = vld [vmem:[%s239 + $0xc0] sm:$0xf]
      %v303 = vld [vmem:[%s239 + $0xc4] sm:$0xf]
      %v304 = vld [vmem:[%s239 + $0xc8] sm:$0xf]
      %v305 = vld [vmem:[%s239 + $0xcc] sm:$0xf]
      %v306 = vld [vmem:[%s239 + $0xd0] sm:$0xf]
      %v307 = vld [vmem:[%s239 + $0xd4] sm:$0xf]
      %v308 = vld [vmem:[%s239 + $0xd8] sm:$0xf]
      %v309 = vld [vmem:[%s239 + $0xdc] sm:$0xf]
      %v310 = vld [vmem:[%s239 + $0xe0] sm:$0xf]
      %v311 = vld [vmem:[%s239 + $0xe4] sm:$0xf]
      %v312 = vld [vmem:[%s239 + $0xe8] sm:$0xf]
      %v313 = vld [vmem:[%s239 + $0xec] sm:$0xf]
      %v314 = vld [vmem:[%s239 + $0xf0] sm:$0xf]
      %v315 = vld [vmem:[%s239 + $0xf4] sm:$0xf]
      %v316 = vld [vmem:[%s239 + $0xf8] sm:$0xf]
      %v317 = vld [vmem:[%s239 + $0xfc] sm:$0xf]
      %v318 = vld [vmem:[%s239 + $0x100] sm:$0xf]
      %v319 = vld [vmem:[%s239 + $0x104] sm:$0xf]
      %v320 = vld [vmem:[%s239 + $0x108] sm:$0xf]
      %v321 = vld [vmem:[%s239 + $0x10c] sm:$0xf]
      %v322 = vld [vmem:[%s239 + $0x110] sm:$0xf]
      %v323 = vld [vmem:[%s239 + $0x114] sm:$0xf]
      %v324 = vld [vmem:[%s239 + $0x118] sm:$0xf]
      %v325 = vld [vmem:[%s239 + $0x11c] sm:$0xf]
      %v326 = vld [vmem:[%s239 + $0x120] sm:$0xf]
      %v327 = vld [vmem:[%s239 + $0x124] sm:$0xf]
      %v328 = vld [vmem:[%s239 + $0x128] sm:$0xf]
      %v329 = vld [vmem:[%s239 + $0x12c] sm:$0xf]
      %v330 = vld [vmem:[%s239 + $0x130] sm:$0xf]
      %v331 = vld [vmem:[%s239 + $0x134] sm:$0xf]
      %v332 = vld [vmem:[%s239 + $0x138] sm:$0xf]
      %v333 = vld [vmem:[%s239 + $0x13c] sm:$0xf]
      %v334 = vld [vmem:[%s239 + $0x140] sm:$0xf]
      %v335 = vld [vmem:[%s239 + $0x144] sm:$0xf]
      %v336 = vld [vmem:[%s239 + $0x148] sm:$0xf]
      %v337 = vld [vmem:[%s239 + $0x14c] sm:$0xf]
      %v338 = vld [vmem:[%s239 + $0x150] sm:$0xf]
      %v339 = vld [vmem:[%s239 + $0x154] sm:$0xf]
      %v340 = vld [vmem:[%s239 + $0x158] sm:$0xf]
      %v341 = vld [vmem:[%s239 + $0x15c] sm:$0xf]
      %v342 = vld [vmem:[%s239 + $0x160] sm:$0xf]
      %v343 = vld [vmem:[%s239 + $0x164] sm:$0xf]
      %v344 = vld [vmem:[%s239 + $0x168] sm:$0xf]
      %v345 = vld [vmem:[%s239 + $0x16c] sm:$0xf]
      %v346 = vld [vmem:[%s239 + $0x170] sm:$0xf]
      %v347 = vld [vmem:[%s239 + $0x174] sm:$0xf]
      %v348 = vld [vmem:[%s239 + $0x178] sm:$0xf]
      %v349 = vld [vmem:[%s239 + $0x17c] sm:$0xf]
      %v350 = vld [vmem:[%s239 + $0x180] sm:$0xf]
      %v351 = vld [vmem:[%s239 + $0x184] sm:$0xf]
      %v352 = vld [vmem:[%s239 + $0x188] sm:$0xf]
      %v353 = vld [vmem:[%s239 + $0x18c] sm:$0xf]
      %v354 = vld [vmem:[%s239 + $0x190] sm:$0xf]
      %v355 = vld [vmem:[%s239 + $0x194] sm:$0xf]
      %v356 = vld [vmem:[%s239 + $0x198] sm:$0xf]
      %v357 = vld [vmem:[%s239 + $0x19c] sm:$0xf]
      %v358 = vld [vmem:[%s239 + $0x1a0] sm:$0xf]
      %v359 = vld [vmem:[%s239 + $0x1a4] sm:$0xf]
      %v360 = vld [vmem:[%s239 + $0x1a8] sm:$0xf]
      %v361 = vld [vmem:[%s239 + $0x1ac] sm:$0xf]
      %v362 = vld [vmem:[%s239 + $0x1b0] sm:$0xf]
      %v363 = vld [vmem:[%s239 + $0x1b4] sm:$0xf]
      %v364 = vld [vmem:[%s239 + $0x1b8] sm:$0xf]
      %v365 = vld [vmem:[%s239 + $0x1bc] sm:$0xf]
      %v366 = vld [vmem:[%s239 + $0x1c0] sm:$0xf]
      %v367 = vld [vmem:[%s239 + $0x1c4] sm:$0xf]
      %v368 = vld [vmem:[%s239 + $0x1c8] sm:$0xf]
      %v369 = vld [vmem:[%s239 + $0x1cc] sm:$0xf]
      %v370 = vld [vmem:[%s239 + $0x1d0] sm:$0xf]
      %v371 = vld [vmem:[%s239 + $0x1d4] sm:$0xf]
      %v372 = vld [vmem:[%s239 + $0x1d8] sm:$0xf]
      %v373 = vld [vmem:[%s239 + $0x1dc] sm:$0xf]
      %v374 = vld [vmem:[%s239 + $0x1e0] sm:$0xf]
      %v375 = vld [vmem:[%s239 + $0x1e4] sm:$0xf]
      %v376 = vld [vmem:[%s239 + $0x1e8] sm:$0xf]
      %v377 = vld [vmem:[%s239 + $0x1ec] sm:$0xf]
      %v378 = vld [vmem:[%s239 + $0x1f0] sm:$0xf]
      %v379 = vld [vmem:[%s239 + $0x1f4] sm:$0xf]
      %v380 = vld [vmem:[%s239 + $0x1f8] sm:$0xf]
      %v381 = vld [vmem:[%s239 + $0x1fc] sm:$0xf]
      %v382 = vld [vmem:[%s239 + $0x200] sm:$0xf]
      %v383 = vld [vmem:[%s239 + $0x204] sm:$0xf]
      %v384 = vld [vmem:[%s239 + $0x208] sm:$0xf]
      %v385 = vld [vmem:[%s239 + $0x20c] sm:$0xf]
      %v386 = vld [vmem:[%s239 + $0x210] sm:$0xf]
      %v387 = vld [vmem:[%s239 + $0x214] sm:$0xf]
      %v388 = vld [vmem:[%s239 + $0x218] sm:$0xf]
      %v389 = vld [vmem:[%s239 + $0x21c] sm:$0xf]
      %v390 = vld [vmem:[%s239 + $0x220] sm:$0xf]
      %v391 = vld [vmem:[%s239 + $0x224] sm:$0xf]
      %v392 = vld [vmem:[%s239 + $0x228] sm:$0xf]
      %v393 = vld [vmem:[%s239 + $0x22c] sm:$0xf]
      %v394 = vld [vmem:[%s239 + $0x230] sm:$0xf]
      %v395 = vld [vmem:[%s239 + $0x234] sm:$0xf]
      %v396 = vld [vmem:[%s239 + $0x238] sm:$0xf]
      %v397 = vld [vmem:[%s239 + $0x23c] sm:$0xf]
      %v398 = vld [vmem:[%s239 + $0x240] sm:$0xf]
      %v399 = vld [vmem:[%s239 + $0x244] sm:$0xf]
      %v400 = vld [vmem:[%s239 + $0x248] sm:$0xf]
      %v401 = vld [vmem:[%s239 + $0x24c] sm:$0xf]
      %v402 = vld [vmem:[%s239 + $0x250] sm:$0xf]
      %v403 = vld [vmem:[%s239 + $0x254] sm:$0xf]
      %v404 = vld [vmem:[%s239 + $0x258] sm:$0xf]
      %v405 = vld [vmem:[%s239 + $0x25c] sm:$0xf]
      %v406 = vld [vmem:[%s239 + $0x260] sm:$0xf]
      %v407 = vld [vmem:[%s239 + $0x264] sm:$0xf]
      %v408 = vld [vmem:[%s239 + $0x268] sm:$0xf]
      %v409 = vld [vmem:[%s239 + $0x26c] sm:$0xf]
      %v410 = vld [vmem:[%s239 + $0x270] sm:$0xf]
      %v411 = vld [vmem:[%s239 + $0x274] sm:$0xf]
      %v412 = vld [vmem:[%s239 + $0x278] sm:$0xf]
      %v413 = vld [vmem:[%s239 + $0x27c] sm:$0xf]
      %v414 = vld [vmem:[%s239 + $0x280] sm:$0xf]
      %v415 = vld [vmem:[%s239 + $0x284] sm:$0xf]
      %v416 = vld [vmem:[%s239 + $0x288] sm:$0xf]
      %v417 = vld [vmem:[%s239 + $0x28c] sm:$0xf]
      %v418 = vld [vmem:[%s239 + $0x290] sm:$0xf]
      %v419 = vld [vmem:[%s239 + $0x294] sm:$0xf]
      %v420 = vld [vmem:[%s239 + $0x298] sm:$0xf]
      %v421 = vld [vmem:[%s239 + $0x29c] sm:$0xf]
      %v422 = vld [vmem:[%s239 + $0x2a0] sm:$0xf]
      %v423 = vld [vmem:[%s239 + $0x2a4] sm:$0xf]
      %v424 = vld [vmem:[%s239 + $0x2a8] sm:$0xf]
      %v425 = vld [vmem:[%s239 + $0x2ac] sm:$0xf]
      %v426 = vld [vmem:[%s239 + $0x2b0] sm:$0xf]
      %v427 = vld [vmem:[%s239 + $0x2b4] sm:$0xf]
      %v428 = vld [vmem:[%s239 + $0x2b8] sm:$0xf]
      %v429 = vld [vmem:[%s239 + $0x2bc] sm:$0xf]
      %v430 = vld [vmem:[%s239 + $0x2c0] sm:$0xf]
      %v431 = vld [vmem:[%s239 + $0x2c4] sm:$0xf]
      %v432 = vld [vmem:[%s239 + $0x2c8] sm:$0xf]
      %v433 = vld [vmem:[%s239 + $0x2cc] sm:$0xf]
      %v434 = vld [vmem:[%s239 + $0x2d0] sm:$0xf]
      %v435 = vld [vmem:[%s239 + $0x2d4] sm:$0xf]
      %v436 = vld [vmem:[%s239 + $0x2d8] sm:$0xf]
      %v437 = vld [vmem:[%s239 + $0x2dc] sm:$0xf]
      %v438 = vld [vmem:[%s239 + $0x2e0] sm:$0xf]
      %v439 = vld [vmem:[%s239 + $0x2e4] sm:$0xf]
      %v440 = vld [vmem:[%s239 + $0x2e8] sm:$0xf]
      %v441 = vld [vmem:[%s239 + $0x2ec] sm:$0xf]
      %v442 = vld [vmem:[%s239 + $0x2f0] sm:$0xf]
      %v443 = vld [vmem:[%s239 + $0x2f4] sm:$0xf]
      %v444 = vld [vmem:[%s239 + $0x2f8] sm:$0xf]
      %v445 = vld [vmem:[%s239 + $0x2fc] sm:$0xf]
      %v446 = vld [vmem:[%s239 + $0x300] sm:$0xf]
      %v447 = vld [vmem:[%s239 + $0x304] sm:$0xf]
      %v448 = vld [vmem:[%s239 + $0x308] sm:$0xf]
      %v449 = vld [vmem:[%s239 + $0x30c] sm:$0xf]
      %v450 = vld [vmem:[%s239 + $0x310] sm:$0xf]
      %v451 = vld [vmem:[%s239 + $0x314] sm:$0xf]
      %v452 = vld [vmem:[%s239 + $0x318] sm:$0xf]
      %v453 = vld [vmem:[%s239 + $0x31c] sm:$0xf]
      %v454 = vld [vmem:[%s239 + $0x320] sm:$0xf]
      %v455 = vld [vmem:[%s239 + $0x324] sm:$0xf]
      %v456 = vld [vmem:[%s239 + $0x328] sm:$0xf]
      %v457 = vld [vmem:[%s239 + $0x32c] sm:$0xf]
      %v458 = vld [vmem:[%s239 + $0x330] sm:$0xf]
      %v459 = vld [vmem:[%s239 + $0x334] sm:$0xf]
      %v460 = vld [vmem:[%s239 + $0x338] sm:$0xf]
      %v461 = vld [vmem:[%s239 + $0x33c] sm:$0xf]
      %v462 = vld [vmem:[%s239 + $0x340] sm:$0xf]
      %v463 = vld [vmem:[%s239 + $0x344] sm:$0xf]
      %v464 = vld [vmem:[%s239 + $0x348] sm:$0xf]
      %v465 = vld [vmem:[%s239 + $0x34c] sm:$0xf]
      %v466 = vld [vmem:[%s239 + $0x350] sm:$0xf]
      %v467 = vld [vmem:[%s239 + $0x354] sm:$0xf]
      %v468 = vld [vmem:[%s239 + $0x358] sm:$0xf]
      %v469 = vld [vmem:[%s239 + $0x35c] sm:$0xf]
      %v470 = vld [vmem:[%s239 + $0x360] sm:$0xf]
      %v471 = vld [vmem:[%s239 + $0x364] sm:$0xf]
      %v472 = vld [vmem:[%s239 + $0x368] sm:$0xf]
      %v473 = vld [vmem:[%s239 + $0x36c] sm:$0xf]
      %v474 = vld [vmem:[%s239 + $0x370] sm:$0xf]
      %v475 = vld [vmem:[%s239 + $0x374] sm:$0xf]
      %v476 = vld [vmem:[%s239 + $0x378] sm:$0xf]
      %v477 = vld [vmem:[%s239 + $0x37c] sm:$0xf]
      %v478 = vld [vmem:[%s239 + $0x380] sm:$0xf]
      %v479 = vld [vmem:[%s239 + $0x384] sm:$0xf]
      %v480 = vld [vmem:[%s239 + $0x388] sm:$0xf]
      %v481 = vld [vmem:[%s239 + $0x38c] sm:$0xf]
      %v482 = vld [vmem:[%s239 + $0x390] sm:$0xf]
      %v483 = vld [vmem:[%s239 + $0x394] sm:$0xf]
      %v484 = vld [vmem:[%s239 + $0x398] sm:$0xf]
      %v485 = vld [vmem:[%s239 + $0x39c] sm:$0xf]
      %v486 = vld [vmem:[%s239 + $0x3a0] sm:$0xf]
      %v487 = vld [vmem:[%s239 + $0x3a4] sm:$0xf]
      %v488 = vld [vmem:[%s239 + $0x3a8] sm:$0xf]
      %v489 = vld [vmem:[%s239 + $0x3ac] sm:$0xf]
      %v490 = vld [vmem:[%s239 + $0x3b0] sm:$0xf]
      %v491 = vld [vmem:[%s239 + $0x3b4] sm:$0xf]
      %v492 = vld [vmem:[%s239 + $0x3b8] sm:$0xf]
      %v493 = vld [vmem:[%s239 + $0x3bc] sm:$0xf]
      %v494 = vld [vmem:[%s239 + $0x3c0] sm:$0xf]
      %v495 = vld [vmem:[%s239 + $0x3c4] sm:$0xf]
      %v496 = vld [vmem:[%s239 + $0x3c8] sm:$0xf]
      %v497 = vld [vmem:[%s239 + $0x3cc] sm:$0xf]
      %v498 = vld [vmem:[%s239 + $0x3d0] sm:$0xf]
      %v499 = vld [vmem:[%s239 + $0x3d4] sm:$0xf]
      %v500 = vld [vmem:[%s239 + $0x3d8] sm:$0xf]
      %v501 = vld [vmem:[%s239 + $0x3dc] sm:$0xf]
      %v502 = vld [vmem:[%s239 + $0x3e0] sm:$0xf]
      %v503 = vld [vmem:[%s239 + $0x3e4] sm:$0xf]
      %v504 = vld [vmem:[%s239 + $0x3e8] sm:$0xf]
      %v505 = vld [vmem:[%s239 + $0x3ec] sm:$0xf]
      %v506 = vld [vmem:[%s239 + $0x3f0] sm:$0xf]
      %v507 = vld [vmem:[%s239 + $0x3f4] sm:$0xf]
      %v508 = vld [vmem:[%s239 + $0x3f8] sm:$0xf]
      %v509 = vld [vmem:[%s239 + $0x3fc] sm:$0xf]
      %v510 = vld [vmem:[%s2] sm:$0xf]
      %v767 = vunpack.c.l.b16 %v254
      %v768 = vunpack.c.l.b16 %v255
      %v769 = vunpack.c.l.b16 %v256
      %v770 = vunpack.c.l.b16 %v257
      %v771 = vunpack.c.l.b16 %v258
      %v772 = vunpack.c.l.b16 %v259
      %v773 = vunpack.c.l.b16 %v260
      %v774 = vunpack.c.l.b16 %v261
      %v775 = vunpack.c.l.b16 %v262
      %v776 = vunpack.c.l.b16 %v263
      %v777 = vunpack.c.l.b16 %v264
      %v778 = vunpack.c.l.b16 %v265
      %v779 = vunpack.c.l.b16 %v266
      %v780 = vunpack.c.l.b16 %v267
      %v781 = vunpack.c.l.b16 %v268
      %v782 = vunpack.c.l.b16 %v269
      %v783 = vunpack.c.l.b16 %v270
      %v784 = vunpack.c.l.b16 %v271
      %v785 = vunpack.c.l.b16 %v272
      %v786 = vunpack.c.l.b16 %v273
      %v787 = vunpack.c.l.b16 %v274
      %v788 = vunpack.c.l.b16 %v275
      %v789 = vunpack.c.l.b16 %v276
      %v790 = vunpack.c.l.b16 %v277
      %v791 = vunpack.c.l.b16 %v278
      %v792 = vunpack.c.l.b16 %v279
      %v793 = vunpack.c.l.b16 %v280
      %v794 = vunpack.c.l.b16 %v281
      %v795 = vunpack.c.l.b16 %v282
      %v796 = vunpack.c.l.b16 %v283
      %v797 = vunpack.c.l.b16 %v284
      %v798 = vunpack.c.l.b16 %v285
      %v799 = vunpack.c.l.b16 %v286
      %v800 = vunpack.c.l.b16 %v287
      %v801 = vunpack.c.l.b16 %v288
      %v802 = vunpack.c.l.b16 %v289
      %v803 = vunpack.c.l.b16 %v290
      %v804 = vunpack.c.l.b16 %v291
      %v805 = vunpack.c.l.b16 %v292
      %v806 = vunpack.c.l.b16 %v293
      %v807 = vunpack.c.l.b16 %v294
      %v808 = vunpack.c.l.b16 %v295
      %v809 = vunpack.c.l.b16 %v296
      %v810 = vunpack.c.l.b16 %v297
      %v811 = vunpack.c.l.b16 %v298
      %v812 = vunpack.c.l.b16 %v299
      %v813 = vunpack.c.l.b16 %v300
      %v814 = vunpack.c.l.b16 %v301
      %v815 = vunpack.c.l.b16 %v302
      %v816 = vunpack.c.l.b16 %v303
      %v817 = vunpack.c.l.b16 %v304
      %v818 = vunpack.c.l.b16 %v305
      %v819 = vunpack.c.l.b16 %v306
      %v820 = vunpack.c.l.b16 %v307
      %v821 = vunpack.c.l.b16 %v308
      %v822 = vunpack.c.l.b16 %v309
      %v823 = vunpack.c.l.b16 %v310
      %v824 = vunpack.c.l.b16 %v311
      %v825 = vunpack.c.l.b16 %v312
      %v826 = vunpack.c.l.b16 %v313
      %v827 = vunpack.c.l.b16 %v314
      %v828 = vunpack.c.l.b16 %v315
      %v829 = vunpack.c.l.b16 %v316
      %v830 = vunpack.c.l.b16 %v317
      %v831 = vunpack.c.l.b16 %v318
      %v832 = vunpack.c.l.b16 %v319
      %v833 = vunpack.c.l.b16 %v320
      %v834 = vunpack.c.l.b16 %v321
      %v835 = vunpack.c.l.b16 %v322
      %v836 = vunpack.c.l.b16 %v323
      %v837 = vunpack.c.l.b16 %v324
      %v838 = vunpack.c.l.b16 %v325
      %v839 = vunpack.c.l.b16 %v326
      %v840 = vunpack.c.l.b16 %v327
      %v841 = vunpack.c.l.b16 %v328
      %v842 = vunpack.c.l.b16 %v329
      %v843 = vunpack.c.l.b16 %v330
      %v844 = vunpack.c.l.b16 %v331
      %v845 = vunpack.c.l.b16 %v332
      %v846 = vunpack.c.l.b16 %v333
      %v847 = vunpack.c.l.b16 %v334
      %v848 = vunpack.c.l.b16 %v335
      %v849 = vunpack.c.l.b16 %v336
      %v850 = vunpack.c.l.b16 %v337
      %v851 = vunpack.c.l.b16 %v338
      %v852 = vunpack.c.l.b16 %v339
      %v853 = vunpack.c.l.b16 %v340
      %v854 = vunpack.c.l.b16 %v341
      %v855 = vunpack.c.l.b16 %v342
      %v856 = vunpack.c.l.b16 %v343
      %v857 = vunpack.c.l.b16 %v344
      %v858 = vunpack.c.l.b16 %v345
      %v859 = vunpack.c.l.b16 %v346
      %v860 = vunpack.c.l.b16 %v347
      %v861 = vunpack.c.l.b16 %v348
      %v862 = vunpack.c.l.b16 %v349
      %v863 = vunpack.c.l.b16 %v350
      %v864 = vunpack.c.l.b16 %v351
      %v865 = vunpack.c.l.b16 %v352
      %v866 = vunpack.c.l.b16 %v353
      %v867 = vunpack.c.l.b16 %v354
      %v868 = vunpack.c.l.b16 %v355
      %v869 = vunpack.c.l.b16 %v356
      %v870 = vunpack.c.l.b16 %v357
      %v871 = vunpack.c.l.b16 %v358
      %v872 = vunpack.c.l.b16 %v359
      %v873 = vunpack.c.l.b16 %v360
      %v874 = vunpack.c.l.b16 %v361
      %v875 = vunpack.c.l.b16 %v362
      %v876 = vunpack.c.l.b16 %v363
      %v877 = vunpack.c.l.b16 %v364
      %v878 = vunpack.c.l.b16 %v365
      %v879 = vunpack.c.l.b16 %v366
      %v880 = vunpack.c.l.b16 %v367
      %v881 = vunpack.c.l.b16 %v368
      %v882 = vunpack.c.l.b16 %v369
      %v883 = vunpack.c.l.b16 %v370
      %v884 = vunpack.c.l.b16 %v371
      %v885 = vunpack.c.l.b16 %v372
      %v886 = vunpack.c.l.b16 %v373
      %v887 = vunpack.c.l.b16 %v374
      %v888 = vunpack.c.l.b16 %v375
      %v889 = vunpack.c.l.b16 %v376
      %v890 = vunpack.c.l.b16 %v377
      %v891 = vunpack.c.l.b16 %v378
      %v892 = vunpack.c.l.b16 %v379
      %v893 = vunpack.c.l.b16 %v380
      %v894 = vunpack.c.l.b16 %v381
      %v895 = vunpack.c.l.b16 %v382
      %v896 = vunpack.c.l.b16 %v383
      %v897 = vunpack.c.l.b16 %v384
      %v898 = vunpack.c.l.b16 %v385
      %v899 = vunpack.c.l.b16 %v386
      %v900 = vunpack.c.l.b16 %v387
      %v901 = vunpack.c.l.b16 %v388
      %v902 = vunpack.c.l.b16 %v389
      %v903 = vunpack.c.l.b16 %v390
      %v904 = vunpack.c.l.b16 %v391
      %v905 = vunpack.c.l.b16 %v392
      %v906 = vunpack.c.l.b16 %v393
      %v907 = vunpack.c.l.b16 %v394
      %v908 = vunpack.c.l.b16 %v395
      %v909 = vunpack.c.l.b16 %v396
      %v910 = vunpack.c.l.b16 %v397
      %v911 = vunpack.c.l.b16 %v398
      %v912 = vunpack.c.l.b16 %v399
      %v913 = vunpack.c.l.b16 %v400
      %v914 = vunpack.c.l.b16 %v401
      %v915 = vunpack.c.l.b16 %v402
      %v916 = vunpack.c.l.b16 %v403
      %v917 = vunpack.c.l.b16 %v404
      %v918 = vunpack.c.l.b16 %v405
      %v919 = vunpack.c.l.b16 %v406
      %v920 = vunpack.c.l.b16 %v407
      %v921 = vunpack.c.l.b16 %v408
      %v922 = vunpack.c.l.b16 %v409
      %v923 = vunpack.c.l.b16 %v410
      %v924 = vunpack.c.l.b16 %v411
      %v925 = vunpack.c.l.b16 %v412
      %v926 = vunpack.c.l.b16 %v413
      %v927 = vunpack.c.l.b16 %v414
      %v928 = vunpack.c.l.b16 %v415
      %v929 = vunpack.c.l.b16 %v416
      %v930 = vunpack.c.l.b16 %v417
      %v931 = vunpack.c.l.b16 %v418
      %v932 = vunpack.c.l.b16 %v419
      %v933 = vunpack.c.l.b16 %v420
      %v934 = vunpack.c.l.b16 %v421
      %v935 = vunpack.c.l.b16 %v422
      %v936 = vunpack.c.l.b16 %v423
      %v937 = vunpack.c.l.b16 %v424
      %v938 = vunpack.c.l.b16 %v425
      %v939 = vunpack.c.l.b16 %v426
      %v940 = vunpack.c.l.b16 %v427
      %v941 = vunpack.c.l.b16 %v428
      %v942 = vunpack.c.l.b16 %v429
      %v943 = vunpack.c.l.b16 %v430
      %v944 = vunpack.c.l.b16 %v431
      %v945 = vunpack.c.l.b16 %v432
      %v946 = vunpack.c.l.b16 %v433
      %v947 = vunpack.c.l.b16 %v434
      %v948 = vunpack.c.l.b16 %v435
      %v949 = vunpack.c.l.b16 %v436
      %v950 = vunpack.c.l.b16 %v437
      %v951 = vunpack.c.l.b16 %v438
      %v952 = vunpack.c.l.b16 %v439
      %v953 = vunpack.c.l.b16 %v440
      %v954 = vunpack.c.l.b16 %v441
      %v955 = vunpack.c.l.b16 %v442
      %v956 = vunpack.c.l.b16 %v443
      %v957 = vunpack.c.l.b16 %v444
      %v958 = vunpack.c.l.b16 %v445
      %v959 = vunpack.c.l.b16 %v446
      %v960 = vunpack.c.l.b16 %v447
      %v961 = vunpack.c.l.b16 %v448
      %v962 = vunpack.c.l.b16 %v449
      %v963 = vunpack.c.l.b16 %v450
      %v964 = vunpack.c.l.b16 %v451
      %v965 = vunpack.c.l.b16 %v452
      %v966 = vunpack.c.l.b16 %v453
      %v967 = vunpack.c.l.b16 %v454
      %v968 = vunpack.c.l.b16 %v455
      %v969 = vunpack.c.l.b16 %v456
      %v970 = vunpack.c.l.b16 %v457
      %v971 = vunpack.c.l.b16 %v458
      %v972 = vunpack.c.l.b16 %v459
      %v973 = vunpack.c.l.b16 %v460
      %v974 = vunpack.c.l.b16 %v461
      %v975 = vunpack.c.l.b16 %v462
      %v976 = vunpack.c.l.b16 %v463
      %v977 = vunpack.c.l.b16 %v464
      %v978 = vunpack.c.l.b16 %v465
      %v979 = vunpack.c.l.b16 %v466
      %v980 = vunpack.c.l.b16 %v467
      %v981 = vunpack.c.l.b16 %v468
      %v982 = vunpack.c.l.b16 %v469
      %v983 = vunpack.c.l.b16 %v470
      %v984 = vunpack.c.l.b16 %v471
      %v985 = vunpack.c.l.b16 %v472
      %v986 = vunpack.c.l.b16 %v473
      %v987 = vunpack.c.l.b16 %v474
      %v988 = vunpack.c.l.b16 %v475
      %v989 = vunpack.c.l.b16 %v476
      %v990 = vunpack.c.l.b16 %v477
      %v991 = vunpack.c.l.b16 %v478
      %v992 = vunpack.c.l.b16 %v479
      %v993 = vunpack.c.l.b16 %v480
      %v994 = vunpack.c.l.b16 %v481
      %v995 = vunpack.c.l.b16 %v482
      %v996 = vunpack.c.l.b16 %v483
      %v997 = vunpack.c.l.b16 %v484
      %v998 = vunpack.c.l.b16 %v485
      %v999 = vunpack.c.l.b16 %v486
      %v1000 = vunpack.c.l.b16 %v487
      %v1001 = vunpack.c.l.b16 %v488
      %v1002 = vunpack.c.l.b16 %v489
      %v1003 = vunpack.c.l.b16 %v490
      %v1004 = vunpack.c.l.b16 %v491
      %v1005 = vunpack.c.l.b16 %v492
      %v1006 = vunpack.c.l.b16 %v493
      %v1007 = vunpack.c.l.b16 %v494
      %v1008 = vunpack.c.l.b16 %v495
      %v1009 = vunpack.c.l.b16 %v496
      %v1010 = vunpack.c.l.b16 %v497
      %v1011 = vunpack.c.l.b16 %v498
      %v1012 = vunpack.c.l.b16 %v499
      %v1013 = vunpack.c.l.b16 %v500
      %v1014 = vunpack.c.l.b16 %v501
      %v1015 = vunpack.c.l.b16 %v502
      %v1016 = vunpack.c.l.b16 %v503
      %v1017 = vunpack.c.l.b16 %v504
      %v1018 = vunpack.c.l.b16 %v505
      %v1019 = vunpack.c.l.b16 %v506
      %v1020 = vunpack.c.l.b16 %v507
      %v1021 = vunpack.c.l.b16 %v508
      %v1022 = vunpack.c.l.b16 %v509
      %v1023 = vpack.c.b16 %v768, %v767
      %v1024 = vpack.c.b16 %v770, %v769
      %v1025 = vpack.c.b16 %v772, %v771
      %v1026 = vpack.c.b16 %v774, %v773
      %v1027 = vpack.c.b16 %v776, %v775
      %v1028 = vpack.c.b16 %v778, %v777
      %v1029 = vpack.c.b16 %v780, %v779
      %v1030 = vpack.c.b16 %v782, %v781
      %v1031 = vpack.c.b16 %v784, %v783
      %v1032 = vpack.c.b16 %v786, %v785
      %v1033 = vpack.c.b16 %v788, %v787
      %v1034 = vpack.c.b16 %v790, %v789
      %v1035 = vpack.c.b16 %v792, %v791
      %v1036 = vpack.c.b16 %v794, %v793
      %v1037 = vpack.c.b16 %v796, %v795
      %v1038 = vpack.c.b16 %v798, %v797
      %v1039 = vpack.c.b16 %v800, %v799
      %v1040 = vpack.c.b16 %v802, %v801
      %v1041 = vpack.c.b16 %v804, %v803
      %v1042 = vpack.c.b16 %v806, %v805
      %v1043 = vpack.c.b16 %v808, %v807
      %v1044 = vpack.c.b16 %v810, %v809
      %v1045 = vpack.c.b16 %v812, %v811
      %v1046 = vpack.c.b16 %v814, %v813
      %v1047 = vpack.c.b16 %v816, %v815
      %v1048 = vpack.c.b16 %v818, %v817
      %v1049 = vpack.c.b16 %v820, %v819
      %v1050 = vpack.c.b16 %v822, %v821
      %v1051 = vpack.c.b16 %v824, %v823
      %v1052 = vpack.c.b16 %v826, %v825
      %v1053 = vpack.c.b16 %v828, %v827
      %v1054 = vpack.c.b16 %v830, %v829
      %v1055 = vpack.c.b16 %v832, %v831
      %v1056 = vpack.c.b16 %v834, %v833
      %v1057 = vpack.c.b16 %v836, %v835
      %v1058 = vpack.c.b16 %v838, %v837
      %v1059 = vpack.c.b16 %v840, %v839
      %v1060 = vpack.c.b16 %v842, %v841
      %v1061 = vpack.c.b16 %v844, %v843
      %v1062 = vpack.c.b16 %v846, %v845
      %v1063 = vpack.c.b16 %v848, %v847
      %v1064 = vpack.c.b16 %v850, %v849
      %v1065 = vpack.c.b16 %v852, %v851
      %v1066 = vpack.c.b16 %v854, %v853
      %v1067 = vpack.c.b16 %v856, %v855
      %v1068 = vpack.c.b16 %v858, %v857
      %v1069 = vpack.c.b16 %v860, %v859
      %v1070 = vpack.c.b16 %v862, %v861
      %v1071 = vpack.c.b16 %v864, %v863
      %v1072 = vpack.c.b16 %v866, %v865
      %v1073 = vpack.c.b16 %v868, %v867
      %v1074 = vpack.c.b16 %v870, %v869
      %v1075 = vpack.c.b16 %v872, %v871
      %v1076 = vpack.c.b16 %v874, %v873
      %v1077 = vpack.c.b16 %v876, %v875
      %v1078 = vpack.c.b16 %v878, %v877
      %v1079 = vpack.c.b16 %v880, %v879
      %v1080 = vpack.c.b16 %v882, %v881
      %v1081 = vpack.c.b16 %v884, %v883
      %v1082 = vpack.c.b16 %v886, %v885
      %v1083 = vpack.c.b16 %v888, %v887
      %v1084 = vpack.c.b16 %v890, %v889
      %v1085 = vpack.c.b16 %v892, %v891
      %v1086 = vpack.c.b16 %v894, %v893
      %v1087 = vpack.c.b16 %v896, %v895
      %v1088 = vpack.c.b16 %v898, %v897
      %v1089 = vpack.c.b16 %v900, %v899
      %v1090 = vpack.c.b16 %v902, %v901
      %v1091 = vpack.c.b16 %v904, %v903
      %v1092 = vpack.c.b16 %v906, %v905
      %v1093 = vpack.c.b16 %v908, %v907
      %v1094 = vpack.c.b16 %v910, %v909
      %v1095 = vpack.c.b16 %v912, %v911
      %v1096 = vpack.c.b16 %v914, %v913
      %v1097 = vpack.c.b16 %v916, %v915
      %v1098 = vpack.c.b16 %v918, %v917
      %v1099 = vpack.c.b16 %v920, %v919
      %v1100 = vpack.c.b16 %v922, %v921
      %v1101 = vpack.c.b16 %v924, %v923
      %v1102 = vpack.c.b16 %v926, %v925
      %v1103 = vpack.c.b16 %v928, %v927
      %v1104 = vpack.c.b16 %v930, %v929
      %v1105 = vpack.c.b16 %v932, %v931
      %v1106 = vpack.c.b16 %v934, %v933
      %v1107 = vpack.c.b16 %v936, %v935
      %v1108 = vpack.c.b16 %v938, %v937
      %v1109 = vpack.c.b16 %v940, %v939
      %v1110 = vpack.c.b16 %v942, %v941
      %v1111 = vpack.c.b16 %v944, %v943
      %v1112 = vpack.c.b16 %v946, %v945
      %v1113 = vpack.c.b16 %v948, %v947
      %v1114 = vpack.c.b16 %v950, %v949
      %v1115 = vpack.c.b16 %v952, %v951
      %v1116 = vpack.c.b16 %v954, %v953
      %v1117 = vpack.c.b16 %v956, %v955
      %v1118 = vpack.c.b16 %v958, %v957
      %v1119 = vpack.c.b16 %v960, %v959
      %v1120 = vpack.c.b16 %v962, %v961
      %v1121 = vpack.c.b16 %v964, %v963
      %v1122 = vpack.c.b16 %v966, %v965
      %v1123 = vpack.c.b16 %v968, %v967
      %v1124 = vpack.c.b16 %v970, %v969
      %v1125 = vpack.c.b16 %v972, %v971
      %v1126 = vpack.c.b16 %v974, %v973
      %v1127 = vpack.c.b16 %v976, %v975
      %v1128 = vpack.c.b16 %v978, %v977
      %v1129 = vpack.c.b16 %v980, %v979
      %v1130 = vpack.c.b16 %v982, %v981
      %v1131 = vpack.c.b16 %v984, %v983
      %v1132 = vpack.c.b16 %v986, %v985
      %v1133 = vpack.c.b16 %v988, %v987
      %v1134 = vpack.c.b16 %v990, %v989
      %v1135 = vpack.c.b16 %v992, %v991
      %v1136 = vpack.c.b16 %v994, %v993
      %v1137 = vpack.c.b16 %v996, %v995
      %v1138 = vpack.c.b16 %v998, %v997
      %v1139 = vpack.c.b16 %v1000, %v999
      %v1140 = vpack.c.b16 %v1002, %v1001
      %v1141 = vpack.c.b16 %v1004, %v1003
      %v1142 = vpack.c.b16 %v1006, %v1005
      %v1143 = vpack.c.b16 %v1008, %v1007
      %v1144 = vpack.c.b16 %v1010, %v1009
      %v1145 = vpack.c.b16 %v1012, %v1011
      %v1146 = vpack.c.b16 %v1014, %v1013
      %v1147 = vpack.c.b16 %v1016, %v1015
      %v1148 = vpack.c.b16 %v1018, %v1017
      %v1149 = vpack.c.b16 %v1020, %v1019
      %v1150 = vpack.c.b16 %v1022, %v1021
      %vm1151 = vcmask 64512
      %v1153 = vsel %vm1151, %v1023, 0
      %v1156 = vsel %vm1151, %v1024, 0
      %v1159 = vsel %vm1151, %v1025, 0
      %v1162 = vsel %vm1151, %v1026, 0
      %v1165 = vsel %vm1151, %v1027, 0
      %v1168 = vsel %vm1151, %v1028, 0
      %v1171 = vsel %vm1151, %v1029, 0
      %v1174 = vsel %vm1151, %v1030, 0
      %v1177 = vsel %vm1151, %v1031, 0
      %v1180 = vsel %vm1151, %v1032, 0
      %v1183 = vsel %vm1151, %v1033, 0
      %v1186 = vsel %vm1151, %v1034, 0
      %v1189 = vsel %vm1151, %v1035, 0
      %v1192 = vsel %vm1151, %v1036, 0
      %v1195 = vsel %vm1151, %v1037, 0
      %v1198 = vsel %vm1151, %v1038, 0
      %v1201 = vsel %vm1151, %v1039, 0
      %v1204 = vsel %vm1151, %v1040, 0
      %v1207 = vsel %vm1151, %v1041, 0
      %v1210 = vsel %vm1151, %v1042, 0
      %v1213 = vsel %vm1151, %v1043, 0
      %v1216 = vsel %vm1151, %v1044, 0
      %v1219 = vsel %vm1151, %v1045, 0
      %v1222 = vsel %vm1151, %v1046, 0
      %v1225 = vsel %vm1151, %v1047, 0
      %v1228 = vsel %vm1151, %v1048, 0
      %v1231 = vsel %vm1151, %v1049, 0
      %v1234 = vsel %vm1151, %v1050, 0
      %v1237 = vsel %vm1151, %v1051, 0
      %v1240 = vsel %vm1151, %v1052, 0
      %v1243 = vsel %vm1151, %v1053, 0
      %v1246 = vsel %vm1151, %v1054, 0
      %v1249 = vsel %vm1151, %v1055, 0
      %v1252 = vsel %vm1151, %v1056, 0
      %v1255 = vsel %vm1151, %v1057, 0
      %v1258 = vsel %vm1151, %v1058, 0
      %v1261 = vsel %vm1151, %v1059, 0
      %v1264 = vsel %vm1151, %v1060, 0
      %v1267 = vsel %vm1151, %v1061, 0
      %v1270 = vsel %vm1151, %v1062, 0
      %v1273 = vsel %vm1151, %v1063, 0
      %v1276 = vsel %vm1151, %v1064, 0
      %v1279 = vsel %vm1151, %v1065, 0
      %v1282 = vsel %vm1151, %v1066, 0
      %v1285 = vsel %vm1151, %v1067, 0
      %v1288 = vsel %vm1151, %v1068, 0
      %v1291 = vsel %vm1151, %v1069, 0
      %v1294 = vsel %vm1151, %v1070, 0
      %v1297 = vsel %vm1151, %v1071, 0
      %v1300 = vsel %vm1151, %v1072, 0
      %v1303 = vsel %vm1151, %v1073, 0
      %v1306 = vsel %vm1151, %v1074, 0
      %v1309 = vsel %vm1151, %v1075, 0
      %v1312 = vsel %vm1151, %v1076, 0
      %v1315 = vsel %vm1151, %v1077, 0
      %v1318 = vsel %vm1151, %v1078, 0
      %v1321 = vsel %vm1151, %v1079, 0
      %v1324 = vsel %vm1151, %v1080, 0
      %v1327 = vsel %vm1151, %v1081, 0
      %v1330 = vsel %vm1151, %v1082, 0
      %v1333 = vsel %vm1151, %v1083, 0
      %v1336 = vsel %vm1151, %v1084, 0
      %v1339 = vsel %vm1151, %v1085, 0
      %v1342 = vsel %vm1151, %v1086, 0
      %v1345 = vsel %vm1151, %v1087, 0
      %v1348 = vsel %vm1151, %v1088, 0
      %v1351 = vsel %vm1151, %v1089, 0
      %v1354 = vsel %vm1151, %v1090, 0
      %v1357 = vsel %vm1151, %v1091, 0
      %v1360 = vsel %vm1151, %v1092, 0
      %v1363 = vsel %vm1151, %v1093, 0
      %v1366 = vsel %vm1151, %v1094, 0
      %v1369 = vsel %vm1151, %v1095, 0
      %v1372 = vsel %vm1151, %v1096, 0
      %v1375 = vsel %vm1151, %v1097, 0
      %v1378 = vsel %vm1151, %v1098, 0
      %v1381 = vsel %vm1151, %v1099, 0
      %v1384 = vsel %vm1151, %v1100, 0
      %v1387 = vsel %vm1151, %v1101, 0
      %v1390 = vsel %vm1151, %v1102, 0
      %v1393 = vsel %vm1151, %v1103, 0
      %v1396 = vsel %vm1151, %v1104, 0
      %v1399 = vsel %vm1151, %v1105, 0
      %v1402 = vsel %vm1151, %v1106, 0
      %v1405 = vsel %vm1151, %v1107, 0
      %v1408 = vsel %vm1151, %v1108, 0
      %v1411 = vsel %vm1151, %v1109, 0
      %v1414 = vsel %vm1151, %v1110, 0
      %v1417 = vsel %vm1151, %v1111, 0
      %v1420 = vsel %vm1151, %v1112, 0
      %v1423 = vsel %vm1151, %v1113, 0
      %v1426 = vsel %vm1151, %v1114, 0
      %v1429 = vsel %vm1151, %v1115, 0
      %v1432 = vsel %vm1151, %v1116, 0
      %v1435 = vsel %vm1151, %v1117, 0
      %v1438 = vsel %vm1151, %v1118, 0
      %v1441 = vsel %vm1151, %v1119, 0
      %v1444 = vsel %vm1151, %v1120, 0
      %v1447 = vsel %vm1151, %v1121, 0
      %v1450 = vsel %vm1151, %v1122, 0
      %v1453 = vsel %vm1151, %v1123, 0
      %v1456 = vsel %vm1151, %v1124, 0
      %v1459 = vsel %vm1151, %v1125, 0
      %v1462 = vsel %vm1151, %v1126, 0
      %v1465 = vsel %vm1151, %v1127, 0
      %v1468 = vsel %vm1151, %v1128, 0
      %v1471 = vsel %vm1151, %v1129, 0
      %v1474 = vsel %vm1151, %v1130, 0
      %v1477 = vsel %vm1151, %v1131, 0
      %v1480 = vsel %vm1151, %v1132, 0
      %v1483 = vsel %vm1151, %v1133, 0
      %v1486 = vsel %vm1151, %v1134, 0
      %v1489 = vsel %vm1151, %v1135, 0
      %v1492 = vsel %vm1151, %v1136, 0
      %v1495 = vsel %vm1151, %v1137, 0
      %v1498 = vsel %vm1151, %v1138, 0
      %v1501 = vsel %vm1151, %v1139, 0
      %v1504 = vsel %vm1151, %v1140, 0
      %v1507 = vsel %vm1151, %v1141, 0
      %v1510 = vsel %vm1151, %v1142, 0
      %v1513 = vsel %vm1151, %v1143, 0
      %v1516 = vsel %vm1151, %v1144, 0
      %v1519 = vsel %vm1151, %v1145, 0
      %v1522 = vsel %vm1151, %v1146, 0
      %v1525 = vsel %vm1151, %v1147, 0
      %v1528 = vsel %vm1151, %v1148, 0
      %v1531 = vsel %vm1151, %v1149, 0
      %v1534 = vsel %vm1151, %v1150, 0
      %vm1536 = vcmask 1043456
      %v1538 = vsel %vm1536, %v510, 0
      %1540 = vmatprep.subr.bf16.mxu0 0
      %1541 = vmatpush1.bf16.msra.mxu0 %v1538
      %1542 = vmatprep.subr.bf16.mxu0 0
      %1543 = vmatpush1.bf16.msra.mxu0 0
      %1544 = vmatprep.subr.bf16.mxu0 0
      %1545 = vmatpush1.bf16.msra.mxu0 0
      %1546 = vmatprep.subr.bf16.mxu0 0
      %1547 = vmatpush1.bf16.msra.mxu0 0
      %1548 = vmatprep.subr.bf16.mxu0 0
      %1549 = vmatpush1.bf16.msra.mxu0 0
      %1550 = vmatprep.subr.bf16.mxu0 0
      %1551 = vmatpush1.bf16.msra.mxu0 0
      %1552 = vmatprep.subr.bf16.mxu0 0
      %1553 = vmatpush1.bf16.msra.mxu0 0
      %1554 = vmatprep.subr.bf16.mxu0 0
      %1555 = vmatpush1.bf16.msra.mxu0 0
      %1556 = vmatprep.subr.bf16.mxu0 0
      %1557 = vmatpush1.bf16.msra.mxu0 0
      %1558 = vmatprep.subr.bf16.mxu0 0
      %1559 = vmatpush1.bf16.msra.mxu0 0
      %1560 = vmatprep.subr.bf16.mxu0 0
      %1561 = vmatpush1.bf16.msra.mxu0 0
      %1562 = vmatprep.subr.bf16.mxu0 0
      %1563 = vmatpush1.bf16.msra.mxu0 0
      %1564 = vmatprep.subr.bf16.mxu0 0
      %1565 = vmatpush1.bf16.msra.mxu0 0
      %1566 = vmatprep.subr.bf16.mxu0 0
      %1567 = vmatpush1.bf16.msra.mxu0 0
      %1568 = vmatprep.subr.bf16.mxu0 0
      %1569 = vmatpush1.bf16.msra.mxu0 0
      %1570 = vmatprep.subr.bf16.mxu0 0
      %1571 = vmatpush1.bf16.msra.mxu0 0
      %1572 = vmatprep.mubr.bf16.mxu0 0
      %1573 = vmatmul.mubr.bf16.gmra.mrb[0].mxu0 %v1153
      %v1574 = vpop.f32.mrb[0].mxu0
      %v1575 = vadd.f32 0.0, %v1574
      %v1576 = vpop.f32.mrb[0].mxu0
      %v1577 = vpop.f32.mrb[0].mxu0
      %v1578 = vadd.f32 0.0, %v1577
      %v1579 = vpop.f32.mrb[0].mxu0
      %1580 = vmatprep.mubr.bf16.mxu0 0
      %1581 = vmatmul.mubr.bf16.gmra.mrb[0].mxu0 %v1156
      %v1582 = vpop.f32.mrb[0].mxu0
      %v1583 = vadd.f32 0.0, %v1582
      %v1584 = vpop.f32.mrb[0].mxu0
      %v1585 = vpop.f32.mrb[0].mxu0
      %v1586 = vadd.f32 0.0, %v1585
      %v1587 = vpop.f32.mrb[0].mxu0
      %1588 = vmatprep.mubr.bf16.mxu0 0
      %1589 = vmatmul.mubr.bf16.gmra.mrb[0].mxu0 %v1159
      %v1590 = vpop.f32.mrb[0].mxu0
      %v1591 = vadd.f32 0.0, %v1590
      %v1592 = vpop.f32.mrb[0].mxu0
      %v1593 = vpop.f32.mrb[0].mxu0
      %v1594 = vadd.f32 0.0, %v1593
      %v1595 = vpop.f32.mrb[0].mxu0
      %1596 = vmatprep.mubr.bf16.mxu0 0
      %1597 = vmatmul.mubr.bf16.gmra.mrb[0].mxu0 %v1162
      %v1598 = vpop.f32.mrb[0].mxu0
      %v1599 = vadd.f32 0.0, %v1598
      %v1600 = vpop.f32.mrb[0].mxu0
      %v1601 = vpop.f32.mrb[0].mxu0
      %v1602 = vadd.f32 0.0, %v1601
      %v1603 = vpop.f32.mrb[0].mxu0
      %1604 = vmatprep.mubr.bf16.mxu0 0
      %1605 = vmatmul.mubr.bf16.gmra.mrb[0].mxu0 %v1165
      %v1606 = vpop.f32.mrb[0].mxu0
      %v1607 = vadd.f32 0.0, %v1606
      %v1608 = vpop.f32.mrb[0].mxu0
      %v1609 = vpop.f32.mrb[0].mxu0
      %v1610 = vadd.f32 0.0, %v1609
      %v1611 = vpop.f32.mrb[0].mxu0
      %1612 = vmatprep.mubr.bf16.mxu0 0
      %1613 = vmatmul.mubr.bf16.gmra.mrb[0].mxu0 %v1168
      %v1614 = vpop.f32.mrb[0].mxu0
      %v1615 = vadd.f32 0.0, %v1614
      %v1616 = vpop.f32.mrb[0].mxu0
      %v1617 = vpop.f32.mrb[0].mxu0
      %v1618 = vadd.f32 0.0, %v1617
      %v1619 = vpop.f32.mrb[0].mxu0
      %1620 = vmatprep.mubr.bf16.mxu0 0
      %1621 = vmatmul.mubr.bf16.gmra.mrb[0].mxu0 %v1171
      %v1622 = vpop.f32.mrb[0].mxu0
      %v1623 = vadd.f32 0.0, %v1622
      %v1624 = vpop.f32.mrb[0].mxu0
      %v1625 = vpop.f32.mrb[0].mxu0
      %v1626 = vadd.f32 0.0, %v1625
      %v1627 = vpop.f32.mrb[0].mxu0
      %1628 = vmatprep.mubr.bf16.mxu0 0
      %1629 = vmatmul.mubr.bf16.gmra.mrb[0].mxu0 %v1174
      %v1630 = vpop.f32.mrb[0].mxu0
      %v1631 = vadd.f32 0.0, %v1630
      %v1632 = vpop.f32.mrb[0].mxu0
      %v1633 = vpop.f32.mrb[0].mxu0
      %v1634 = vadd.f32 0.0, %v1633
      %v1635 = vpop.f32.mrb[0].mxu0
      %1636 = vmatprep.mubr.bf16.mxu0 0
      %1637 = vmatmul.mubr.bf16.gmra.mrb[0].mxu0 %v1177
      %v1638 = vpop.f32.mrb[0].mxu0
      %v1639 = vadd.f32 0.0, %v1638
      %v1640 = vpop.f32.mrb[0].mxu0
      %v1641 = vpop.f32.mrb[0].mxu0
      %v1642 = vadd.f32 0.0, %v1641
      %v1643 = vpop.f32.mrb[0].mxu0
      %1644 = vmatprep.mubr.bf16.mxu0 0
      %1645 = vmatmul.mubr.bf16.gmra.mrb[0].mxu0 %v1180
      %v1646 = vpop.f32.mrb[0].mxu0
      %v1647 = vadd.f32 0.0, %v1646
      %v1648 = vpop.f32.mrb[0].mxu0
      %v1649 = vpop.f32.mrb[0].mxu0
      %v1650 = vadd.f32 0.0, %v1649
      %v1651 = vpop.f32.mrb[0].mxu0
      %1652 = vmatprep.mubr.bf16.mxu0 0
      %1653 = vmatmul.mubr.bf16.gmra.mrb[0].mxu0 %v1183
      %v1654 = vpop.f32.mrb[0].mxu0
      %v1655 = vadd.f32 0.0, %v1654
      %v1656 = vpop.f32.mrb[0].mxu0
      %v1657 = vpop.f32.mrb[0].mxu0
      %v1658 = vadd.f32 0.0, %v1657
      %v1659 = vpop.f32.mrb[0].mxu0
      %1660 = vmatprep.mubr.bf16.mxu0 0
      %1661 = vmatmul.mubr.bf16.gmra.mrb[0].mxu0 %v1186
      %v1662 = vpop.f32.mrb[0].mxu0
      %v1663 = vadd.f32 0.0, %v1662
      %v1664 = vpop.f32.mrb[0].mxu0
      %v1665 = vpop.f32.mrb[0].mxu0
      %v1666 = vadd.f32 0.0, %v1665
      %v1667 = vpop.f32.mrb[0].mxu0
      %1668 = vmatprep.mubr.bf16.mxu0 0
      %1669 = vmatmul.mubr.bf16.gmra.mrb[0].mxu0 %v1189
      %v1670 = vpop.f32.mrb[0].mxu0
      %v1671 = vadd.f32 0.0, %v1670
      %v1672 = vpop.f32.mrb[0].mxu0
      %v1673 = vpop.f32.mrb[0].mxu0
      %v1674 = vadd.f32 0.0, %v1673
      %v1675 = vpop.f32.mrb[0].mxu0
      %1676 = vmatprep.mubr.bf16.mxu0 0
      %1677 = vmatmul.mubr.bf16.gmra.mrb[0].mxu0 %v1192
      %v1678 = vpop.f32.mrb[0].mxu0
      %v1679 = vadd.f32 0.0, %v1678
      %v1680 = vpop.f32.mrb[0].mxu0
      %v1681 = vpop.f32.mrb[0].mxu0
      %v1682 = vadd.f32 0.0, %v1681
      %v1683 = vpop.f32.mrb[0].mxu0
      %1684 = vmatprep.mubr.bf16.mxu0 0
      %1685 = vmatmul.mubr.bf16.gmra.mrb[0].mxu0 %v1195
      %v1686 = vpop.f32.mrb[0].mxu0
      %v1687 = vadd.f32 0.0, %v1686
      %v1688 = vpop.f32.mrb[0].mxu0
      %v1689 = vpop.f32.mrb[0].mxu0
      %v1690 = vadd.f32 0.0, %v1689
      %v1691 = vpop.f32.mrb[0].mxu0
      %1692 = vmatprep.mubr.bf16.mxu0 0
      %1693 = vmatmul.mubr.bf16.gmra.mrb[0].mxu0 %v1198
      %v1694 = vpop.f32.mrb[0].mxu0
      %v1695 = vadd.f32 0.0, %v1694
      %v1696 = vpop.f32.mrb[0].mxu0
      %v1697 = vpop.f32.mrb[0].mxu0
      %v1698 = vadd.f32 0.0, %v1697
      %v1699 = vpop.f32.mrb[0].mxu0
      %1700 = vmatprep.mubr.bf16.mxu0 0
      %1701 = vmatmul.mubr.bf16.gmra.mrb[0].mxu0 %v1201
      %v1702 = vpop.f32.mrb[0].mxu0
      %v1703 = vadd.f32 0.0, %v1702
      %v1704 = vpop.f32.mrb[0].mxu0
      %v1705 = vpop.f32.mrb[0].mxu0
      %v1706 = vadd.f32 0.0, %v1705
      %v1707 = vpop.f32.mrb[0].mxu0
      %1708 = vmatprep.mubr.bf16.mxu0 0
      %1709 = vmatmul.mubr.bf16.gmra.mrb[0].mxu0 %v1204
      %v1710 = vpop.f32.mrb[0].mxu0
      %v1711 = vadd.f32 0.0, %v1710
      %v1712 = vpop.f32.mrb[0].mxu0
      %v1713 = vpop.f32.mrb[0].mxu0
      %v1714 = vadd.f32 0.0, %v1713
      %v1715 = vpop.f32.mrb[0].mxu0
      %1716 = vmatprep.mubr.bf16.mxu0 0
      %1717 = vmatmul.mubr.bf16.gmra.mrb[0].mxu0 %v1207
      %v1718 = vpop.f32.mrb[0].mxu0
      %v1719 = vadd.f32 0.0, %v1718
      %v1720 = vpop.f32.mrb[0].mxu0
      %v1721 = vpop.f32.mrb[0].mxu0
      %v1722 = vadd.f32 0.0, %v1721
      %v1723 = vpop.f32.mrb[0].mxu0
      %1724 = vmatprep.mubr.bf16.mxu0 0
      %1725 = vmatmul.mubr.bf16.gmra.mrb[0].mxu0 %v1210
      %v1726 = vpop.f32.mrb[0].mxu0
      %v1727 = vadd.f32 0.0, %v1726
      %v1728 = vpop.f32.mrb[0].mxu0
      %v1729 = vpop.f32.mrb[0].mxu0
      %v1730 = vadd.f32 0.0, %v1729
      %v1731 = vpop.f32.mrb[0].mxu0
      %1732 = vmatprep.mubr.bf16.mxu0 0
      %1733 = vmatmul.mubr.bf16.gmra.mrb[0].mxu0 %v1213
      %v1734 = vpop.f32.mrb[0].mxu0
      %v1735 = vadd.f32 0.0, %v1734
      %v1736 = vpop.f32.mrb[0].mxu0
      %v1737 = vpop.f32.mrb[0].mxu0
      %v1738 = vadd.f32 0.0, %v1737
      %v1739 = vpop.f32.mrb[0].mxu0
      %1740 = vmatprep.mubr.bf16.mxu0 0
      %1741 = vmatmul.mubr.bf16.gmra.mrb[0].mxu0 %v1216
      %v1742 = vpop.f32.mrb[0].mxu0
      %v1743 = vadd.f32 0.0, %v1742
      %v1744 = vpop.f32.mrb[0].mxu0
      %v1745 = vpop.f32.mrb[0].mxu0
      %v1746 = vadd.f32 0.0, %v1745
      %v1747 = vpop.f32.mrb[0].mxu0
      %1748 = vmatprep.mubr.bf16.mxu0 0
      %1749 = vmatmul.mubr.bf16.gmra.mrb[0].mxu0 %v1219
      %v1750 = vpop.f32.mrb[0].mxu0
      %v1751 = vadd.f32 0.0, %v1750
      %v1752 = vpop.f32.mrb[0].mxu0
      %v1753 = vpop.f32.mrb[0].mxu0
      %v1754 = vadd.f32 0.0, %v1753
      %v1755 = vpop.f32.mrb[0].mxu0
      %1756 = vmatprep.mubr.bf16.mxu0 0
      %1757 = vmatmul.mubr.bf16.gmra.mrb[0].mxu0 %v1222
      %v1758 = vpop.f32.mrb[0].mxu0
      %v1759 = vadd.f32 0.0, %v1758
      %v1760 = vpop.f32.mrb[0].mxu0
      %v1761 = vpop.f32.mrb[0].mxu0
      %v1762 = vadd.f32 0.0, %v1761
      %v1763 = vpop.f32.mrb[0].mxu0
      %1764 = vmatprep.mubr.bf16.mxu0 0
      %1765 = vmatmul.mubr.bf16.gmra.mrb[0].mxu0 %v1225
      %v1766 = vpop.f32.mrb[0].mxu0
      %v1767 = vadd.f32 0.0, %v1766
      %v1768 = vpop.f32.mrb[0].mxu0
      %v1769 = vpop.f32.mrb[0].mxu0
      %v1770 = vadd.f32 0.0, %v1769
      %v1771 = vpop.f32.mrb[0].mxu0
      %1772 = vmatprep.mubr.bf16.mxu0 0
      %1773 = vmatmul.mubr.bf16.gmra.mrb[0].mxu0 %v1228
      %v1774 = vpop.f32.mrb[0].mxu0
      %v1775 = vadd.f32 0.0, %v1774
      %v1776 = vpop.f32.mrb[0].mxu0
      %v1777 = vpop.f32.mrb[0].mxu0
      %v1778 = vadd.f32 0.0, %v1777
      %v1779 = vpop.f32.mrb[0].mxu0
      %1780 = vmatprep.mubr.bf16.mxu0 0
      %1781 = vmatmul.mubr.bf16.gmra.mrb[0].mxu0 %v1231
      %v1782 = vpop.f32.mrb[0].mxu0
      %v1783 = vadd.f32 0.0, %v1782
      %v1784 = vpop.f32.mrb[0].mxu0
      %v1785 = vpop.f32.mrb[0].mxu0
      %v1786 = vadd.f32 0.0, %v1785
      %v1787 = vpop.f32.mrb[0].mxu0
      %1788 = vmatprep.mubr.bf16.mxu0 0
      %1789 = vmatmul.mubr.bf16.gmra.mrb[0].mxu0 %v1234
      %v1790 = vpop.f32.mrb[0].mxu0
      %v1791 = vadd.f32 0.0, %v1790
      %v1792 = vpop.f32.mrb[0].mxu0
      %v1793 = vpop.f32.mrb[0].mxu0
      %v1794 = vadd.f32 0.0, %v1793
      %v1795 = vpop.f32.mrb[0].mxu0
      %1796 = vmatprep.mubr.bf16.mxu0 0
      %1797 = vmatmul.mubr.bf16.gmra.mrb[0].mxu0 %v1237
      %v1798 = vpop.f32.mrb[0].mxu0
      %v1799 = vadd.f32 0.0, %v1798
      %v1800 = vpop.f32.mrb[0].mxu0
      %v1801 = vpop.f32.mrb[0].mxu0
      %v1802 = vadd.f32 0.0, %v1801
      %v1803 = vpop.f32.mrb[0].mxu0
      %1804 = vmatprep.mubr.bf16.mxu0 0
      %1805 = vmatmul.mubr.bf16.gmra.mrb[0].mxu0 %v1240
      %v1806 = vpop.f32.mrb[0].mxu0
      %v1807 = vadd.f32 0.0, %v1806
      %v1808 = vpop.f32.mrb[0].mxu0
      %v1809 = vpop.f32.mrb[0].mxu0
      %v1810 = vadd.f32 0.0, %v1809
      %v1811 = vpop.f32.mrb[0].mxu0
      %1812 = vmatprep.mubr.bf16.mxu0 0
      %1813 = vmatmul.mubr.bf16.gmra.mrb[0].mxu0 %v1243
      %v1814 = vpop.f32.mrb[0].mxu0
      %v1815 = vadd.f32 0.0, %v1814
      %v1816 = vpop.f32.mrb[0].mxu0
      %v1817 = vpop.f32.mrb[0].mxu0
      %v1818 = vadd.f32 0.0, %v1817
      %v1819 = vpop.f32.mrb[0].mxu0
      %1820 = vmatprep.mubr.bf16.mxu0 0
      %1821 = vmatmul.mubr.bf16.gmra.mrb[0].mxu0 %v1246
      %v1822 = vpop.f32.mrb[0].mxu0
      %v1823 = vadd.f32 0.0, %v1822
      %v1824 = vpop.f32.mrb[0].mxu0
      %v1825 = vpop.f32.mrb[0].mxu0
      %v1826 = vadd.f32 0.0, %v1825
      %v1827 = vpop.f32.mrb[0].mxu0
      %1828 = vmatprep.mubr.bf16.mxu0 0
      %1829 = vmatmul.mubr.bf16.gmra.mrb[0].mxu0 %v1249
      %v1830 = vpop.f32.mrb[0].mxu0
      %v1831 = vadd.f32 0.0, %v1830
      %v1832 = vpop.f32.mrb[0].mxu0
      %v1833 = vpop.f32.mrb[0].mxu0
      %v1834 = vadd.f32 0.0, %v1833
      %v1835 = vpop.f32.mrb[0].mxu0
      %1836 = vmatprep.mubr.bf16.mxu0 0
      %1837 = vmatmul.mubr.bf16.gmra.mrb[0].mxu0 %v1252
      %v1838 = vpop.f32.mrb[0].mxu0
      %v1839 = vadd.f32 0.0, %v1838
      %v1840 = vpop.f32.mrb[0].mxu0
      %v1841 = vpop.f32.mrb[0].mxu0
      %v1842 = vadd.f32 0.0, %v1841
      %v1843 = vpop.f32.mrb[0].mxu0
      %1844 = vmatprep.mubr.bf16.mxu0 0
      %1845 = vmatmul.mubr.bf16.gmra.mrb[0].mxu0 %v1255
      %v1846 = vpop.f32.mrb[0].mxu0
      %v1847 = vadd.f32 0.0, %v1846
      %v1848 = vpop.f32.mrb[0].mxu0
      %v1849 = vpop.f32.mrb[0].mxu0
      %v1850 = vadd.f32 0.0, %v1849
      %v1851 = vpop.f32.mrb[0].mxu0
      %1852 = vmatprep.mubr.bf16.mxu0 0
      %1853 = vmatmul.mubr.bf16.gmra.mrb[0].mxu0 %v1258
      %v1854 = vpop.f32.mrb[0].mxu0
      %v1855 = vadd.f32 0.0, %v1854
      %v1856 = vpop.f32.mrb[0].mxu0
      %v1857 = vpop.f32.mrb[0].mxu0
      %v1858 = vadd.f32 0.0, %v1857
      %v1859 = vpop.f32.mrb[0].mxu0
      %1860 = vmatprep.mubr.bf16.mxu0 0
      %1861 = vmatmul.mubr.bf16.gmra.mrb[0].mxu0 %v1261
      %v1862 = vpop.f32.mrb[0].mxu0
      %v1863 = vadd.f32 0.0, %v1862
      %v1864 = vpop.f32.mrb[0].mxu0
      %v1865 = vpop.f32.mrb[0].mxu0
      %v1866 = vadd.f32 0.0, %v1865
      %v1867 = vpop.f32.mrb[0].mxu0
      %1868 = vmatprep.mubr.bf16.mxu0 0
      %1869 = vmatmul.mubr.bf16.gmra.mrb[0].mxu0 %v1264
      %v1870 = vpop.f32.mrb[0].mxu0
      %v1871 = vadd.f32 0.0, %v1870
      %v1872 = vpop.f32.mrb[0].mxu0
      %v1873 = vpop.f32.mrb[0].mxu0
      %v1874 = vadd.f32 0.0, %v1873
      %v1875 = vpop.f32.mrb[0].mxu0
      %1876 = vmatprep.mubr.bf16.mxu0 0
      %1877 = vmatmul.mubr.bf16.gmra.mrb[0].mxu0 %v1267
      %v1878 = vpop.f32.mrb[0].mxu0
      %v1879 = vadd.f32 0.0, %v1878
      %v1880 = vpop.f32.mrb[0].mxu0
      %v1881 = vpop.f32.mrb[0].mxu0
      %v1882 = vadd.f32 0.0, %v1881
      %v1883 = vpop.f32.mrb[0].mxu0
      %1884 = vmatprep.mubr.bf16.mxu0 0
      %1885 = vmatmul.mubr.bf16.gmra.mrb[0].mxu0 %v1270
      %v1886 = vpop.f32.mrb[0].mxu0
      %v1887 = vadd.f32 0.0, %v1886
      %v1888 = vpop.f32.mrb[0].mxu0
      %v1889 = vpop.f32.mrb[0].mxu0
      %v1890 = vadd.f32 0.0, %v1889
      %v1891 = vpop.f32.mrb[0].mxu0
      %1892 = vmatprep.mubr.bf16.mxu0 0
      %1893 = vmatmul.mubr.bf16.gmra.mrb[0].mxu0 %v1273
      %v1894 = vpop.f32.mrb[0].mxu0
      %v1895 = vadd.f32 0.0, %v1894
      %v1896 = vpop.f32.mrb[0].mxu0
      %v1897 = vpop.f32.mrb[0].mxu0
      %v1898 = vadd.f32 0.0, %v1897
      %v1899 = vpop.f32.mrb[0].mxu0
      %1900 = vmatprep.mubr.bf16.mxu0 0
      %1901 = vmatmul.mubr.bf16.gmra.mrb[0].mxu0 %v1276
      %v1902 = vpop.f32.mrb[0].mxu0
      %v1903 = vadd.f32 0.0, %v1902
      %v1904 = vpop.f32.mrb[0].mxu0
      %v1905 = vpop.f32.mrb[0].mxu0
      %v1906 = vadd.f32 0.0, %v1905
      %v1907 = vpop.f32.mrb[0].mxu0
      %1908 = vmatprep.mubr.bf16.mxu0 0
      %1909 = vmatmul.mubr.bf16.gmra.mrb[0].mxu0 %v1279
      %v1910 = vpop.f32.mrb[0].mxu0
      %v1911 = vadd.f32 0.0, %v1910
      %v1912 = vpop.f32.mrb[0].mxu0
      %v1913 = vpop.f32.mrb[0].mxu0
      %v1914 = vadd.f32 0.0, %v1913
      %v1915 = vpop.f32.mrb[0].mxu0
      %1916 = vmatprep.mubr.bf16.mxu0 0
      %1917 = vmatmul.mubr.bf16.gmra.mrb[0].mxu0 %v1282
      %v1918 = vpop.f32.mrb[0].mxu0
      %v1919 = vadd.f32 0.0, %v1918
      %v1920 = vpop.f32.mrb[0].mxu0
      %v1921 = vpop.f32.mrb[0].mxu0
      %v1922 = vadd.f32 0.0, %v1921
      %v1923 = vpop.f32.mrb[0].mxu0
      %1924 = vmatprep.mubr.bf16.mxu0 0
      %1925 = vmatmul.mubr.bf16.gmra.mrb[0].mxu0 %v1285
      %v1926 = vpop.f32.mrb[0].mxu0
      %v1927 = vadd.f32 0.0, %v1926
      %v1928 = vpop.f32.mrb[0].mxu0
      %v1929 = vpop.f32.mrb[0].mxu0
      %v1930 = vadd.f32 0.0, %v1929
      %v1931 = vpop.f32.mrb[0].mxu0
      %1932 = vmatprep.mubr.bf16.mxu0 0
      %1933 = vmatmul.mubr.bf16.gmra.mrb[0].mxu0 %v1288
      %v1934 = vpop.f32.mrb[0].mxu0
      %v1935 = vadd.f32 0.0, %v1934
      %v1936 = vpop.f32.mrb[0].mxu0
      %v1937 = vpop.f32.mrb[0].mxu0
      %v1938 = vadd.f32 0.0, %v1937
      %v1939 = vpop.f32.mrb[0].mxu0
      %1940 = vmatprep.mubr.bf16.mxu0 0
      %1941 = vmatmul.mubr.bf16.gmra.mrb[0].mxu0 %v1291
      %v1942 = vpop.f32.mrb[0].mxu0
      %v1943 = vadd.f32 0.0, %v1942
      %v1944 = vpop.f32.mrb[0].mxu0
      %v1945 = vpop.f32.mrb[0].mxu0
      %v1946 = vadd.f32 0.0, %v1945
      %v1947 = vpop.f32.mrb[0].mxu0
      %1948 = vmatprep.mubr.bf16.mxu0 0
      %1949 = vmatmul.mubr.bf16.gmra.mrb[0].mxu0 %v1294
      %v1950 = vpop.f32.mrb[0].mxu0
      %v1951 = vadd.f32 0.0, %v1950
      %v1952 = vpop.f32.mrb[0].mxu0
      %v1953 = vpop.f32.mrb[0].mxu0
      %v1954 = vadd.f32 0.0, %v1953
      %v1955 = vpop.f32.mrb[0].mxu0
      %1956 = vmatprep.mubr.bf16.mxu0 0
      %1957 = vmatmul.mubr.bf16.gmra.mrb[0].mxu0 %v1297
      %v1958 = vpop.f32.mrb[0].mxu0
      %v1959 = vadd.f32 0.0, %v1958
      %v1960 = vpop.f32.mrb[0].mxu0
      %v1961 = vpop.f32.mrb[0].mxu0
      %v1962 = vadd.f32 0.0, %v1961
      %v1963 = vpop.f32.mrb[0].mxu0
      %1964 = vmatprep.mubr.bf16.mxu0 0
      %1965 = vmatmul.mubr.bf16.gmra.mrb[0].mxu0 %v1300
      %v1966 = vpop.f32.mrb[0].mxu0
      %v1967 = vadd.f32 0.0, %v1966
      %v1968 = vpop.f32.mrb[0].mxu0
      %v1969 = vpop.f32.mrb[0].mxu0
      %v1970 = vadd.f32 0.0, %v1969
      %v1971 = vpop.f32.mrb[0].mxu0
      %1972 = vmatprep.mubr.bf16.mxu0 0
      %1973 = vmatmul.mubr.bf16.gmra.mrb[0].mxu0 %v1303
      %v1974 = vpop.f32.mrb[0].mxu0
      %v1975 = vadd.f32 0.0, %v1974
      %v1976 = vpop.f32.mrb[0].mxu0
      %v1977 = vpop.f32.mrb[0].mxu0
      %v1978 = vadd.f32 0.0, %v1977
      %v1979 = vpop.f32.mrb[0].mxu0
      %1980 = vmatprep.mubr.bf16.mxu0 0
      %1981 = vmatmul.mubr.bf16.gmra.mrb[0].mxu0 %v1306
      %v1982 = vpop.f32.mrb[0].mxu0
      %v1983 = vadd.f32 0.0, %v1982
      %v1984 = vpop.f32.mrb[0].mxu0
      %v1985 = vpop.f32.mrb[0].mxu0
      %v1986 = vadd.f32 0.0, %v1985
      %v1987 = vpop.f32.mrb[0].mxu0
      %1988 = vmatprep.mubr.bf16.mxu0 0
      %1989 = vmatmul.mubr.bf16.gmra.mrb[0].mxu0 %v1309
      %v1990 = vpop.f32.mrb[0].mxu0
      %v1991 = vadd.f32 0.0, %v1990
      %v1992 = vpop.f32.mrb[0].mxu0
      %v1993 = vpop.f32.mrb[0].mxu0
      %v1994 = vadd.f32 0.0, %v1993
      %v1995 = vpop.f32.mrb[0].mxu0
      %1996 = vmatprep.mubr.bf16.mxu0 0
      %1997 = vmatmul.mubr.bf16.gmra.mrb[0].mxu0 %v1312
      %v1998 = vpop.f32.mrb[0].mxu0
      %v1999 = vadd.f32 0.0, %v1998
      %v2000 = vpop.f32.mrb[0].mxu0
      %v2001 = vpop.f32.mrb[0].mxu0
      %v2002 = vadd.f32 0.0, %v2001
      %v2003 = vpop.f32.mrb[0].mxu0
      %2004 = vmatprep.mubr.bf16.mxu0 0
      %2005 = vmatmul.mubr.bf16.gmra.mrb[0].mxu0 %v1315
      %v2006 = vpop.f32.mrb[0].mxu0
      %v2007 = vadd.f32 0.0, %v2006
      %v2008 = vpop.f32.mrb[0].mxu0
      %v2009 = vpop.f32.mrb[0].mxu0
      %v2010 = vadd.f32 0.0, %v2009
      %v2011 = vpop.f32.mrb[0].mxu0
      %2012 = vmatprep.mubr.bf16.mxu0 0
      %2013 = vmatmul.mubr.bf16.gmra.mrb[0].mxu0 %v1318
      %v2014 = vpop.f32.mrb[0].mxu0
      %v2015 = vadd.f32 0.0, %v2014
      %v2016 = vpop.f32.mrb[0].mxu0
      %v2017 = vpop.f32.mrb[0].mxu0
      %v2018 = vadd.f32 0.0, %v2017
      %v2019 = vpop.f32.mrb[0].mxu0
      %2020 = vmatprep.mubr.bf16.mxu0 0
      %2021 = vmatmul.mubr.bf16.gmra.mrb[0].mxu0 %v1321
      %v2022 = vpop.f32.mrb[0].mxu0
      %v2023 = vadd.f32 0.0, %v2022
      %v2024 = vpop.f32.mrb[0].mxu0
      %v2025 = vpop.f32.mrb[0].mxu0
      %v2026 = vadd.f32 0.0, %v2025
      %v2027 = vpop.f32.mrb[0].mxu0
      %2028 = vmatprep.mubr.bf16.mxu0 0
      %2029 = vmatmul.mubr.bf16.gmra.mrb[0].mxu0 %v1324
      %v2030 = vpop.f32.mrb[0].mxu0
      %v2031 = vadd.f32 0.0, %v2030
      %v2032 = vpop.f32.mrb[0].mxu0
      %v2033 = vpop.f32.mrb[0].mxu0
      %v2034 = vadd.f32 0.0, %v2033
      %v2035 = vpop.f32.mrb[0].mxu0
      %2036 = vmatprep.mubr.bf16.mxu0 0
      %2037 = vmatmul.mubr.bf16.gmra.mrb[0].mxu0 %v1327
      %v2038 = vpop.f32.mrb[0].mxu0
      %v2039 = vadd.f32 0.0, %v2038
      %v2040 = vpop.f32.mrb[0].mxu0
      %v2041 = vpop.f32.mrb[0].mxu0
      %v2042 = vadd.f32 0.0, %v2041
      %v2043 = vpop.f32.mrb[0].mxu0
      %2044 = vmatprep.mubr.bf16.mxu0 0
      %2045 = vmatmul.mubr.bf16.gmra.mrb[0].mxu0 %v1330
      %v2046 = vpop.f32.mrb[0].mxu0
      %v2047 = vadd.f32 0.0, %v2046
      %v2048 = vpop.f32.mrb[0].mxu0
      %v2049 = vpop.f32.mrb[0].mxu0
      %v2050 = vadd.f32 0.0, %v2049
      %v2051 = vpop.f32.mrb[0].mxu0
      %2052 = vmatprep.mubr.bf16.mxu0 0
      %2053 = vmatmul.mubr.bf16.gmra.mrb[0].mxu0 %v1333
      %v2054 = vpop.f32.mrb[0].mxu0
      %v2055 = vadd.f32 0.0, %v2054
      %v2056 = vpop.f32.mrb[0].mxu0
      %v2057 = vpop.f32.mrb[0].mxu0
      %v2058 = vadd.f32 0.0, %v2057
      %v2059 = vpop.f32.mrb[0].mxu0
      %2060 = vmatprep.mubr.bf16.mxu0 0
      %2061 = vmatmul.mubr.bf16.gmra.mrb[0].mxu0 %v1336
      %v2062 = vpop.f32.mrb[0].mxu0
      %v2063 = vadd.f32 0.0, %v2062
      %v2064 = vpop.f32.mrb[0].mxu0
      %v2065 = vpop.f32.mrb[0].mxu0
      %v2066 = vadd.f32 0.0, %v2065
      %v2067 = vpop.f32.mrb[0].mxu0
      %2068 = vmatprep.mubr.bf16.mxu0 0
      %2069 = vmatmul.mubr.bf16.gmra.mrb[0].mxu0 %v1339
      %v2070 = vpop.f32.mrb[0].mxu0
      %v2071 = vadd.f32 0.0, %v2070
      %v2072 = vpop.f32.mrb[0].mxu0
      %v2073 = vpop.f32.mrb[0].mxu0
      %v2074 = vadd.f32 0.0, %v2073
      %v2075 = vpop.f32.mrb[0].mxu0
      %2076 = vmatprep.mubr.bf16.mxu0 0
      %2077 = vmatmul.mubr.bf16.gmra.mrb[0].mxu0 %v1342
      %v2078 = vpop.f32.mrb[0].mxu0
      %v2079 = vadd.f32 0.0, %v2078
      %v2080 = vpop.f32.mrb[0].mxu0
      %v2081 = vpop.f32.mrb[0].mxu0
      %v2082 = vadd.f32 0.0, %v2081
      %v2083 = vpop.f32.mrb[0].mxu0
      %2084 = vmatprep.mubr.bf16.mxu0 0
      %2085 = vmatmul.mubr.bf16.gmra.mrb[0].mxu0 %v1345
      %v2086 = vpop.f32.mrb[0].mxu0
      %v2087 = vadd.f32 0.0, %v2086
      %v2088 = vpop.f32.mrb[0].mxu0
      %v2089 = vpop.f32.mrb[0].mxu0
      %v2090 = vadd.f32 0.0, %v2089
      %v2091 = vpop.f32.mrb[0].mxu0
      %2092 = vmatprep.mubr.bf16.mxu0 0
      %2093 = vmatmul.mubr.bf16.gmra.mrb[0].mxu0 %v1348
      %v2094 = vpop.f32.mrb[0].mxu0
      %v2095 = vadd.f32 0.0, %v2094
      %v2096 = vpop.f32.mrb[0].mxu0
      %v2097 = vpop.f32.mrb[0].mxu0
      %v2098 = vadd.f32 0.0, %v2097
      %v2099 = vpop.f32.mrb[0].mxu0
      %2100 = vmatprep.mubr.bf16.mxu0 0
      %2101 = vmatmul.mubr.bf16.gmra.mrb[0].mxu0 %v1351
      %v2102 = vpop.f32.mrb[0].mxu0
      %v2103 = vadd.f32 0.0, %v2102
      %v2104 = vpop.f32.mrb[0].mxu0
      %v2105 = vpop.f32.mrb[0].mxu0
      %v2106 = vadd.f32 0.0, %v2105
      %v2107 = vpop.f32.mrb[0].mxu0
      %2108 = vmatprep.mubr.bf16.mxu0 0
      %2109 = vmatmul.mubr.bf16.gmra.mrb[0].mxu0 %v1354
      %v2110 = vpop.f32.mrb[0].mxu0
      %v2111 = vadd.f32 0.0, %v2110
      %v2112 = vpop.f32.mrb[0].mxu0
      %v2113 = vpop.f32.mrb[0].mxu0
      %v2114 = vadd.f32 0.0, %v2113
      %v2115 = vpop.f32.mrb[0].mxu0
      %2116 = vmatprep.mubr.bf16.mxu0 0
      %2117 = vmatmul.mubr.bf16.gmra.mrb[0].mxu0 %v1357
      %v2118 = vpop.f32.mrb[0].mxu0
      %v2119 = vadd.f32 0.0, %v2118
      %v2120 = vpop.f32.mrb[0].mxu0
      %v2121 = vpop.f32.mrb[0].mxu0
      %v2122 = vadd.f32 0.0, %v2121
      %v2123 = vpop.f32.mrb[0].mxu0
      %2124 = vmatprep.mubr.bf16.mxu0 0
      %2125 = vmatmul.mubr.bf16.gmra.mrb[0].mxu0 %v1360
      %v2126 = vpop.f32.mrb[0].mxu0
      %v2127 = vadd.f32 0.0, %v2126
      %v2128 = vpop.f32.mrb[0].mxu0
      %v2129 = vpop.f32.mrb[0].mxu0
      %v2130 = vadd.f32 0.0, %v2129
      %v2131 = vpop.f32.mrb[0].mxu0
      %2132 = vmatprep.mubr.bf16.mxu0 0
      %2133 = vmatmul.mubr.bf16.gmra.mrb[0].mxu0 %v1363
      %v2134 = vpop.f32.mrb[0].mxu0
      %v2135 = vadd.f32 0.0, %v2134
      %v2136 = vpop.f32.mrb[0].mxu0
      %v2137 = vpop.f32.mrb[0].mxu0
      %v2138 = vadd.f32 0.0, %v2137
      %v2139 = vpop.f32.mrb[0].mxu0
      %2140 = vmatprep.mubr.bf16.mxu0 0
      %2141 = vmatmul.mubr.bf16.gmra.mrb[0].mxu0 %v1366
      %v2142 = vpop.f32.mrb[0].mxu0
      %v2143 = vadd.f32 0.0, %v2142
      %v2144 = vpop.f32.mrb[0].mxu0
      %v2145 = vpop.f32.mrb[0].mxu0
      %v2146 = vadd.f32 0.0, %v2145
      %v2147 = vpop.f32.mrb[0].mxu0
      %2148 = vmatprep.mubr.bf16.mxu0 0
      %2149 = vmatmul.mubr.bf16.gmra.mrb[0].mxu0 %v1369
      %v2150 = vpop.f32.mrb[0].mxu0
      %v2151 = vadd.f32 0.0, %v2150
      %v2152 = vpop.f32.mrb[0].mxu0
      %v2153 = vpop.f32.mrb[0].mxu0
      %v2154 = vadd.f32 0.0, %v2153
      %v2155 = vpop.f32.mrb[0].mxu0
      %2156 = vmatprep.mubr.bf16.mxu0 0
      %2157 = vmatmul.mubr.bf16.gmra.mrb[0].mxu0 %v1372
      %v2158 = vpop.f32.mrb[0].mxu0
      %v2159 = vadd.f32 0.0, %v2158
      %v2160 = vpop.f32.mrb[0].mxu0
      %v2161 = vpop.f32.mrb[0].mxu0
      %v2162 = vadd.f32 0.0, %v2161
      %v2163 = vpop.f32.mrb[0].mxu0
      %2164 = vmatprep.mubr.bf16.mxu0 0
      %2165 = vmatmul.mubr.bf16.gmra.mrb[0].mxu0 %v1375
      %v2166 = vpop.f32.mrb[0].mxu0
      %v2167 = vadd.f32 0.0, %v2166
      %v2168 = vpop.f32.mrb[0].mxu0
      %v2169 = vpop.f32.mrb[0].mxu0
      %v2170 = vadd.f32 0.0, %v2169
      %v2171 = vpop.f32.mrb[0].mxu0
      %2172 = vmatprep.mubr.bf16.mxu0 0
      %2173 = vmatmul.mubr.bf16.gmra.mrb[0].mxu0 %v1378
      %v2174 = vpop.f32.mrb[0].mxu0
      %v2175 = vadd.f32 0.0, %v2174
      %v2176 = vpop.f32.mrb[0].mxu0
      %v2177 = vpop.f32.mrb[0].mxu0
      %v2178 = vadd.f32 0.0, %v2177
      %v2179 = vpop.f32.mrb[0].mxu0
      %2180 = vmatprep.mubr.bf16.mxu0 0
      %2181 = vmatmul.mubr.bf16.gmra.mrb[0].mxu0 %v1381
      %v2182 = vpop.f32.mrb[0].mxu0
      %v2183 = vadd.f32 0.0, %v2182
      %v2184 = vpop.f32.mrb[0].mxu0
      %v2185 = vpop.f32.mrb[0].mxu0
      %v2186 = vadd.f32 0.0, %v2185
      %v2187 = vpop.f32.mrb[0].mxu0
      %2188 = vmatprep.mubr.bf16.mxu0 0
      %2189 = vmatmul.mubr.bf16.gmra.mrb[0].mxu0 %v1384
      %v2190 = vpop.f32.mrb[0].mxu0
      %v2191 = vadd.f32 0.0, %v2190
      %v2192 = vpop.f32.mrb[0].mxu0
      %v2193 = vpop.f32.mrb[0].mxu0
      %v2194 = vadd.f32 0.0, %v2193
      %v2195 = vpop.f32.mrb[0].mxu0
      %2196 = vmatprep.mubr.bf16.mxu0 0
      %2197 = vmatmul.mubr.bf16.gmra.mrb[0].mxu0 %v1387
      %v2198 = vpop.f32.mrb[0].mxu0
      %v2199 = vadd.f32 0.0, %v2198
      %v2200 = vpop.f32.mrb[0].mxu0
      %v2201 = vpop.f32.mrb[0].mxu0
      %v2202 = vadd.f32 0.0, %v2201
      %v2203 = vpop.f32.mrb[0].mxu0
      %2204 = vmatprep.mubr.bf16.mxu0 0
      %2205 = vmatmul.mubr.bf16.gmra.mrb[0].mxu0 %v1390
      %v2206 = vpop.f32.mrb[0].mxu0
      %v2207 = vadd.f32 0.0, %v2206
      %v2208 = vpop.f32.mrb[0].mxu0
      %v2209 = vpop.f32.mrb[0].mxu0
      %v2210 = vadd.f32 0.0, %v2209
      %v2211 = vpop.f32.mrb[0].mxu0
      %2212 = vmatprep.mubr.bf16.mxu0 0
      %2213 = vmatmul.mubr.bf16.gmra.mrb[0].mxu0 %v1393
      %v2214 = vpop.f32.mrb[0].mxu0
      %v2215 = vadd.f32 0.0, %v2214
      %v2216 = vpop.f32.mrb[0].mxu0
      %v2217 = vpop.f32.mrb[0].mxu0
      %v2218 = vadd.f32 0.0, %v2217
      %v2219 = vpop.f32.mrb[0].mxu0
      %2220 = vmatprep.mubr.bf16.mxu0 0
      %2221 = vmatmul.mubr.bf16.gmra.mrb[0].mxu0 %v1396
      %v2222 = vpop.f32.mrb[0].mxu0
      %v2223 = vadd.f32 0.0, %v2222
      %v2224 = vpop.f32.mrb[0].mxu0
      %v2225 = vpop.f32.mrb[0].mxu0
      %v2226 = vadd.f32 0.0, %v2225
      %v2227 = vpop.f32.mrb[0].mxu0
      %2228 = vmatprep.mubr.bf16.mxu0 0
      %2229 = vmatmul.mubr.bf16.gmra.mrb[0].mxu0 %v1399
      %v2230 = vpop.f32.mrb[0].mxu0
      %v2231 = vadd.f32 0.0, %v2230
      %v2232 = vpop.f32.mrb[0].mxu0
      %v2233 = vpop.f32.mrb[0].mxu0
      %v2234 = vadd.f32 0.0, %v2233
      %v2235 = vpop.f32.mrb[0].mxu0
      %2236 = vmatprep.mubr.bf16.mxu0 0
      %2237 = vmatmul.mubr.bf16.gmra.mrb[0].mxu0 %v1402
      %v2238 = vpop.f32.mrb[0].mxu0
      %v2239 = vadd.f32 0.0, %v2238
      %v2240 = vpop.f32.mrb[0].mxu0
      %v2241 = vpop.f32.mrb[0].mxu0
      %v2242 = vadd.f32 0.0, %v2241
      %v2243 = vpop.f32.mrb[0].mxu0
      %2244 = vmatprep.mubr.bf16.mxu0 0
      %2245 = vmatmul.mubr.bf16.gmra.mrb[0].mxu0 %v1405
      %v2246 = vpop.f32.mrb[0].mxu0
      %v2247 = vadd.f32 0.0, %v2246
      %v2248 = vpop.f32.mrb[0].mxu0
      %v2249 = vpop.f32.mrb[0].mxu0
      %v2250 = vadd.f32 0.0, %v2249
      %v2251 = vpop.f32.mrb[0].mxu0
      %2252 = vmatprep.mubr.bf16.mxu0 0
      %2253 = vmatmul.mubr.bf16.gmra.mrb[0].mxu0 %v1408
      %v2254 = vpop.f32.mrb[0].mxu0
      %v2255 = vadd.f32 0.0, %v2254
      %v2256 = vpop.f32.mrb[0].mxu0
      %v2257 = vpop.f32.mrb[0].mxu0
      %v2258 = vadd.f32 0.0, %v2257
      %v2259 = vpop.f32.mrb[0].mxu0
      %2260 = vmatprep.mubr.bf16.mxu0 0
      %2261 = vmatmul.mubr.bf16.gmra.mrb[0].mxu0 %v1411
      %v2262 = vpop.f32.mrb[0].mxu0
      %v2263 = vadd.f32 0.0, %v2262
      %v2264 = vpop.f32.mrb[0].mxu0
      %v2265 = vpop.f32.mrb[0].mxu0
      %v2266 = vadd.f32 0.0, %v2265
      %v2267 = vpop.f32.mrb[0].mxu0
      %2268 = vmatprep.mubr.bf16.mxu0 0
      %2269 = vmatmul.mubr.bf16.gmra.mrb[0].mxu0 %v1414
      %v2270 = vpop.f32.mrb[0].mxu0
      %v2271 = vadd.f32 0.0, %v2270
      %v2272 = vpop.f32.mrb[0].mxu0
      %v2273 = vpop.f32.mrb[0].mxu0
      %v2274 = vadd.f32 0.0, %v2273
      %v2275 = vpop.f32.mrb[0].mxu0
      %2276 = vmatprep.mubr.bf16.mxu0 0
      %2277 = vmatmul.mubr.bf16.gmra.mrb[0].mxu0 %v1417
      %v2278 = vpop.f32.mrb[0].mxu0
      %v2279 = vadd.f32 0.0, %v2278
      %v2280 = vpop.f32.mrb[0].mxu0
      %v2281 = vpop.f32.mrb[0].mxu0
      %v2282 = vadd.f32 0.0, %v2281
      %v2283 = vpop.f32.mrb[0].mxu0
      %2284 = vmatprep.mubr.bf16.mxu0 0
      %2285 = vmatmul.mubr.bf16.gmra.mrb[0].mxu0 %v1420
      %v2286 = vpop.f32.mrb[0].mxu0
      %v2287 = vadd.f32 0.0, %v2286
      %v2288 = vpop.f32.mrb[0].mxu0
      %v2289 = vpop.f32.mrb[0].mxu0
      %v2290 = vadd.f32 0.0, %v2289
      %v2291 = vpop.f32.mrb[0].mxu0
      %2292 = vmatprep.mubr.bf16.mxu0 0
      %2293 = vmatmul.mubr.bf16.gmra.mrb[0].mxu0 %v1423
      %v2294 = vpop.f32.mrb[0].mxu0
      %v2295 = vadd.f32 0.0, %v2294
      %v2296 = vpop.f32.mrb[0].mxu0
      %v2297 = vpop.f32.mrb[0].mxu0
      %v2298 = vadd.f32 0.0, %v2297
      %v2299 = vpop.f32.mrb[0].mxu0
      %2300 = vmatprep.mubr.bf16.mxu0 0
      %2301 = vmatmul.mubr.bf16.gmra.mrb[0].mxu0 %v1426
      %v2302 = vpop.f32.mrb[0].mxu0
      %v2303 = vadd.f32 0.0, %v2302
      %v2304 = vpop.f32.mrb[0].mxu0
      %v2305 = vpop.f32.mrb[0].mxu0
      %v2306 = vadd.f32 0.0, %v2305
      %v2307 = vpop.f32.mrb[0].mxu0
      %2308 = vmatprep.mubr.bf16.mxu0 0
      %2309 = vmatmul.mubr.bf16.gmra.mrb[0].mxu0 %v1429
      %v2310 = vpop.f32.mrb[0].mxu0
      %v2311 = vadd.f32 0.0, %v2310
      %v2312 = vpop.f32.mrb[0].mxu0
      %v2313 = vpop.f32.mrb[0].mxu0
      %v2314 = vadd.f32 0.0, %v2313
      %v2315 = vpop.f32.mrb[0].mxu0
      %2316 = vmatprep.mubr.bf16.mxu0 0
      %2317 = vmatmul.mubr.bf16.gmra.mrb[0].mxu0 %v1432
      %v2318 = vpop.f32.mrb[0].mxu0
      %v2319 = vadd.f32 0.0, %v2318
      %v2320 = vpop.f32.mrb[0].mxu0
      %v2321 = vpop.f32.mrb[0].mxu0
      %v2322 = vadd.f32 0.0, %v2321
      %v2323 = vpop.f32.mrb[0].mxu0
      %2324 = vmatprep.mubr.bf16.mxu0 0
      %2325 = vmatmul.mubr.bf16.gmra.mrb[0].mxu0 %v1435
      %v2326 = vpop.f32.mrb[0].mxu0
      %v2327 = vadd.f32 0.0, %v2326
      %v2328 = vpop.f32.mrb[0].mxu0
      %v2329 = vpop.f32.mrb[0].mxu0
      %v2330 = vadd.f32 0.0, %v2329
      %v2331 = vpop.f32.mrb[0].mxu0
      %2332 = vmatprep.mubr.bf16.mxu0 0
      %2333 = vmatmul.mubr.bf16.gmra.mrb[0].mxu0 %v1438
      %v2334 = vpop.f32.mrb[0].mxu0
      %v2335 = vadd.f32 0.0, %v2334
      %v2336 = vpop.f32.mrb[0].mxu0
      %v2337 = vpop.f32.mrb[0].mxu0
      %v2338 = vadd.f32 0.0, %v2337
      %v2339 = vpop.f32.mrb[0].mxu0
      %2340 = vmatprep.mubr.bf16.mxu0 0
      %2341 = vmatmul.mubr.bf16.gmra.mrb[0].mxu0 %v1441
      %v2342 = vpop.f32.mrb[0].mxu0
      %v2343 = vadd.f32 0.0, %v2342
      %v2344 = vpop.f32.mrb[0].mxu0
      %v2345 = vpop.f32.mrb[0].mxu0
      %v2346 = vadd.f32 0.0, %v2345
      %v2347 = vpop.f32.mrb[0].mxu0
      %2348 = vmatprep.mubr.bf16.mxu0 0
      %2349 = vmatmul.mubr.bf16.gmra.mrb[0].mxu0 %v1444
      %v2350 = vpop.f32.mrb[0].mxu0
      %v2351 = vadd.f32 0.0, %v2350
      %v2352 = vpop.f32.mrb[0].mxu0
      %v2353 = vpop.f32.mrb[0].mxu0
      %v2354 = vadd.f32 0.0, %v2353
      %v2355 = vpop.f32.mrb[0].mxu0
      %2356 = vmatprep.mubr.bf16.mxu0 0
      %2357 = vmatmul.mubr.bf16.gmra.mrb[0].mxu0 %v1447
      %v2358 = vpop.f32.mrb[0].mxu0
      %v2359 = vadd.f32 0.0, %v2358
      %v2360 = vpop.f32.mrb[0].mxu0
      %v2361 = vpop.f32.mrb[0].mxu0
      %v2362 = vadd.f32 0.0, %v2361
      %v2363 = vpop.f32.mrb[0].mxu0
      %2364 = vmatprep.mubr.bf16.mxu0 0
      %2365 = vmatmul.mubr.bf16.gmra.mrb[0].mxu0 %v1450
      %v2366 = vpop.f32.mrb[0].mxu0
      %v2367 = vadd.f32 0.0, %v2366
      %v2368 = vpop.f32.mrb[0].mxu0
      %v2369 = vpop.f32.mrb[0].mxu0
      %v2370 = vadd.f32 0.0, %v2369
      %v2371 = vpop.f32.mrb[0].mxu0
      %2372 = vmatprep.mubr.bf16.mxu0 0
      %2373 = vmatmul.mubr.bf16.gmra.mrb[0].mxu0 %v1453
      %v2374 = vpop.f32.mrb[0].mxu0
      %v2375 = vadd.f32 0.0, %v2374
      %v2376 = vpop.f32.mrb[0].mxu0
      %v2377 = vpop.f32.mrb[0].mxu0
      %v2378 = vadd.f32 0.0, %v2377
      %v2379 = vpop.f32.mrb[0].mxu0
      %2380 = vmatprep.mubr.bf16.mxu0 0
      %2381 = vmatmul.mubr.bf16.gmra.mrb[0].mxu0 %v1456
      %v2382 = vpop.f32.mrb[0].mxu0
      %v2383 = vadd.f32 0.0, %v2382
      %v2384 = vpop.f32.mrb[0].mxu0
      %v2385 = vpop.f32.mrb[0].mxu0
      %v2386 = vadd.f32 0.0, %v2385
      %v2387 = vpop.f32.mrb[0].mxu0
      %2388 = vmatprep.mubr.bf16.mxu0 0
      %2389 = vmatmul.mubr.bf16.gmra.mrb[0].mxu0 %v1459
      %v2390 = vpop.f32.mrb[0].mxu0
      %v2391 = vadd.f32 0.0, %v2390
      %v2392 = vpop.f32.mrb[0].mxu0
      %v2393 = vpop.f32.mrb[0].mxu0
      %v2394 = vadd.f32 0.0, %v2393
      %v2395 = vpop.f32.mrb[0].mxu0
      %2396 = vmatprep.mubr.bf16.mxu0 0
      %2397 = vmatmul.mubr.bf16.gmra.mrb[0].mxu0 %v1462
      %v2398 = vpop.f32.mrb[0].mxu0
      %v2399 = vadd.f32 0.0, %v2398
      %v2400 = vpop.f32.mrb[0].mxu0
      %v2401 = vpop.f32.mrb[0].mxu0
      %v2402 = vadd.f32 0.0, %v2401
      %v2403 = vpop.f32.mrb[0].mxu0
      %2404 = vmatprep.mubr.bf16.mxu0 0
      %2405 = vmatmul.mubr.bf16.gmra.mrb[0].mxu0 %v1465
      %v2406 = vpop.f32.mrb[0].mxu0
      %v2407 = vadd.f32 0.0, %v2406
      %v2408 = vpop.f32.mrb[0].mxu0
      %v2409 = vpop.f32.mrb[0].mxu0
      %v2410 = vadd.f32 0.0, %v2409
      %v2411 = vpop.f32.mrb[0].mxu0
      %2412 = vmatprep.mubr.bf16.mxu0 0
      %2413 = vmatmul.mubr.bf16.gmra.mrb[0].mxu0 %v1468
      %v2414 = vpop.f32.mrb[0].mxu0
      %v2415 = vadd.f32 0.0, %v2414
      %v2416 = vpop.f32.mrb[0].mxu0
      %v2417 = vpop.f32.mrb[0].mxu0
      %v2418 = vadd.f32 0.0, %v2417
      %v2419 = vpop.f32.mrb[0].mxu0
      %2420 = vmatprep.mubr.bf16.mxu0 0
      %2421 = vmatmul.mubr.bf16.gmra.mrb[0].mxu0 %v1471
      %v2422 = vpop.f32.mrb[0].mxu0
      %v2423 = vadd.f32 0.0, %v2422
      %v2424 = vpop.f32.mrb[0].mxu0
      %v2425 = vpop.f32.mrb[0].mxu0
      %v2426 = vadd.f32 0.0, %v2425
      %v2427 = vpop.f32.mrb[0].mxu0
      %2428 = vmatprep.mubr.bf16.mxu0 0
      %2429 = vmatmul.mubr.bf16.gmra.mrb[0].mxu0 %v1474
      %v2430 = vpop.f32.mrb[0].mxu0
      %v2431 = vadd.f32 0.0, %v2430
      %v2432 = vpop.f32.mrb[0].mxu0
      %v2433 = vpop.f32.mrb[0].mxu0
      %v2434 = vadd.f32 0.0, %v2433
      %v2435 = vpop.f32.mrb[0].mxu0
      %2436 = vmatprep.mubr.bf16.mxu0 0
      %2437 = vmatmul.mubr.bf16.gmra.mrb[0].mxu0 %v1477
      %v2438 = vpop.f32.mrb[0].mxu0
      %v2439 = vadd.f32 0.0, %v2438
      %v2440 = vpop.f32.mrb[0].mxu0
      %v2441 = vpop.f32.mrb[0].mxu0
      %v2442 = vadd.f32 0.0, %v2441
      %v2443 = vpop.f32.mrb[0].mxu0
      %2444 = vmatprep.mubr.bf16.mxu0 0
      %2445 = vmatmul.mubr.bf16.gmra.mrb[0].mxu0 %v1480
      %v2446 = vpop.f32.mrb[0].mxu0
      %v2447 = vadd.f32 0.0, %v2446
      %v2448 = vpop.f32.mrb[0].mxu0
      %v2449 = vpop.f32.mrb[0].mxu0
      %v2450 = vadd.f32 0.0, %v2449
      %v2451 = vpop.f32.mrb[0].mxu0
      %2452 = vmatprep.mubr.bf16.mxu0 0
      %2453 = vmatmul.mubr.bf16.gmra.mrb[0].mxu0 %v1483
      %v2454 = vpop.f32.mrb[0].mxu0
      %v2455 = vadd.f32 0.0, %v2454
      %v2456 = vpop.f32.mrb[0].mxu0
      %v2457 = vpop.f32.mrb[0].mxu0
      %v2458 = vadd.f32 0.0, %v2457
      %v2459 = vpop.f32.mrb[0].mxu0
      %2460 = vmatprep.mubr.bf16.mxu0 0
      %2461 = vmatmul.mubr.bf16.gmra.mrb[0].mxu0 %v1486
      %v2462 = vpop.f32.mrb[0].mxu0
      %v2463 = vadd.f32 0.0, %v2462
      %v2464 = vpop.f32.mrb[0].mxu0
      %v2465 = vpop.f32.mrb[0].mxu0
      %v2466 = vadd.f32 0.0, %v2465
      %v2467 = vpop.f32.mrb[0].mxu0
      %2468 = vmatprep.mubr.bf16.mxu0 0
      %2469 = vmatmul.mubr.bf16.gmra.mrb[0].mxu0 %v1489
      %v2470 = vpop.f32.mrb[0].mxu0
      %v2471 = vadd.f32 0.0, %v2470
      %v2472 = vpop.f32.mrb[0].mxu0
      %v2473 = vpop.f32.mrb[0].mxu0
      %v2474 = vadd.f32 0.0, %v2473
      %v2475 = vpop.f32.mrb[0].mxu0
      %2476 = vmatprep.mubr.bf16.mxu0 0
      %2477 = vmatmul.mubr.bf16.gmra.mrb[0].mxu0 %v1492
      %v2478 = vpop.f32.mrb[0].mxu0
      %v2479 = vadd.f32 0.0, %v2478
      %v2480 = vpop.f32.mrb[0].mxu0
      %v2481 = vpop.f32.mrb[0].mxu0
      %v2482 = vadd.f32 0.0, %v2481
      %v2483 = vpop.f32.mrb[0].mxu0
      %2484 = vmatprep.mubr.bf16.mxu0 0
      %2485 = vmatmul.mubr.bf16.gmra.mrb[0].mxu0 %v1495
      %v2486 = vpop.f32.mrb[0].mxu0
      %v2487 = vadd.f32 0.0, %v2486
      %v2488 = vpop.f32.mrb[0].mxu0
      %v2489 = vpop.f32.mrb[0].mxu0
      %v2490 = vadd.f32 0.0, %v2489
      %v2491 = vpop.f32.mrb[0].mxu0
      %2492 = vmatprep.mubr.bf16.mxu0 0
      %2493 = vmatmul.mubr.bf16.gmra.mrb[0].mxu0 %v1498
      %v2494 = vpop.f32.mrb[0].mxu0
      %v2495 = vadd.f32 0.0, %v2494
      %v2496 = vpop.f32.mrb[0].mxu0
      %v2497 = vpop.f32.mrb[0].mxu0
      %v2498 = vadd.f32 0.0, %v2497
      %v2499 = vpop.f32.mrb[0].mxu0
      %2500 = vmatprep.mubr.bf16.mxu0 0
      %2501 = vmatmul.mubr.bf16.gmra.mrb[0].mxu0 %v1501
      %v2502 = vpop.f32.mrb[0].mxu0
      %v2503 = vadd.f32 0.0, %v2502
      %v2504 = vpop.f32.mrb[0].mxu0
      %v2505 = vpop.f32.mrb[0].mxu0
      %v2506 = vadd.f32 0.0, %v2505
      %v2507 = vpop.f32.mrb[0].mxu0
      %2508 = vmatprep.mubr.bf16.mxu0 0
      %2509 = vmatmul.mubr.bf16.gmra.mrb[0].mxu0 %v1504
      %v2510 = vpop.f32.mrb[0].mxu0
      %v2511 = vadd.f32 0.0, %v2510
      %v2512 = vpop.f32.mrb[0].mxu0
      %v2513 = vpop.f32.mrb[0].mxu0
      %v2514 = vadd.f32 0.0, %v2513
      %v2515 = vpop.f32.mrb[0].mxu0
      %2516 = vmatprep.mubr.bf16.mxu0 0
      %2517 = vmatmul.mubr.bf16.gmra.mrb[0].mxu0 %v1507
      %v2518 = vpop.f32.mrb[0].mxu0
      %v2519 = vadd.f32 0.0, %v2518
      %v2520 = vpop.f32.mrb[0].mxu0
      %v2521 = vpop.f32.mrb[0].mxu0
      %v2522 = vadd.f32 0.0, %v2521
      %v2523 = vpop.f32.mrb[0].mxu0
      %2524 = vmatprep.mubr.bf16.mxu0 0
      %2525 = vmatmul.mubr.bf16.gmra.mrb[0].mxu0 %v1510
      %v2526 = vpop.f32.mrb[0].mxu0
      %v2527 = vadd.f32 0.0, %v2526
      %v2528 = vpop.f32.mrb[0].mxu0
      %v2529 = vpop.f32.mrb[0].mxu0
      %v2530 = vadd.f32 0.0, %v2529
      %v2531 = vpop.f32.mrb[0].mxu0
      %2532 = vmatprep.mubr.bf16.mxu0 0
      %2533 = vmatmul.mubr.bf16.gmra.mrb[0].mxu0 %v1513
      %v2534 = vpop.f32.mrb[0].mxu0
      %v2535 = vadd.f32 0.0, %v2534
      %v2536 = vpop.f32.mrb[0].mxu0
      %v2537 = vpop.f32.mrb[0].mxu0
      %v2538 = vadd.f32 0.0, %v2537
      %v2539 = vpop.f32.mrb[0].mxu0
      %2540 = vmatprep.mubr.bf16.mxu0 0
      %2541 = vmatmul.mubr.bf16.gmra.mrb[0].mxu0 %v1516
      %v2542 = vpop.f32.mrb[0].mxu0
      %v2543 = vadd.f32 0.0, %v2542
      %v2544 = vpop.f32.mrb[0].mxu0
      %v2545 = vpop.f32.mrb[0].mxu0
      %v2546 = vadd.f32 0.0, %v2545
      %v2547 = vpop.f32.mrb[0].mxu0
      %2548 = vmatprep.mubr.bf16.mxu0 0
      %2549 = vmatmul.mubr.bf16.gmra.mrb[0].mxu0 %v1519
      %v2550 = vpop.f32.mrb[0].mxu0
      %v2551 = vadd.f32 0.0, %v2550
      %v2552 = vpop.f32.mrb[0].mxu0
      %v2553 = vpop.f32.mrb[0].mxu0
      %v2554 = vadd.f32 0.0, %v2553
      %v2555 = vpop.f32.mrb[0].mxu0
      %2556 = vmatprep.mubr.bf16.mxu0 0
      %2557 = vmatmul.mubr.bf16.gmra.mrb[0].mxu0 %v1522
      %v2558 = vpop.f32.mrb[0].mxu0
      %v2559 = vadd.f32 0.0, %v2558
      %v2560 = vpop.f32.mrb[0].mxu0
      %v2561 = vpop.f32.mrb[0].mxu0
      %v2562 = vadd.f32 0.0, %v2561
      %v2563 = vpop.f32.mrb[0].mxu0
      %2564 = vmatprep.mubr.bf16.mxu0 0
      %2565 = vmatmul.mubr.bf16.gmra.mrb[0].mxu0 %v1525
      %v2566 = vpop.f32.mrb[0].mxu0
      %v2567 = vadd.f32 0.0, %v2566
      %v2568 = vpop.f32.mrb[0].mxu0
      %v2569 = vpop.f32.mrb[0].mxu0
      %v2570 = vadd.f32 0.0, %v2569
      %v2571 = vpop.f32.mrb[0].mxu0
      %2572 = vmatprep.mubr.bf16.mxu0 0
      %2573 = vmatmul.mubr.bf16.gmra.mrb[0].mxu0 %v1528
      %v2574 = vpop.f32.mrb[0].mxu0
      %v2575 = vadd.f32 0.0, %v2574
      %v2576 = vpop.f32.mrb[0].mxu0
      %v2577 = vpop.f32.mrb[0].mxu0
      %v2578 = vadd.f32 0.0, %v2577
      %v2579 = vpop.f32.mrb[0].mxu0
      %2580 = vmatprep.mubr.bf16.mxu0 0
      %2581 = vmatmul.mubr.bf16.gmra.mrb[0].mxu0 %v1531
      %v2582 = vpop.f32.mrb[0].mxu0
      %v2583 = vadd.f32 0.0, %v2582
      %v2584 = vpop.f32.mrb[0].mxu0
      %v2585 = vpop.f32.mrb[0].mxu0
      %v2586 = vadd.f32 0.0, %v2585
      %v2587 = vpop.f32.mrb[0].mxu0
      %2588 = vmatprep.mubr.bf16.mxu0 0
      %2589 = vmatmul.mubr.bf16.gmra.mrb[0].mxu0 %v1534
      %v2590 = vpop.f32.mrb[0].mxu0
      %v2591 = vadd.f32 0.0, %v2590
      %v2592 = vpop.f32.mrb[0].mxu0
      %v2593 = vpop.f32.mrb[0].mxu0
      %v2594 = vadd.f32 0.0, %v2593
      %v2595 = vpop.f32.mrb[0].mxu0
      %2596 = vdwg.mxu0
      %v2597 = vmax.f32 %v1575, 0.0
      %v2598 = vmax.f32 %v1578, 0.0
      %v2599 = vmax.f32 %v1583, 0.0
      %v2600 = vmax.f32 %v1586, 0.0
      %v2601 = vmax.f32 %v1591, 0.0
      %v2602 = vmax.f32 %v1594, 0.0
      %v2603 = vmax.f32 %v1599, 0.0
      %v2604 = vmax.f32 %v1602, 0.0
      %v2605 = vmax.f32 %v1607, 0.0
      %v2606 = vmax.f32 %v1610, 0.0
      %v2607 = vmax.f32 %v1615, 0.0
      %v2608 = vmax.f32 %v1618, 0.0
      %v2609 = vmax.f32 %v1623, 0.0
      %v2610 = vmax.f32 %v1626, 0.0
      %v2611 = vmax.f32 %v1631, 0.0
      %v2612 = vmax.f32 %v1634, 0.0
      %v2613 = vmax.f32 %v1639, 0.0
      %v2614 = vmax.f32 %v1642, 0.0
      %v2615 = vmax.f32 %v1647, 0.0
      %v2616 = vmax.f32 %v1650, 0.0
      %v2617 = vmax.f32 %v1655, 0.0
      %v2618 = vmax.f32 %v1658, 0.0
      %v2619 = vmax.f32 %v1663, 0.0
      %v2620 = vmax.f32 %v1666, 0.0
      %v2621 = vmax.f32 %v1671, 0.0
      %v2622 = vmax.f32 %v1674, 0.0
      %v2623 = vmax.f32 %v1679, 0.0
      %v2624 = vmax.f32 %v1682, 0.0
      %v2625 = vmax.f32 %v1687, 0.0
      %v2626 = vmax.f32 %v1690, 0.0
      %v2627 = vmax.f32 %v1695, 0.0
      %v2628 = vmax.f32 %v1698, 0.0
      %v2629 = vmax.f32 %v1703, 0.0
      %v2630 = vmax.f32 %v1706, 0.0
      %v2631 = vmax.f32 %v1711, 0.0
      %v2632 = vmax.f32 %v1714, 0.0
      %v2633 = vmax.f32 %v1719, 0.0
      %v2634 = vmax.f32 %v1722, 0.0
      %v2635 = vmax.f32 %v1727, 0.0
      %v2636 = vmax.f32 %v1730, 0.0
      %v2637 = vmax.f32 %v1735, 0.0
      %v2638 = vmax.f32 %v1738, 0.0
      %v2639 = vmax.f32 %v1743, 0.0
      %v2640 = vmax.f32 %v1746, 0.0
      %v2641 = vmax.f32 %v1751, 0.0
      %v2642 = vmax.f32 %v1754, 0.0
      %v2643 = vmax.f32 %v1759, 0.0
      %v2644 = vmax.f32 %v1762, 0.0
      %v2645 = vmax.f32 %v1767, 0.0
      %v2646 = vmax.f32 %v1770, 0.0
      %v2647 = vmax.f32 %v1775, 0.0
      %v2648 = vmax.f32 %v1778, 0.0
      %v2649 = vmax.f32 %v1783, 0.0
      %v2650 = vmax.f32 %v1786, 0.0
      %v2651 = vmax.f32 %v1791, 0.0
      %v2652 = vmax.f32 %v1794, 0.0
      %v2653 = vmax.f32 %v1799, 0.0
      %v2654 = vmax.f32 %v1802, 0.0
      %v2655 = vmax.f32 %v1807, 0.0
      %v2656 = vmax.f32 %v1810, 0.0
      %v2657 = vmax.f32 %v1815, 0.0
      %v2658 = vmax.f32 %v1818, 0.0
      %v2659 = vmax.f32 %v1823, 0.0
      %v2660 = vmax.f32 %v1826, 0.0
      %v2661 = vmax.f32 %v1831, 0.0
      %v2662 = vmax.f32 %v1834, 0.0
      %v2663 = vmax.f32 %v1839, 0.0
      %v2664 = vmax.f32 %v1842, 0.0
      %v2665 = vmax.f32 %v1847, 0.0
      %v2666 = vmax.f32 %v1850, 0.0
      %v2667 = vmax.f32 %v1855, 0.0
      %v2668 = vmax.f32 %v1858, 0.0
      %v2669 = vmax.f32 %v1863, 0.0
      %v2670 = vmax.f32 %v1866, 0.0
      %v2671 = vmax.f32 %v1871, 0.0
      %v2672 = vmax.f32 %v1874, 0.0
      %v2673 = vmax.f32 %v1879, 0.0
      %v2674 = vmax.f32 %v1882, 0.0
      %v2675 = vmax.f32 %v1887, 0.0
      %v2676 = vmax.f32 %v1890, 0.0
      %v2677 = vmax.f32 %v1895, 0.0
      %v2678 = vmax.f32 %v1898, 0.0
      %v2679 = vmax.f32 %v1903, 0.0
      %v2680 = vmax.f32 %v1906, 0.0
      %v2681 = vmax.f32 %v1911, 0.0
      %v2682 = vmax.f32 %v1914, 0.0
      %v2683 = vmax.f32 %v1919, 0.0
      %v2684 = vmax.f32 %v1922, 0.0
      %v2685 = vmax.f32 %v1927, 0.0
      %v2686 = vmax.f32 %v1930, 0.0
      %v2687 = vmax.f32 %v1935, 0.0
      %v2688 = vmax.f32 %v1938, 0.0
      %v2689 = vmax.f32 %v1943, 0.0
      %v2690 = vmax.f32 %v1946, 0.0
      %v2691 = vmax.f32 %v1951, 0.0
      %v2692 = vmax.f32 %v1954, 0.0
      %v2693 = vmax.f32 %v1959, 0.0
      %v2694 = vmax.f32 %v1962, 0.0
      %v2695 = vmax.f32 %v1967, 0.0
      %v2696 = vmax.f32 %v1970, 0.0
      %v2697 = vmax.f32 %v1975, 0.0
      %v2698 = vmax.f32 %v1978, 0.0
      %v2699 = vmax.f32 %v1983, 0.0
      %v2700 = vmax.f32 %v1986, 0.0
      %v2701 = vmax.f32 %v1991, 0.0
      %v2702 = vmax.f32 %v1994, 0.0
      %v2703 = vmax.f32 %v1999, 0.0
      %v2704 = vmax.f32 %v2002, 0.0
      %v2705 = vmax.f32 %v2007, 0.0
      %v2706 = vmax.f32 %v2010, 0.0
      %v2707 = vmax.f32 %v2015, 0.0
      %v2708 = vmax.f32 %v2018, 0.0
      %v2709 = vmax.f32 %v2023, 0.0
      %v2710 = vmax.f32 %v2026, 0.0
      %v2711 = vmax.f32 %v2031, 0.0
      %v2712 = vmax.f32 %v2034, 0.0
      %v2713 = vmax.f32 %v2039, 0.0
      %v2714 = vmax.f32 %v2042, 0.0
      %v2715 = vmax.f32 %v2047, 0.0
      %v2716 = vmax.f32 %v2050, 0.0
      %v2717 = vmax.f32 %v2055, 0.0
      %v2718 = vmax.f32 %v2058, 0.0
      %v2719 = vmax.f32 %v2063, 0.0
      %v2720 = vmax.f32 %v2066, 0.0
      %v2721 = vmax.f32 %v2071, 0.0
      %v2722 = vmax.f32 %v2074, 0.0
      %v2723 = vmax.f32 %v2079, 0.0
      %v2724 = vmax.f32 %v2082, 0.0
      %v2725 = vmax.f32 %v2087, 0.0
      %v2726 = vmax.f32 %v2090, 0.0
      %v2727 = vmax.f32 %v2095, 0.0
      %v2728 = vmax.f32 %v2098, 0.0
      %v2729 = vmax.f32 %v2103, 0.0
      %v2730 = vmax.f32 %v2106, 0.0
      %v2731 = vmax.f32 %v2111, 0.0
      %v2732 = vmax.f32 %v2114, 0.0
      %v2733 = vmax.f32 %v2119, 0.0
      %v2734 = vmax.f32 %v2122, 0.0
      %v2735 = vmax.f32 %v2127, 0.0
      %v2736 = vmax.f32 %v2130, 0.0
      %v2737 = vmax.f32 %v2135, 0.0
      %v2738 = vmax.f32 %v2138, 0.0
      %v2739 = vmax.f32 %v2143, 0.0
      %v2740 = vmax.f32 %v2146, 0.0
      %v2741 = vmax.f32 %v2151, 0.0
      %v2742 = vmax.f32 %v2154, 0.0
      %v2743 = vmax.f32 %v2159, 0.0
      %v2744 = vmax.f32 %v2162, 0.0
      %v2745 = vmax.f32 %v2167, 0.0
      %v2746 = vmax.f32 %v2170, 0.0
      %v2747 = vmax.f32 %v2175, 0.0
      %v2748 = vmax.f32 %v2178, 0.0
      %v2749 = vmax.f32 %v2183, 0.0
      %v2750 = vmax.f32 %v2186, 0.0
      %v2751 = vmax.f32 %v2191, 0.0
      %v2752 = vmax.f32 %v2194, 0.0
      %v2753 = vmax.f32 %v2199, 0.0
      %v2754 = vmax.f32 %v2202, 0.0
      %v2755 = vmax.f32 %v2207, 0.0
      %v2756 = vmax.f32 %v2210, 0.0
      %v2757 = vmax.f32 %v2215, 0.0
      %v2758 = vmax.f32 %v2218, 0.0
      %v2759 = vmax.f32 %v2223, 0.0
      %v2760 = vmax.f32 %v2226, 0.0
      %v2761 = vmax.f32 %v2231, 0.0
      %v2762 = vmax.f32 %v2234, 0.0
      %v2763 = vmax.f32 %v2239, 0.0
      %v2764 = vmax.f32 %v2242, 0.0
      %v2765 = vmax.f32 %v2247, 0.0
      %v2766 = vmax.f32 %v2250, 0.0
      %v2767 = vmax.f32 %v2255, 0.0
      %v2768 = vmax.f32 %v2258, 0.0
      %v2769 = vmax.f32 %v2263, 0.0
      %v2770 = vmax.f32 %v2266, 0.0
      %v2771 = vmax.f32 %v2271, 0.0
      %v2772 = vmax.f32 %v2274, 0.0
      %v2773 = vmax.f32 %v2279, 0.0
      %v2774 = vmax.f32 %v2282, 0.0
      %v2775 = vmax.f32 %v2287, 0.0
      %v2776 = vmax.f32 %v2290, 0.0
      %v2777 = vmax.f32 %v2295, 0.0
      %v2778 = vmax.f32 %v2298, 0.0
      %v2779 = vmax.f32 %v2303, 0.0
      %v2780 = vmax.f32 %v2306, 0.0
      %v2781 = vmax.f32 %v2311, 0.0
      %v2782 = vmax.f32 %v2314, 0.0
      %v2783 = vmax.f32 %v2319, 0.0
      %v2784 = vmax.f32 %v2322, 0.0
      %v2785 = vmax.f32 %v2327, 0.0
      %v2786 = vmax.f32 %v2330, 0.0
      %v2787 = vmax.f32 %v2335, 0.0
      %v2788 = vmax.f32 %v2338, 0.0
      %v2789 = vmax.f32 %v2343, 0.0
      %v2790 = vmax.f32 %v2346, 0.0
      %v2791 = vmax.f32 %v2351, 0.0
      %v2792 = vmax.f32 %v2354, 0.0
      %v2793 = vmax.f32 %v2359, 0.0
      %v2794 = vmax.f32 %v2362, 0.0
      %v2795 = vmax.f32 %v2367, 0.0
      %v2796 = vmax.f32 %v2370, 0.0
      %v2797 = vmax.f32 %v2375, 0.0
      %v2798 = vmax.f32 %v2378, 0.0
      %v2799 = vmax.f32 %v2383, 0.0
      %v2800 = vmax.f32 %v2386, 0.0
      %v2801 = vmax.f32 %v2391, 0.0
      %v2802 = vmax.f32 %v2394, 0.0
      %v2803 = vmax.f32 %v2399, 0.0
      %v2804 = vmax.f32 %v2402, 0.0
      %v2805 = vmax.f32 %v2407, 0.0
      %v2806 = vmax.f32 %v2410, 0.0
      %v2807 = vmax.f32 %v2415, 0.0
      %v2808 = vmax.f32 %v2418, 0.0
      %v2809 = vmax.f32 %v2423, 0.0
      %v2810 = vmax.f32 %v2426, 0.0
      %v2811 = vmax.f32 %v2431, 0.0
      %v2812 = vmax.f32 %v2434, 0.0
      %v2813 = vmax.f32 %v2439, 0.0
      %v2814 = vmax.f32 %v2442, 0.0
      %v2815 = vmax.f32 %v2447, 0.0
      %v2816 = vmax.f32 %v2450, 0.0
      %v2817 = vmax.f32 %v2455, 0.0
      %v2818 = vmax.f32 %v2458, 0.0
      %v2819 = vmax.f32 %v2463, 0.0
      %v2820 = vmax.f32 %v2466, 0.0
      %v2821 = vmax.f32 %v2471, 0.0
      %v2822 = vmax.f32 %v2474, 0.0
      %v2823 = vmax.f32 %v2479, 0.0
      %v2824 = vmax.f32 %v2482, 0.0
      %v2825 = vmax.f32 %v2487, 0.0
      %v2826 = vmax.f32 %v2490, 0.0
      %v2827 = vmax.f32 %v2495, 0.0
      %v2828 = vmax.f32 %v2498, 0.0
      %v2829 = vmax.f32 %v2503, 0.0
      %v2830 = vmax.f32 %v2506, 0.0
      %v2831 = vmax.f32 %v2511, 0.0
      %v2832 = vmax.f32 %v2514, 0.0
      %v2833 = vmax.f32 %v2519, 0.0
      %v2834 = vmax.f32 %v2522, 0.0
      %v2835 = vmax.f32 %v2527, 0.0
      %v2836 = vmax.f32 %v2530, 0.0
      %v2837 = vmax.f32 %v2535, 0.0
      %v2838 = vmax.f32 %v2538, 0.0
      %v2839 = vmax.f32 %v2543, 0.0
      %v2840 = vmax.f32 %v2546, 0.0
      %v2841 = vmax.f32 %v2551, 0.0
      %v2842 = vmax.f32 %v2554, 0.0
      %v2843 = vmax.f32 %v2559, 0.0
      %v2844 = vmax.f32 %v2562, 0.0
      %v2845 = vmax.f32 %v2567, 0.0
      %v2846 = vmax.f32 %v2570, 0.0
      %v2847 = vmax.f32 %v2575, 0.0
      %v2848 = vmax.f32 %v2578, 0.0
      %v2849 = vmax.f32 %v2583, 0.0
      %v2850 = vmax.f32 %v2586, 0.0
      %v2851 = vmax.f32 %v2591, 0.0
      %v2852 = vmax.f32 %v2594, 0.0
      %v2853 = vpack.c.bf16 %v2598, %v2597
      %v2854 = vpack.c.bf16 %v2600, %v2599
      %v2855 = vpack.c.bf16 %v2602, %v2601
      %v2856 = vpack.c.bf16 %v2604, %v2603
      %v2857 = vpack.c.bf16 %v2606, %v2605
      %v2858 = vpack.c.bf16 %v2608, %v2607
      %v2859 = vpack.c.bf16 %v2610, %v2609
      %v2860 = vpack.c.bf16 %v2612, %v2611
      %v2861 = vpack.c.bf16 %v2614, %v2613
      %v2862 = vpack.c.bf16 %v2616, %v2615
      %v2863 = vpack.c.bf16 %v2618, %v2617
      %v2864 = vpack.c.bf16 %v2620, %v2619
      %v2865 = vpack.c.bf16 %v2622, %v2621
      %v2866 = vpack.c.bf16 %v2624, %v2623
      %v2867 = vpack.c.bf16 %v2626, %v2625
      %v2868 = vpack.c.bf16 %v2628, %v2627
      %v2869 = vpack.c.bf16 %v2630, %v2629
      %v2870 = vpack.c.bf16 %v2632, %v2631
      %v2871 = vpack.c.bf16 %v2634, %v2633
      %v2872 = vpack.c.bf16 %v2636, %v2635
      %v2873 = vpack.c.bf16 %v2638, %v2637
      %v2874 = vpack.c.bf16 %v2640, %v2639
      %v2875 = vpack.c.bf16 %v2642, %v2641
      %v2876 = vpack.c.bf16 %v2644, %v2643
      %v2877 = vpack.c.bf16 %v2646, %v2645
      %v2878 = vpack.c.bf16 %v2648, %v2647
      %v2879 = vpack.c.bf16 %v2650, %v2649
      %v2880 = vpack.c.bf16 %v2652, %v2651
      %v2881 = vpack.c.bf16 %v2654, %v2653
      %v2882 = vpack.c.bf16 %v2656, %v2655
      %v2883 = vpack.c.bf16 %v2658, %v2657
      %v2884 = vpack.c.bf16 %v2660, %v2659
      %v2885 = vpack.c.bf16 %v2662, %v2661
      %v2886 = vpack.c.bf16 %v2664, %v2663
      %v2887 = vpack.c.bf16 %v2666, %v2665
      %v2888 = vpack.c.bf16 %v2668, %v2667
      %v2889 = vpack.c.bf16 %v2670, %v2669
      %v2890 = vpack.c.bf16 %v2672, %v2671
      %v2891 = vpack.c.bf16 %v2674, %v2673
      %v2892 = vpack.c.bf16 %v2676, %v2675
      %v2893 = vpack.c.bf16 %v2678, %v2677
      %v2894 = vpack.c.bf16 %v2680, %v2679
      %v2895 = vpack.c.bf16 %v2682, %v2681
      %v2896 = vpack.c.bf16 %v2684, %v2683
      %v2897 = vpack.c.bf16 %v2686, %v2685
      %v2898 = vpack.c.bf16 %v2688, %v2687
      %v2899 = vpack.c.bf16 %v2690, %v2689
      %v2900 = vpack.c.bf16 %v2692, %v2691
      %v2901 = vpack.c.bf16 %v2694, %v2693
      %v2902 = vpack.c.bf16 %v2696, %v2695
      %v2903 = vpack.c.bf16 %v2698, %v2697
      %v2904 = vpack.c.bf16 %v2700, %v2699
      %v2905 = vpack.c.bf16 %v2702, %v2701
      %v2906 = vpack.c.bf16 %v2704, %v2703
      %v2907 = vpack.c.bf16 %v2706, %v2705
      %v2908 = vpack.c.bf16 %v2708, %v2707
      %v2909 = vpack.c.bf16 %v2710, %v2709
      %v2910 = vpack.c.bf16 %v2712, %v2711
      %v2911 = vpack.c.bf16 %v2714, %v2713
      %v2912 = vpack.c.bf16 %v2716, %v2715
      %v2913 = vpack.c.bf16 %v2718, %v2717
      %v2914 = vpack.c.bf16 %v2720, %v2719
      %v2915 = vpack.c.bf16 %v2722, %v2721
      %v2916 = vpack.c.bf16 %v2724, %v2723
      %v2917 = vpack.c.bf16 %v2726, %v2725
      %v2918 = vpack.c.bf16 %v2728, %v2727
      %v2919 = vpack.c.bf16 %v2730, %v2729
      %v2920 = vpack.c.bf16 %v2732, %v2731
      %v2921 = vpack.c.bf16 %v2734, %v2733
      %v2922 = vpack.c.bf16 %v2736, %v2735
      %v2923 = vpack.c.bf16 %v2738, %v2737
      %v2924 = vpack.c.bf16 %v2740, %v2739
      %v2925 = vpack.c.bf16 %v2742, %v2741
      %v2926 = vpack.c.bf16 %v2744, %v2743
      %v2927 = vpack.c.bf16 %v2746, %v2745
      %v2928 = vpack.c.bf16 %v2748, %v2747
      %v2929 = vpack.c.bf16 %v2750, %v2749
      %v2930 = vpack.c.bf16 %v2752, %v2751
      %v2931 = vpack.c.bf16 %v2754, %v2753
      %v2932 = vpack.c.bf16 %v2756, %v2755
      %v2933 = vpack.c.bf16 %v2758, %v2757
      %v2934 = vpack.c.bf16 %v2760, %v2759
      %v2935 = vpack.c.bf16 %v2762, %v2761
      %v2936 = vpack.c.bf16 %v2764, %v2763
      %v2937 = vpack.c.bf16 %v2766, %v2765
      %v2938 = vpack.c.bf16 %v2768, %v2767
      %v2939 = vpack.c.bf16 %v2770, %v2769
      %v2940 = vpack.c.bf16 %v2772, %v2771
      %v2941 = vpack.c.bf16 %v2774, %v2773
      %v2942 = vpack.c.bf16 %v2776, %v2775
      %v2943 = vpack.c.bf16 %v2778, %v2777
      %v2944 = vpack.c.bf16 %v2780, %v2779
      %v2945 = vpack.c.bf16 %v2782, %v2781
      %v2946 = vpack.c.bf16 %v2784, %v2783
      %v2947 = vpack.c.bf16 %v2786, %v2785
      %v2948 = vpack.c.bf16 %v2788, %v2787
      %v2949 = vpack.c.bf16 %v2790, %v2789
      %v2950 = vpack.c.bf16 %v2792, %v2791
      %v2951 = vpack.c.bf16 %v2794, %v2793
      %v2952 = vpack.c.bf16 %v2796, %v2795
      %v2953 = vpack.c.bf16 %v2798, %v2797
      %v2954 = vpack.c.bf16 %v2800, %v2799
      %v2955 = vpack.c.bf16 %v2802, %v2801
      %v2956 = vpack.c.bf16 %v2804, %v2803
      %v2957 = vpack.c.bf16 %v2806, %v2805
      %v2958 = vpack.c.bf16 %v2808, %v2807
      %v2959 = vpack.c.bf16 %v2810, %v2809
      %v2960 = vpack.c.bf16 %v2812, %v2811
      %v2961 = vpack.c.bf16 %v2814, %v2813
      %v2962 = vpack.c.bf16 %v2816, %v2815
      %v2963 = vpack.c.bf16 %v2818, %v2817
      %v2964 = vpack.c.bf16 %v2820, %v2819
      %v2965 = vpack.c.bf16 %v2822, %v2821
      %v2966 = vpack.c.bf16 %v2824, %v2823
      %v2967 = vpack.c.bf16 %v2826, %v2825
      %v2968 = vpack.c.bf16 %v2828, %v2827
      %v2969 = vpack.c.bf16 %v2830, %v2829
      %v2970 = vpack.c.bf16 %v2832, %v2831
      %v2971 = vpack.c.bf16 %v2834, %v2833
      %v2972 = vpack.c.bf16 %v2836, %v2835
      %v2973 = vpack.c.bf16 %v2838, %v2837
      %v2974 = vpack.c.bf16 %v2840, %v2839
      %v2975 = vpack.c.bf16 %v2842, %v2841
      %v2976 = vpack.c.bf16 %v2844, %v2843
      %v2977 = vpack.c.bf16 %v2846, %v2845
      %v2978 = vpack.c.bf16 %v2848, %v2847
      %v2979 = vpack.c.bf16 %v2850, %v2849
      %v2980 = vpack.c.bf16 %v2852, %v2851
      %v2981 = vld [vmem:[%s3] sm:$0xf]
      %v2982 = vld [vmem:[%s3 + $0x4] sm:$0xf]
      %v2983 = vld [vmem:[%s3 + $0x8] sm:$0xf]
      %v2984 = vld [vmem:[%s3 + $0xc] sm:$0xf]
      %v2985 = vld [vmem:[%s4] sm:$0x1]
      %v2987 = vlaneseq
      %v2988 = vshrl.u32 %v2987, 7
      %v2989 = vsub.s32 0, %v2988
      %v2990 = vrot.slane %v2985, %v2989
      %v2996 = vunpack.c.l.b16 %v2981
      %v2997 = vunpack.c.l.b16 %v2982
      %v2998 = vunpack.c.l.b16 %v2983
      %v2999 = vunpack.c.l.b16 %v2984
      %v3000 = vpack.c.b16 %v2997, %v2996
      %v3001 = vpack.c.b16 %v2999, %v2998
      %vm3004 = vcmask 261120
      %v3006 = vsel %vm3004, %v2853, 0
      %v3009 = vsel %vm3004, %v2854, 0
      %v3012 = vsel %vm3004, %v2855, 0
      %v3015 = vsel %vm3004, %v2856, 0
      %v3018 = vsel %vm3004, %v2857, 0
      %v3021 = vsel %vm3004, %v2858, 0
      %v3024 = vsel %vm3004, %v2859, 0
      %v3027 = vsel %vm3004, %v2860, 0
      %v3030 = vsel %vm3004, %v2861, 0
      %v3033 = vsel %vm3004, %v2862, 0
      %v3036 = vsel %vm3004, %v2863, 0
      %v3039 = vsel %vm3004, %v2864, 0
      %v3042 = vsel %vm3004, %v2865, 0
      %v3045 = vsel %vm3004, %v2866, 0
      %v3048 = vsel %vm3004, %v2867, 0
      %v3051 = vsel %vm3004, %v2868, 0
      %v3054 = vsel %vm3004, %v2869, 0
      %v3057 = vsel %vm3004, %v2870, 0
      %v3060 = vsel %vm3004, %v2871, 0
      %v3063 = vsel %vm3004, %v2872, 0
      %v3066 = vsel %vm3004, %v2873, 0
      %v3069 = vsel %vm3004, %v2874, 0
      %v3072 = vsel %vm3004, %v2875, 0
      %v3075 = vsel %vm3004, %v2876, 0
      %v3078 = vsel %vm3004, %v2877, 0
      %v3081 = vsel %vm3004, %v2878, 0
      %v3084 = vsel %vm3004, %v2879, 0
      %v3087 = vsel %vm3004, %v2880, 0
      %v3090 = vsel %vm3004, %v2881, 0
      %v3093 = vsel %vm3004, %v2882, 0
      %v3096 = vsel %vm3004, %v2883, 0
      %v3099 = vsel %vm3004, %v2884, 0
      %v3102 = vsel %vm3004, %v2885, 0
      %v3105 = vsel %vm3004, %v2886, 0
      %v3108 = vsel %vm3004, %v2887, 0
      %v3111 = vsel %vm3004, %v2888, 0
      %v3114 = vsel %vm3004, %v2889, 0
      %v3117 = vsel %vm3004, %v2890, 0
      %v3120 = vsel %vm3004, %v2891, 0
      %v3123 = vsel %vm3004, %v2892, 0
      %v3126 = vsel %vm3004, %v2893, 0
      %v3129 = vsel %vm3004, %v2894, 0
      %v3132 = vsel %vm3004, %v2895, 0
      %v3135 = vsel %vm3004, %v2896, 0
      %v3138 = vsel %vm3004, %v2897, 0
      %v3141 = vsel %vm3004, %v2898, 0
      %v3144 = vsel %vm3004, %v2899, 0
      %v3147 = vsel %vm3004, %v2900, 0
      %v3150 = vsel %vm3004, %v2901, 0
      %v3153 = vsel %vm3004, %v2902, 0
      %v3156 = vsel %vm3004, %v2903, 0
      %v3159 = vsel %vm3004, %v2904, 0
      %v3162 = vsel %vm3004, %v2905, 0
      %v3165 = vsel %vm3004, %v2906, 0
      %v3168 = vsel %vm3004, %v2907, 0
      %v3171 = vsel %vm3004, %v2908, 0
      %v3174 = vsel %vm3004, %v2909, 0
      %v3177 = vsel %vm3004, %v2910, 0
      %v3180 = vsel %vm3004, %v2911, 0
      %v3183 = vsel %vm3004, %v2912, 0
      %v3186 = vsel %vm3004, %v2913, 0
      %v3189 = vsel %vm3004, %v2914, 0
      %v3192 = vsel %vm3004, %v2915, 0
      %v3195 = vsel %vm3004, %v2916, 0
      %v3198 = vsel %vm3004, %v2917, 0
      %v3201 = vsel %vm3004, %v2918, 0
      %v3204 = vsel %vm3004, %v2919, 0
      %v3207 = vsel %vm3004, %v2920, 0
      %v3210 = vsel %vm3004, %v2921, 0
      %v3213 = vsel %vm3004, %v2922, 0
      %v3216 = vsel %vm3004, %v2923, 0
      %v3219 = vsel %vm3004, %v2924, 0
      %v3222 = vsel %vm3004, %v2925, 0
      %v3225 = vsel %vm3004, %v2926, 0
      %v3228 = vsel %vm3004, %v2927, 0
      %v3231 = vsel %vm3004, %v2928, 0
      %v3234 = vsel %vm3004, %v2929, 0
      %v3237 = vsel %vm3004, %v2930, 0
      %v3240 = vsel %vm3004, %v2931, 0
      %v3243 = vsel %vm3004, %v2932, 0
      %v3246 = vsel %vm3004, %v2933, 0
      %v3249 = vsel %vm3004, %v2934, 0
      %v3252 = vsel %vm3004, %v2935, 0
      %v3255 = vsel %vm3004, %v2936, 0
      %v3258 = vsel %vm3004, %v2937, 0
      %v3261 = vsel %vm3004, %v2938, 0
      %v3264 = vsel %vm3004, %v2939, 0
      %v3267 = vsel %vm3004, %v2940, 0
      %v3270 = vsel %vm3004, %v2941, 0
      %v3273 = vsel %vm3004, %v2942, 0
      %v3276 = vsel %vm3004, %v2943, 0
      %v3279 = vsel %vm3004, %v2944, 0
      %v3282 = vsel %vm3004, %v2945, 0
      %v3285 = vsel %vm3004, %v2946, 0
      %v3288 = vsel %vm3004, %v2947, 0
      %v3291 = vsel %vm3004, %v2948, 0
      %v3294 = vsel %vm3004, %v2949, 0
      %v3297 = vsel %vm3004, %v2950, 0
      %v3300 = vsel %vm3004, %v2951, 0
      %v3303 = vsel %vm3004, %v2952, 0
      %v3306 = vsel %vm3004, %v2953, 0
      %v3309 = vsel %vm3004, %v2954, 0
      %v3312 = vsel %vm3004, %v2955, 0
      %v3315 = vsel %vm3004, %v2956, 0
      %v3318 = vsel %vm3004, %v2957, 0
      %v3321 = vsel %vm3004, %v2958, 0
      %v3324 = vsel %vm3004, %v2959, 0
      %v3327 = vsel %vm3004, %v2960, 0
      %v3330 = vsel %vm3004, %v2961, 0
      %v3333 = vsel %vm3004, %v2962, 0
      %v3336 = vsel %vm3004, %v2963, 0
      %v3339 = vsel %vm3004, %v2964, 0
      %v3342 = vsel %vm3004, %v2965, 0
      %v3345 = vsel %vm3004, %v2966, 0
      %v3348 = vsel %vm3004, %v2967, 0
      %v3351 = vsel %vm3004, %v2968, 0
      %v3354 = vsel %vm3004, %v2969, 0
      %v3357 = vsel %vm3004, %v2970, 0
      %v3360 = vsel %vm3004, %v2971, 0
      %v3363 = vsel %vm3004, %v2972, 0
      %v3366 = vsel %vm3004, %v2973, 0
      %v3369 = vsel %vm3004, %v2974, 0
      %v3372 = vsel %vm3004, %v2975, 0
      %v3375 = vsel %vm3004, %v2976, 0
      %v3378 = vsel %vm3004, %v2977, 0
      %v3381 = vsel %vm3004, %v2978, 0
      %v3384 = vsel %vm3004, %v2979, 0
      %v3387 = vsel %vm3004, %v2980, 0
      %3389 = vmatprep.subr.bf16.mxu0 0
      %3390 = vmatpush1.bf16.msra.mxu0 %v3000
      %3391 = vmatprep.subr.bf16.mxu0 0
      %3392 = vmatpush1.bf16.msra.mxu0 %v3001
      %3393 = vmatprep.subr.bf16.mxu0 0
      %3394 = vmatpush1.bf16.msra.mxu0 0
      %3395 = vmatprep.subr.bf16.mxu0 0
      %3396 = vmatpush1.bf16.msra.mxu0 0
      %3397 = vmatprep.subr.bf16.mxu0 0
      %3398 = vmatpush1.bf16.msra.mxu0 0
      %3399 = vmatprep.subr.bf16.mxu0 0
      %3400 = vmatpush1.bf16.msra.mxu0 0
      %3401 = vmatprep.subr.bf16.mxu0 0
      %3402 = vmatpush1.bf16.msra.mxu0 0
      %3403 = vmatprep.subr.bf16.mxu0 0
      %3404 = vmatpush1.bf16.msra.mxu0 0
      %3405 = vmatprep.subr.bf16.mxu0 0
      %3406 = vmatpush1.bf16.msra.mxu0 0
      %3407 = vmatprep.subr.bf16.mxu0 0
      %3408 = vmatpush1.bf16.msra.mxu0 0
      %3409 = vmatprep.subr.bf16.mxu0 0
      %3410 = vmatpush1.bf16.msra.mxu0 0
      %3411 = vmatprep.subr.bf16.mxu0 0
      %3412 = vmatpush1.bf16.msra.mxu0 0
      %3413 = vmatprep.subr.bf16.mxu0 0
      %3414 = vmatpush1.bf16.msra.mxu0 0
      %3415 = vmatprep.subr.bf16.mxu0 0
      %3416 = vmatpush1.bf16.msra.mxu0 0
      %3417 = vmatprep.subr.bf16.mxu0 0
      %3418 = vmatpush1.bf16.msra.mxu0 0
      %3419 = vmatprep.subr.bf16.mxu0 0
      %3420 = vmatpush1.bf16.msra.mxu0 0
      %3421 = vmatprep.mubr.bf16.mxu0 0
      %3422 = vmatmul.mubr.bf16.gmra.mrb[0].mxu0 %v3006
      %v3423 = vpop.f32.mrb[0].mxu0
      %v3424 = vadd.f32 %v2990, %v3423
      %v3425 = vpop.f32.mrb[0].mxu0
      %v3426 = vpop.f32.mrb[0].mxu0
      %v3427 = vadd.f32 %v2990, %v3426
      %v3428 = vpop.f32.mrb[0].mxu0
      %3429 = vmatprep.mubr.bf16.mxu0 0
      %3430 = vmatmul.mubr.bf16.gmra.mrb[0].mxu0 %v3009
      %v3431 = vpop.f32.mrb[0].mxu0
      %v3432 = vadd.f32 %v2990, %v3431
      %v3433 = vpop.f32.mrb[0].mxu0
      %v3434 = vpop.f32.mrb[0].mxu0
      %v3435 = vadd.f32 %v2990, %v3434
      %v3436 = vpop.f32.mrb[0].mxu0
      %3437 = vmatprep.mubr.bf16.mxu0 0
      %3438 = vmatmul.mubr.bf16.gmra.mrb[0].mxu0 %v3012
      %v3439 = vpop.f32.mrb[0].mxu0
      %v3440 = vadd.f32 %v2990, %v3439
      %v3441 = vpop.f32.mrb[0].mxu0
      %v3442 = vpop.f32.mrb[0].mxu0
      %v3443 = vadd.f32 %v2990, %v3442
      %v3444 = vpop.f32.mrb[0].mxu0
      %3445 = vmatprep.mubr.bf16.mxu0 0
      %3446 = vmatmul.mubr.bf16.gmra.mrb[0].mxu0 %v3015
      %v3447 = vpop.f32.mrb[0].mxu0
      %v3448 = vadd.f32 %v2990, %v3447
      %v3449 = vpop.f32.mrb[0].mxu0
      %v3450 = vpop.f32.mrb[0].mxu0
      %v3451 = vadd.f32 %v2990, %v3450
      %v3452 = vpop.f32.mrb[0].mxu0
      %3453 = vmatprep.mubr.bf16.mxu0 0
      %3454 = vmatmul.mubr.bf16.gmra.mrb[0].mxu0 %v3018
      %v3455 = vpop.f32.mrb[0].mxu0
      %v3456 = vadd.f32 %v2990, %v3455
      %v3457 = vpop.f32.mrb[0].mxu0
      %v3458 = vpop.f32.mrb[0].mxu0
      %v3459 = vadd.f32 %v2990, %v3458
      %v3460 = vpop.f32.mrb[0].mxu0
      %3461 = vmatprep.mubr.bf16.mxu0 0
      %3462 = vmatmul.mubr.bf16.gmra.mrb[0].mxu0 %v3021
      %v3463 = vpop.f32.mrb[0].mxu0
      %v3464 = vadd.f32 %v2990, %v3463
      %v3465 = vpop.f32.mrb[0].mxu0
      %v3466 = vpop.f32.mrb[0].mxu0
      %v3467 = vadd.f32 %v2990, %v3466
      %v3468 = vpop.f32.mrb[0].mxu0
      %3469 = vmatprep.mubr.bf16.mxu0 0
      %3470 = vmatmul.mubr.bf16.gmra.mrb[0].mxu0 %v3024
      %v3471 = vpop.f32.mrb[0].mxu0
      %v3472 = vadd.f32 %v2990, %v3471
      %v3473 = vpop.f32.mrb[0].mxu0
      %v3474 = vpop.f32.mrb[0].mxu0
      %v3475 = vadd.f32 %v2990, %v3474
      %v3476 = vpop.f32.mrb[0].mxu0
      %3477 = vmatprep.mubr.bf16.mxu0 0
      %3478 = vmatmul.mubr.bf16.gmra.mrb[0].mxu0 %v3027
      %v3479 = vpop.f32.mrb[0].mxu0
      %v3480 = vadd.f32 %v2990, %v3479
      %v3481 = vpop.f32.mrb[0].mxu0
      %v3482 = vpop.f32.mrb[0].mxu0
      %v3483 = vadd.f32 %v2990, %v3482
      %v3484 = vpop.f32.mrb[0].mxu0
      %3485 = vmatprep.mubr.bf16.mxu0 0
      %3486 = vmatmul.mubr.bf16.gmra.mrb[0].mxu0 %v3030
      %v3487 = vpop.f32.mrb[0].mxu0
      %v3488 = vadd.f32 %v2990, %v3487
      %v3489 = vpop.f32.mrb[0].mxu0
      %v3490 = vpop.f32.mrb[0].mxu0
      %v3491 = vadd.f32 %v2990, %v3490
      %v3492 = vpop.f32.mrb[0].mxu0
      %3493 = vmatprep.mubr.bf16.mxu0 0
      %3494 = vmatmul.mubr.bf16.gmra.mrb[0].mxu0 %v3033
      %v3495 = vpop.f32.mrb[0].mxu0
      %v3496 = vadd.f32 %v2990, %v3495
      %v3497 = vpop.f32.mrb[0].mxu0
      %v3498 = vpop.f32.mrb[0].mxu0
      %v3499 = vadd.f32 %v2990, %v3498
      %v3500 = vpop.f32.mrb[0].mxu0
      %3501 = vmatprep.mubr.bf16.mxu0 0
      %3502 = vmatmul.mubr.bf16.gmra.mrb[0].mxu0 %v3036
      %v3503 = vpop.f32.mrb[0].mxu0
      %v3504 = vadd.f32 %v2990, %v3503
      %v3505 = vpop.f32.mrb[0].mxu0
      %v3506 = vpop.f32.mrb[0].mxu0
      %v3507 = vadd.f32 %v2990, %v3506
      %v3508 = vpop.f32.mrb[0].mxu0
      %3509 = vmatprep.mubr.bf16.mxu0 0
      %3510 = vmatmul.mubr.bf16.gmra.mrb[0].mxu0 %v3039
      %v3511 = vpop.f32.mrb[0].mxu0
      %v3512 = vadd.f32 %v2990, %v3511
      %v3513 = vpop.f32.mrb[0].mxu0
      %v3514 = vpop.f32.mrb[0].mxu0
      %v3515 = vadd.f32 %v2990, %v3514
      %v3516 = vpop.f32.mrb[0].mxu0
      %3517 = vmatprep.mubr.bf16.mxu0 0
      %3518 = vmatmul.mubr.bf16.gmra.mrb[0].mxu0 %v3042
      %v3519 = vpop.f32.mrb[0].mxu0
      %v3520 = vadd.f32 %v2990, %v3519
      %v3521 = vpop.f32.mrb[0].mxu0
      %v3522 = vpop.f32.mrb[0].mxu0
      %v3523 = vadd.f32 %v2990, %v3522
      %v3524 = vpop.f32.mrb[0].mxu0
      %3525 = vmatprep.mubr.bf16.mxu0 0
      %3526 = vmatmul.mubr.bf16.gmra.mrb[0].mxu0 %v3045
      %v3527 = vpop.f32.mrb[0].mxu0
      %v3528 = vadd.f32 %v2990, %v3527
      %v3529 = vpop.f32.mrb[0].mxu0
      %v3530 = vpop.f32.mrb[0].mxu0
      %v3531 = vadd.f32 %v2990, %v3530
      %v3532 = vpop.f32.mrb[0].mxu0
      %3533 = vmatprep.mubr.bf16.mxu0 0
      %3534 = vmatmul.mubr.bf16.gmra.mrb[0].mxu0 %v3048
      %v3535 = vpop.f32.mrb[0].mxu0
      %v3536 = vadd.f32 %v2990, %v3535
      %v3537 = vpop.f32.mrb[0].mxu0
      %v3538 = vpop.f32.mrb[0].mxu0
      %v3539 = vadd.f32 %v2990, %v3538
      %v3540 = vpop.f32.mrb[0].mxu0
      %3541 = vmatprep.mubr.bf16.mxu0 0
      %3542 = vmatmul.mubr.bf16.gmra.mrb[0].mxu0 %v3051
      %v3543 = vpop.f32.mrb[0].mxu0
      %v3544 = vadd.f32 %v2990, %v3543
      %v3545 = vpop.f32.mrb[0].mxu0
      %v3546 = vpop.f32.mrb[0].mxu0
      %v3547 = vadd.f32 %v2990, %v3546
      %v3548 = vpop.f32.mrb[0].mxu0
      %3549 = vmatprep.mubr.bf16.mxu0 0
      %3550 = vmatmul.mubr.bf16.gmra.mrb[0].mxu0 %v3054
      %v3551 = vpop.f32.mrb[0].mxu0
      %v3552 = vadd.f32 %v2990, %v3551
      %v3553 = vpop.f32.mrb[0].mxu0
      %v3554 = vpop.f32.mrb[0].mxu0
      %v3555 = vadd.f32 %v2990, %v3554
      %v3556 = vpop.f32.mrb[0].mxu0
      %3557 = vmatprep.mubr.bf16.mxu0 0
      %3558 = vmatmul.mubr.bf16.gmra.mrb[0].mxu0 %v3057
      %v3559 = vpop.f32.mrb[0].mxu0
      %v3560 = vadd.f32 %v2990, %v3559
      %v3561 = vpop.f32.mrb[0].mxu0
      %v3562 = vpop.f32.mrb[0].mxu0
      %v3563 = vadd.f32 %v2990, %v3562
      %v3564 = vpop.f32.mrb[0].mxu0
      %3565 = vmatprep.mubr.bf16.mxu0 0
      %3566 = vmatmul.mubr.bf16.gmra.mrb[0].mxu0 %v3060
      %v3567 = vpop.f32.mrb[0].mxu0
      %v3568 = vadd.f32 %v2990, %v3567
      %v3569 = vpop.f32.mrb[0].mxu0
      %v3570 = vpop.f32.mrb[0].mxu0
      %v3571 = vadd.f32 %v2990, %v3570
      %v3572 = vpop.f32.mrb[0].mxu0
      %3573 = vmatprep.mubr.bf16.mxu0 0
      %3574 = vmatmul.mubr.bf16.gmra.mrb[0].mxu0 %v3063
      %v3575 = vpop.f32.mrb[0].mxu0
      %v3576 = vadd.f32 %v2990, %v3575
      %v3577 = vpop.f32.mrb[0].mxu0
      %v3578 = vpop.f32.mrb[0].mxu0
      %v3579 = vadd.f32 %v2990, %v3578
      %v3580 = vpop.f32.mrb[0].mxu0
      %3581 = vmatprep.mubr.bf16.mxu0 0
      %3582 = vmatmul.mubr.bf16.gmra.mrb[0].mxu0 %v3066
      %v3583 = vpop.f32.mrb[0].mxu0
      %v3584 = vadd.f32 %v2990, %v3583
      %v3585 = vpop.f32.mrb[0].mxu0
      %v3586 = vpop.f32.mrb[0].mxu0
      %v3587 = vadd.f32 %v2990, %v3586
      %v3588 = vpop.f32.mrb[0].mxu0
      %3589 = vmatprep.mubr.bf16.mxu0 0
      %3590 = vmatmul.mubr.bf16.gmra.mrb[0].mxu0 %v3069
      %v3591 = vpop.f32.mrb[0].mxu0
      %v3592 = vadd.f32 %v2990, %v3591
      %v3593 = vpop.f32.mrb[0].mxu0
      %v3594 = vpop.f32.mrb[0].mxu0
      %v3595 = vadd.f32 %v2990, %v3594
      %v3596 = vpop.f32.mrb[0].mxu0
      %3597 = vmatprep.mubr.bf16.mxu0 0
      %3598 = vmatmul.mubr.bf16.gmra.mrb[0].mxu0 %v3072
      %v3599 = vpop.f32.mrb[0].mxu0
      %v3600 = vadd.f32 %v2990, %v3599
      %v3601 = vpop.f32.mrb[0].mxu0
      %v3602 = vpop.f32.mrb[0].mxu0
      %v3603 = vadd.f32 %v2990, %v3602
      %v3604 = vpop.f32.mrb[0].mxu0
      %3605 = vmatprep.mubr.bf16.mxu0 0
      %3606 = vmatmul.mubr.bf16.gmra.mrb[0].mxu0 %v3075
      %v3607 = vpop.f32.mrb[0].mxu0
      %v3608 = vadd.f32 %v2990, %v3607
      %v3609 = vpop.f32.mrb[0].mxu0
      %v3610 = vpop.f32.mrb[0].mxu0
      %v3611 = vadd.f32 %v2990, %v3610
      %v3612 = vpop.f32.mrb[0].mxu0
      %3613 = vmatprep.mubr.bf16.mxu0 0
      %3614 = vmatmul.mubr.bf16.gmra.mrb[0].mxu0 %v3078
      %v3615 = vpop.f32.mrb[0].mxu0
      %v3616 = vadd.f32 %v2990, %v3615
      %v3617 = vpop.f32.mrb[0].mxu0
      %v3618 = vpop.f32.mrb[0].mxu0
      %v3619 = vadd.f32 %v2990, %v3618
      %v3620 = vpop.f32.mrb[0].mxu0
      %3621 = vmatprep.mubr.bf16.mxu0 0
      %3622 = vmatmul.mubr.bf16.gmra.mrb[0].mxu0 %v3081
      %v3623 = vpop.f32.mrb[0].mxu0
      %v3624 = vadd.f32 %v2990, %v3623
      %v3625 = vpop.f32.mrb[0].mxu0
      %v3626 = vpop.f32.mrb[0].mxu0
      %v3627 = vadd.f32 %v2990, %v3626
      %v3628 = vpop.f32.mrb[0].mxu0
      %3629 = vmatprep.mubr.bf16.mxu0 0
      %3630 = vmatmul.mubr.bf16.gmra.mrb[0].mxu0 %v3084
      %v3631 = vpop.f32.mrb[0].mxu0
      %v3632 = vadd.f32 %v2990, %v3631
      %v3633 = vpop.f32.mrb[0].mxu0
      %v3634 = vpop.f32.mrb[0].mxu0
      %v3635 = vadd.f32 %v2990, %v3634
      %v3636 = vpop.f32.mrb[0].mxu0
      %3637 = vmatprep.mubr.bf16.mxu0 0
      %3638 = vmatmul.mubr.bf16.gmra.mrb[0].mxu0 %v3087
      %v3639 = vpop.f32.mrb[0].mxu0
      %v3640 = vadd.f32 %v2990, %v3639
      %v3641 = vpop.f32.mrb[0].mxu0
      %v3642 = vpop.f32.mrb[0].mxu0
      %v3643 = vadd.f32 %v2990, %v3642
      %v3644 = vpop.f32.mrb[0].mxu0
      %3645 = vmatprep.mubr.bf16.mxu0 0
      %3646 = vmatmul.mubr.bf16.gmra.mrb[0].mxu0 %v3090
      %v3647 = vpop.f32.mrb[0].mxu0
      %v3648 = vadd.f32 %v2990, %v3647
      %v3649 = vpop.f32.mrb[0].mxu0
      %v3650 = vpop.f32.mrb[0].mxu0
      %v3651 = vadd.f32 %v2990, %v3650
      %v3652 = vpop.f32.mrb[0].mxu0
      %3653 = vmatprep.mubr.bf16.mxu0 0
      %3654 = vmatmul.mubr.bf16.gmra.mrb[0].mxu0 %v3093
      %v3655 = vpop.f32.mrb[0].mxu0
      %v3656 = vadd.f32 %v2990, %v3655
      %v3657 = vpop.f32.mrb[0].mxu0
      %v3658 = vpop.f32.mrb[0].mxu0
      %v3659 = vadd.f32 %v2990, %v3658
      %v3660 = vpop.f32.mrb[0].mxu0
      %3661 = vmatprep.mubr.bf16.mxu0 0
      %3662 = vmatmul.mubr.bf16.gmra.mrb[0].mxu0 %v3096
      %v3663 = vpop.f32.mrb[0].mxu0
      %v3664 = vadd.f32 %v2990, %v3663
      %v3665 = vpop.f32.mrb[0].mxu0
      %v3666 = vpop.f32.mrb[0].mxu0
      %v3667 = vadd.f32 %v2990, %v3666
      %v3668 = vpop.f32.mrb[0].mxu0
      %3669 = vmatprep.mubr.bf16.mxu0 0
      %3670 = vmatmul.mubr.bf16.gmra.mrb[0].mxu0 %v3099
      %v3671 = vpop.f32.mrb[0].mxu0
      %v3672 = vadd.f32 %v2990, %v3671
      %v3673 = vpop.f32.mrb[0].mxu0
      %v3674 = vpop.f32.mrb[0].mxu0
      %v3675 = vadd.f32 %v2990, %v3674
      %v3676 = vpop.f32.mrb[0].mxu0
      %3677 = vmatprep.mubr.bf16.mxu0 0
      %3678 = vmatmul.mubr.bf16.gmra.mrb[0].mxu0 %v3102
      %v3679 = vpop.f32.mrb[0].mxu0
      %v3680 = vadd.f32 %v2990, %v3679
      %v3681 = vpop.f32.mrb[0].mxu0
      %v3682 = vpop.f32.mrb[0].mxu0
      %v3683 = vadd.f32 %v2990, %v3682
      %v3684 = vpop.f32.mrb[0].mxu0
      %3685 = vmatprep.mubr.bf16.mxu0 0
      %3686 = vmatmul.mubr.bf16.gmra.mrb[0].mxu0 %v3105
      %v3687 = vpop.f32.mrb[0].mxu0
      %v3688 = vadd.f32 %v2990, %v3687
      %v3689 = vpop.f32.mrb[0].mxu0
      %v3690 = vpop.f32.mrb[0].mxu0
      %v3691 = vadd.f32 %v2990, %v3690
      %v3692 = vpop.f32.mrb[0].mxu0
      %3693 = vmatprep.mubr.bf16.mxu0 0
      %3694 = vmatmul.mubr.bf16.gmra.mrb[0].mxu0 %v3108
      %v3695 = vpop.f32.mrb[0].mxu0
      %v3696 = vadd.f32 %v2990, %v3695
      %v3697 = vpop.f32.mrb[0].mxu0
      %v3698 = vpop.f32.mrb[0].mxu0
      %v3699 = vadd.f32 %v2990, %v3698
      %v3700 = vpop.f32.mrb[0].mxu0
      %3701 = vmatprep.mubr.bf16.mxu0 0
      %3702 = vmatmul.mubr.bf16.gmra.mrb[0].mxu0 %v3111
      %v3703 = vpop.f32.mrb[0].mxu0
      %v3704 = vadd.f32 %v2990, %v3703
      %v3705 = vpop.f32.mrb[0].mxu0
      %v3706 = vpop.f32.mrb[0].mxu0
      %v3707 = vadd.f32 %v2990, %v3706
      %v3708 = vpop.f32.mrb[0].mxu0
      %3709 = vmatprep.mubr.bf16.mxu0 0
      %3710 = vmatmul.mubr.bf16.gmra.mrb[0].mxu0 %v3114
      %v3711 = vpop.f32.mrb[0].mxu0
      %v3712 = vadd.f32 %v2990, %v3711
      %v3713 = vpop.f32.mrb[0].mxu0
      %v3714 = vpop.f32.mrb[0].mxu0
      %v3715 = vadd.f32 %v2990, %v3714
      %v3716 = vpop.f32.mrb[0].mxu0
      %3717 = vmatprep.mubr.bf16.mxu0 0
      %3718 = vmatmul.mubr.bf16.gmra.mrb[0].mxu0 %v3117
      %v3719 = vpop.f32.mrb[0].mxu0
      %v3720 = vadd.f32 %v2990, %v3719
      %v3721 = vpop.f32.mrb[0].mxu0
      %v3722 = vpop.f32.mrb[0].mxu0
      %v3723 = vadd.f32 %v2990, %v3722
      %v3724 = vpop.f32.mrb[0].mxu0
      %3725 = vmatprep.mubr.bf16.mxu0 0
      %3726 = vmatmul.mubr.bf16.gmra.mrb[0].mxu0 %v3120
      %v3727 = vpop.f32.mrb[0].mxu0
      %v3728 = vadd.f32 %v2990, %v3727
      %v3729 = vpop.f32.mrb[0].mxu0
      %v3730 = vpop.f32.mrb[0].mxu0
      %v3731 = vadd.f32 %v2990, %v3730
      %v3732 = vpop.f32.mrb[0].mxu0
      %3733 = vmatprep.mubr.bf16.mxu0 0
      %3734 = vmatmul.mubr.bf16.gmra.mrb[0].mxu0 %v3123
      %v3735 = vpop.f32.mrb[0].mxu0
      %v3736 = vadd.f32 %v2990, %v3735
      %v3737 = vpop.f32.mrb[0].mxu0
      %v3738 = vpop.f32.mrb[0].mxu0
      %v3739 = vadd.f32 %v2990, %v3738
      %v3740 = vpop.f32.mrb[0].mxu0
      %3741 = vmatprep.mubr.bf16.mxu0 0
      %3742 = vmatmul.mubr.bf16.gmra.mrb[0].mxu0 %v3126
      %v3743 = vpop.f32.mrb[0].mxu0
      %v3744 = vadd.f32 %v2990, %v3743
      %v3745 = vpop.f32.mrb[0].mxu0
      %v3746 = vpop.f32.mrb[0].mxu0
      %v3747 = vadd.f32 %v2990, %v3746
      %v3748 = vpop.f32.mrb[0].mxu0
      %3749 = vmatprep.mubr.bf16.mxu0 0
      %3750 = vmatmul.mubr.bf16.gmra.mrb[0].mxu0 %v3129
      %v3751 = vpop.f32.mrb[0].mxu0
      %v3752 = vadd.f32 %v2990, %v3751
      %v3753 = vpop.f32.mrb[0].mxu0
      %v3754 = vpop.f32.mrb[0].mxu0
      %v3755 = vadd.f32 %v2990, %v3754
      %v3756 = vpop.f32.mrb[0].mxu0
      %3757 = vmatprep.mubr.bf16.mxu0 0
      %3758 = vmatmul.mubr.bf16.gmra.mrb[0].mxu0 %v3132
      %v3759 = vpop.f32.mrb[0].mxu0
      %v3760 = vadd.f32 %v2990, %v3759
      %v3761 = vpop.f32.mrb[0].mxu0
      %v3762 = vpop.f32.mrb[0].mxu0
      %v3763 = vadd.f32 %v2990, %v3762
      %v3764 = vpop.f32.mrb[0].mxu0
      %3765 = vmatprep.mubr.bf16.mxu0 0
      %3766 = vmatmul.mubr.bf16.gmra.mrb[0].mxu0 %v3135
      %v3767 = vpop.f32.mrb[0].mxu0
      %v3768 = vadd.f32 %v2990, %v3767
      %v3769 = vpop.f32.mrb[0].mxu0
      %v3770 = vpop.f32.mrb[0].mxu0
      %v3771 = vadd.f32 %v2990, %v3770
      %v3772 = vpop.f32.mrb[0].mxu0
      %3773 = vmatprep.mubr.bf16.mxu0 0
      %3774 = vmatmul.mubr.bf16.gmra.mrb[0].mxu0 %v3138
      %v3775 = vpop.f32.mrb[0].mxu0
      %v3776 = vadd.f32 %v2990, %v3775
      %v3777 = vpop.f32.mrb[0].mxu0
      %v3778 = vpop.f32.mrb[0].mxu0
      %v3779 = vadd.f32 %v2990, %v3778
      %v3780 = vpop.f32.mrb[0].mxu0
      %3781 = vmatprep.mubr.bf16.mxu0 0
      %3782 = vmatmul.mubr.bf16.gmra.mrb[0].mxu0 %v3141
      %v3783 = vpop.f32.mrb[0].mxu0
      %v3784 = vadd.f32 %v2990, %v3783
      %v3785 = vpop.f32.mrb[0].mxu0
      %v3786 = vpop.f32.mrb[0].mxu0
      %v3787 = vadd.f32 %v2990, %v3786
      %v3788 = vpop.f32.mrb[0].mxu0
      %3789 = vmatprep.mubr.bf16.mxu0 0
      %3790 = vmatmul.mubr.bf16.gmra.mrb[0].mxu0 %v3144
      %v3791 = vpop.f32.mrb[0].mxu0
      %v3792 = vadd.f32 %v2990, %v3791
      %v3793 = vpop.f32.mrb[0].mxu0
      %v3794 = vpop.f32.mrb[0].mxu0
      %v3795 = vadd.f32 %v2990, %v3794
      %v3796 = vpop.f32.mrb[0].mxu0
      %3797 = vmatprep.mubr.bf16.mxu0 0
      %3798 = vmatmul.mubr.bf16.gmra.mrb[0].mxu0 %v3147
      %v3799 = vpop.f32.mrb[0].mxu0
      %v3800 = vadd.f32 %v2990, %v3799
      %v3801 = vpop.f32.mrb[0].mxu0
      %v3802 = vpop.f32.mrb[0].mxu0
      %v3803 = vadd.f32 %v2990, %v3802
      %v3804 = vpop.f32.mrb[0].mxu0
      %3805 = vmatprep.mubr.bf16.mxu0 0
      %3806 = vmatmul.mubr.bf16.gmra.mrb[0].mxu0 %v3150
      %v3807 = vpop.f32.mrb[0].mxu0
      %v3808 = vadd.f32 %v2990, %v3807
      %v3809 = vpop.f32.mrb[0].mxu0
      %v3810 = vpop.f32.mrb[0].mxu0
      %v3811 = vadd.f32 %v2990, %v3810
      %v3812 = vpop.f32.mrb[0].mxu0
      %3813 = vmatprep.mubr.bf16.mxu0 0
      %3814 = vmatmul.mubr.bf16.gmra.mrb[0].mxu0 %v3153
      %v3815 = vpop.f32.mrb[0].mxu0
      %v3816 = vadd.f32 %v2990, %v3815
      %v3817 = vpop.f32.mrb[0].mxu0
      %v3818 = vpop.f32.mrb[0].mxu0
      %v3819 = vadd.f32 %v2990, %v3818
      %v3820 = vpop.f32.mrb[0].mxu0
      %3821 = vmatprep.mubr.bf16.mxu0 0
      %3822 = vmatmul.mubr.bf16.gmra.mrb[0].mxu0 %v3156
      %v3823 = vpop.f32.mrb[0].mxu0
      %v3824 = vadd.f32 %v2990, %v3823
      %v3825 = vpop.f32.mrb[0].mxu0
      %v3826 = vpop.f32.mrb[0].mxu0
      %v3827 = vadd.f32 %v2990, %v3826
      %v3828 = vpop.f32.mrb[0].mxu0
      %3829 = vmatprep.mubr.bf16.mxu0 0
      %3830 = vmatmul.mubr.bf16.gmra.mrb[0].mxu0 %v3159
      %v3831 = vpop.f32.mrb[0].mxu0
      %v3832 = vadd.f32 %v2990, %v3831
      %v3833 = vpop.f32.mrb[0].mxu0
      %v3834 = vpop.f32.mrb[0].mxu0
      %v3835 = vadd.f32 %v2990, %v3834
      %v3836 = vpop.f32.mrb[0].mxu0
      %3837 = vmatprep.mubr.bf16.mxu0 0
      %3838 = vmatmul.mubr.bf16.gmra.mrb[0].mxu0 %v3162
      %v3839 = vpop.f32.mrb[0].mxu0
      %v3840 = vadd.f32 %v2990, %v3839
      %v3841 = vpop.f32.mrb[0].mxu0
      %v3842 = vpop.f32.mrb[0].mxu0
      %v3843 = vadd.f32 %v2990, %v3842
      %v3844 = vpop.f32.mrb[0].mxu0
      %3845 = vmatprep.mubr.bf16.mxu0 0
      %3846 = vmatmul.mubr.bf16.gmra.mrb[0].mxu0 %v3165
      %v3847 = vpop.f32.mrb[0].mxu0
      %v3848 = vadd.f32 %v2990, %v3847
      %v3849 = vpop.f32.mrb[0].mxu0
      %v3850 = vpop.f32.mrb[0].mxu0
      %v3851 = vadd.f32 %v2990, %v3850
      %v3852 = vpop.f32.mrb[0].mxu0
      %3853 = vmatprep.mubr.bf16.mxu0 0
      %3854 = vmatmul.mubr.bf16.gmra.mrb[0].mxu0 %v3168
      %v3855 = vpop.f32.mrb[0].mxu0
      %v3856 = vadd.f32 %v2990, %v3855
      %v3857 = vpop.f32.mrb[0].mxu0
      %v3858 = vpop.f32.mrb[0].mxu0
      %v3859 = vadd.f32 %v2990, %v3858
      %v3860 = vpop.f32.mrb[0].mxu0
      %3861 = vmatprep.mubr.bf16.mxu0 0
      %3862 = vmatmul.mubr.bf16.gmra.mrb[0].mxu0 %v3171
      %v3863 = vpop.f32.mrb[0].mxu0
      %v3864 = vadd.f32 %v2990, %v3863
      %v3865 = vpop.f32.mrb[0].mxu0
      %v3866 = vpop.f32.mrb[0].mxu0
      %v3867 = vadd.f32 %v2990, %v3866
      %v3868 = vpop.f32.mrb[0].mxu0
      %3869 = vmatprep.mubr.bf16.mxu0 0
      %3870 = vmatmul.mubr.bf16.gmra.mrb[0].mxu0 %v3174
      %v3871 = vpop.f32.mrb[0].mxu0
      %v3872 = vadd.f32 %v2990, %v3871
      %v3873 = vpop.f32.mrb[0].mxu0
      %v3874 = vpop.f32.mrb[0].mxu0
      %v3875 = vadd.f32 %v2990, %v3874
      %v3876 = vpop.f32.mrb[0].mxu0
      %3877 = vmatprep.mubr.bf16.mxu0 0
      %3878 = vmatmul.mubr.bf16.gmra.mrb[0].mxu0 %v3177
      %v3879 = vpop.f32.mrb[0].mxu0
      %v3880 = vadd.f32 %v2990, %v3879
      %v3881 = vpop.f32.mrb[0].mxu0
      %v3882 = vpop.f32.mrb[0].mxu0
      %v3883 = vadd.f32 %v2990, %v3882
      %v3884 = vpop.f32.mrb[0].mxu0
      %3885 = vmatprep.mubr.bf16.mxu0 0
      %3886 = vmatmul.mubr.bf16.gmra.mrb[0].mxu0 %v3180
      %v3887 = vpop.f32.mrb[0].mxu0
      %v3888 = vadd.f32 %v2990, %v3887
      %v3889 = vpop.f32.mrb[0].mxu0
      %v3890 = vpop.f32.mrb[0].mxu0
      %v3891 = vadd.f32 %v2990, %v3890
      %v3892 = vpop.f32.mrb[0].mxu0
      %3893 = vmatprep.mubr.bf16.mxu0 0
      %3894 = vmatmul.mubr.bf16.gmra.mrb[0].mxu0 %v3183
      %v3895 = vpop.f32.mrb[0].mxu0
      %v3896 = vadd.f32 %v2990, %v3895
      %v3897 = vpop.f32.mrb[0].mxu0
      %v3898 = vpop.f32.mrb[0].mxu0
      %v3899 = vadd.f32 %v2990, %v3898
      %v3900 = vpop.f32.mrb[0].mxu0
      %3901 = vmatprep.mubr.bf16.mxu0 0
      %3902 = vmatmul.mubr.bf16.gmra.mrb[0].mxu0 %v3186
      %v3903 = vpop.f32.mrb[0].mxu0
      %v3904 = vadd.f32 %v2990, %v3903
      %v3905 = vpop.f32.mrb[0].mxu0
      %v3906 = vpop.f32.mrb[0].mxu0
      %v3907 = vadd.f32 %v2990, %v3906
      %v3908 = vpop.f32.mrb[0].mxu0
      %3909 = vmatprep.mubr.bf16.mxu0 0
      %3910 = vmatmul.mubr.bf16.gmra.mrb[0].mxu0 %v3189
      %v3911 = vpop.f32.mrb[0].mxu0
      %v3912 = vadd.f32 %v2990, %v3911
      %v3913 = vpop.f32.mrb[0].mxu0
      %v3914 = vpop.f32.mrb[0].mxu0
      %v3915 = vadd.f32 %v2990, %v3914
      %v3916 = vpop.f32.mrb[0].mxu0
      %3917 = vmatprep.mubr.bf16.mxu0 0
      %3918 = vmatmul.mubr.bf16.gmra.mrb[0].mxu0 %v3192
      %v3919 = vpop.f32.mrb[0].mxu0
      %v3920 = vadd.f32 %v2990, %v3919
      %v3921 = vpop.f32.mrb[0].mxu0
      %v3922 = vpop.f32.mrb[0].mxu0
      %v3923 = vadd.f32 %v2990, %v3922
      %v3924 = vpop.f32.mrb[0].mxu0
      %3925 = vmatprep.mubr.bf16.mxu0 0
      %3926 = vmatmul.mubr.bf16.gmra.mrb[0].mxu0 %v3195
      %v3927 = vpop.f32.mrb[0].mxu0
      %v3928 = vadd.f32 %v2990, %v3927
      %v3929 = vpop.f32.mrb[0].mxu0
      %v3930 = vpop.f32.mrb[0].mxu0
      %v3931 = vadd.f32 %v2990, %v3930
      %v3932 = vpop.f32.mrb[0].mxu0
      %3933 = vmatprep.mubr.bf16.mxu0 0
      %3934 = vmatmul.mubr.bf16.gmra.mrb[0].mxu0 %v3198
      %v3935 = vpop.f32.mrb[0].mxu0
      %v3936 = vadd.f32 %v2990, %v3935
      %v3937 = vpop.f32.mrb[0].mxu0
      %v3938 = vpop.f32.mrb[0].mxu0
      %v3939 = vadd.f32 %v2990, %v3938
      %v3940 = vpop.f32.mrb[0].mxu0
      %3941 = vmatprep.mubr.bf16.mxu0 0
      %3942 = vmatmul.mubr.bf16.gmra.mrb[0].mxu0 %v3201
      %v3943 = vpop.f32.mrb[0].mxu0
      %v3944 = vadd.f32 %v2990, %v3943
      %v3945 = vpop.f32.mrb[0].mxu0
      %v3946 = vpop.f32.mrb[0].mxu0
      %v3947 = vadd.f32 %v2990, %v3946
      %v3948 = vpop.f32.mrb[0].mxu0
      %3949 = vmatprep.mubr.bf16.mxu0 0
      %3950 = vmatmul.mubr.bf16.gmra.mrb[0].mxu0 %v3204
      %v3951 = vpop.f32.mrb[0].mxu0
      %v3952 = vadd.f32 %v2990, %v3951
      %v3953 = vpop.f32.mrb[0].mxu0
      %v3954 = vpop.f32.mrb[0].mxu0
      %v3955 = vadd.f32 %v2990, %v3954
      %v3956 = vpop.f32.mrb[0].mxu0
      %3957 = vmatprep.mubr.bf16.mxu0 0
      %3958 = vmatmul.mubr.bf16.gmra.mrb[0].mxu0 %v3207
      %v3959 = vpop.f32.mrb[0].mxu0
      %v3960 = vadd.f32 %v2990, %v3959
      %v3961 = vpop.f32.mrb[0].mxu0
      %v3962 = vpop.f32.mrb[0].mxu0
      %v3963 = vadd.f32 %v2990, %v3962
      %v3964 = vpop.f32.mrb[0].mxu0
      %3965 = vmatprep.mubr.bf16.mxu0 0
      %3966 = vmatmul.mubr.bf16.gmra.mrb[0].mxu0 %v3210
      %v3967 = vpop.f32.mrb[0].mxu0
      %v3968 = vadd.f32 %v2990, %v3967
      %v3969 = vpop.f32.mrb[0].mxu0
      %v3970 = vpop.f32.mrb[0].mxu0
      %v3971 = vadd.f32 %v2990, %v3970
      %v3972 = vpop.f32.mrb[0].mxu0
      %3973 = vmatprep.mubr.bf16.mxu0 0
      %3974 = vmatmul.mubr.bf16.gmra.mrb[0].mxu0 %v3213
      %v3975 = vpop.f32.mrb[0].mxu0
      %v3976 = vadd.f32 %v2990, %v3975
      %v3977 = vpop.f32.mrb[0].mxu0
      %v3978 = vpop.f32.mrb[0].mxu0
      %v3979 = vadd.f32 %v2990, %v3978
      %v3980 = vpop.f32.mrb[0].mxu0
      %3981 = vmatprep.mubr.bf16.mxu0 0
      %3982 = vmatmul.mubr.bf16.gmra.mrb[0].mxu0 %v3216
      %v3983 = vpop.f32.mrb[0].mxu0
      %v3984 = vadd.f32 %v2990, %v3983
      %v3985 = vpop.f32.mrb[0].mxu0
      %v3986 = vpop.f32.mrb[0].mxu0
      %v3987 = vadd.f32 %v2990, %v3986
      %v3988 = vpop.f32.mrb[0].mxu0
      %3989 = vmatprep.mubr.bf16.mxu0 0
      %3990 = vmatmul.mubr.bf16.gmra.mrb[0].mxu0 %v3219
      %v3991 = vpop.f32.mrb[0].mxu0
      %v3992 = vadd.f32 %v2990, %v3991
      %v3993 = vpop.f32.mrb[0].mxu0
      %v3994 = vpop.f32.mrb[0].mxu0
      %v3995 = vadd.f32 %v2990, %v3994
      %v3996 = vpop.f32.mrb[0].mxu0
      %3997 = vmatprep.mubr.bf16.mxu0 0
      %3998 = vmatmul.mubr.bf16.gmra.mrb[0].mxu0 %v3222
      %v3999 = vpop.f32.mrb[0].mxu0
      %v4000 = vadd.f32 %v2990, %v3999
      %v4001 = vpop.f32.mrb[0].mxu0
      %v4002 = vpop.f32.mrb[0].mxu0
      %v4003 = vadd.f32 %v2990, %v4002
      %v4004 = vpop.f32.mrb[0].mxu0
      %4005 = vmatprep.mubr.bf16.mxu0 0
      %4006 = vmatmul.mubr.bf16.gmra.mrb[0].mxu0 %v3225
      %v4007 = vpop.f32.mrb[0].mxu0
      %v4008 = vadd.f32 %v2990, %v4007
      %v4009 = vpop.f32.mrb[0].mxu0
      %v4010 = vpop.f32.mrb[0].mxu0
      %v4011 = vadd.f32 %v2990, %v4010
      %v4012 = vpop.f32.mrb[0].mxu0
      %4013 = vmatprep.mubr.bf16.mxu0 0
      %4014 = vmatmul.mubr.bf16.gmra.mrb[0].mxu0 %v3228
      %v4015 = vpop.f32.mrb[0].mxu0
      %v4016 = vadd.f32 %v2990, %v4015
      %v4017 = vpop.f32.mrb[0].mxu0
      %v4018 = vpop.f32.mrb[0].mxu0
      %v4019 = vadd.f32 %v2990, %v4018
      %v4020 = vpop.f32.mrb[0].mxu0
      %4021 = vmatprep.mubr.bf16.mxu0 0
      %4022 = vmatmul.mubr.bf16.gmra.mrb[0].mxu0 %v3231
      %v4023 = vpop.f32.mrb[0].mxu0
      %v4024 = vadd.f32 %v2990, %v4023
      %v4025 = vpop.f32.mrb[0].mxu0
      %v4026 = vpop.f32.mrb[0].mxu0
      %v4027 = vadd.f32 %v2990, %v4026
      %v4028 = vpop.f32.mrb[0].mxu0
      %4029 = vmatprep.mubr.bf16.mxu0 0
      %4030 = vmatmul.mubr.bf16.gmra.mrb[0].mxu0 %v3234
      %v4031 = vpop.f32.mrb[0].mxu0
      %v4032 = vadd.f32 %v2990, %v4031
      %v4033 = vpop.f32.mrb[0].mxu0
      %v4034 = vpop.f32.mrb[0].mxu0
      %v4035 = vadd.f32 %v2990, %v4034
      %v4036 = vpop.f32.mrb[0].mxu0
      %4037 = vmatprep.mubr.bf16.mxu0 0
      %4038 = vmatmul.mubr.bf16.gmra.mrb[0].mxu0 %v3237
      %v4039 = vpop.f32.mrb[0].mxu0
      %v4040 = vadd.f32 %v2990, %v4039
      %v4041 = vpop.f32.mrb[0].mxu0
      %v4042 = vpop.f32.mrb[0].mxu0
      %v4043 = vadd.f32 %v2990, %v4042
      %v4044 = vpop.f32.mrb[0].mxu0
      %4045 = vmatprep.mubr.bf16.mxu0 0
      %4046 = vmatmul.mubr.bf16.gmra.mrb[0].mxu0 %v3240
      %v4047 = vpop.f32.mrb[0].mxu0
      %v4048 = vadd.f32 %v2990, %v4047
      %v4049 = vpop.f32.mrb[0].mxu0
      %v4050 = vpop.f32.mrb[0].mxu0
      %v4051 = vadd.f32 %v2990, %v4050
      %v4052 = vpop.f32.mrb[0].mxu0
      %4053 = vmatprep.mubr.bf16.mxu0 0
      %4054 = vmatmul.mubr.bf16.gmra.mrb[0].mxu0 %v3243
      %v4055 = vpop.f32.mrb[0].mxu0
      %v4056 = vadd.f32 %v2990, %v4055
      %v4057 = vpop.f32.mrb[0].mxu0
      %v4058 = vpop.f32.mrb[0].mxu0
      %v4059 = vadd.f32 %v2990, %v4058
      %v4060 = vpop.f32.mrb[0].mxu0
      %4061 = vmatprep.mubr.bf16.mxu0 0
      %4062 = vmatmul.mubr.bf16.gmra.mrb[0].mxu0 %v3246
      %v4063 = vpop.f32.mrb[0].mxu0
      %v4064 = vadd.f32 %v2990, %v4063
      %v4065 = vpop.f32.mrb[0].mxu0
      %v4066 = vpop.f32.mrb[0].mxu0
      %v4067 = vadd.f32 %v2990, %v4066
      %v4068 = vpop.f32.mrb[0].mxu0
      %4069 = vmatprep.mubr.bf16.mxu0 0
      %4070 = vmatmul.mubr.bf16.gmra.mrb[0].mxu0 %v3249
      %v4071 = vpop.f32.mrb[0].mxu0
      %v4072 = vadd.f32 %v2990, %v4071
      %v4073 = vpop.f32.mrb[0].mxu0
      %v4074 = vpop.f32.mrb[0].mxu0
      %v4075 = vadd.f32 %v2990, %v4074
      %v4076 = vpop.f32.mrb[0].mxu0
      %4077 = vmatprep.mubr.bf16.mxu0 0
      %4078 = vmatmul.mubr.bf16.gmra.mrb[0].mxu0 %v3252
      %v4079 = vpop.f32.mrb[0].mxu0
      %v4080 = vadd.f32 %v2990, %v4079
      %v4081 = vpop.f32.mrb[0].mxu0
      %v4082 = vpop.f32.mrb[0].mxu0
      %v4083 = vadd.f32 %v2990, %v4082
      %v4084 = vpop.f32.mrb[0].mxu0
      %4085 = vmatprep.mubr.bf16.mxu0 0
      %4086 = vmatmul.mubr.bf16.gmra.mrb[0].mxu0 %v3255
      %v4087 = vpop.f32.mrb[0].mxu0
      %v4088 = vadd.f32 %v2990, %v4087
      %v4089 = vpop.f32.mrb[0].mxu0
      %v4090 = vpop.f32.mrb[0].mxu0
      %v4091 = vadd.f32 %v2990, %v4090
      %v4092 = vpop.f32.mrb[0].mxu0
      %4093 = vmatprep.mubr.bf16.mxu0 0
      %4094 = vmatmul.mubr.bf16.gmra.mrb[0].mxu0 %v3258
      %v4095 = vpop.f32.mrb[0].mxu0
      %v4096 = vadd.f32 %v2990, %v4095
      %v4097 = vpop.f32.mrb[0].mxu0
      %v4098 = vpop.f32.mrb[0].mxu0
      %v4099 = vadd.f32 %v2990, %v4098
      %v4100 = vpop.f32.mrb[0].mxu0
      %4101 = vmatprep.mubr.bf16.mxu0 0
      %4102 = vmatmul.mubr.bf16.gmra.mrb[0].mxu0 %v3261
      %v4103 = vpop.f32.mrb[0].mxu0
      %v4104 = vadd.f32 %v2990, %v4103
      %v4105 = vpop.f32.mrb[0].mxu0
      %v4106 = vpop.f32.mrb[0].mxu0
      %v4107 = vadd.f32 %v2990, %v4106
      %v4108 = vpop.f32.mrb[0].mxu0
      %4109 = vmatprep.mubr.bf16.mxu0 0
      %4110 = vmatmul.mubr.bf16.gmra.mrb[0].mxu0 %v3264
      %v4111 = vpop.f32.mrb[0].mxu0
      %v4112 = vadd.f32 %v2990, %v4111
      %v4113 = vpop.f32.mrb[0].mxu0
      %v4114 = vpop.f32.mrb[0].mxu0
      %v4115 = vadd.f32 %v2990, %v4114
      %v4116 = vpop.f32.mrb[0].mxu0
      %4117 = vmatprep.mubr.bf16.mxu0 0
      %4118 = vmatmul.mubr.bf16.gmra.mrb[0].mxu0 %v3267
      %v4119 = vpop.f32.mrb[0].mxu0
      %v4120 = vadd.f32 %v2990, %v4119
      %v4121 = vpop.f32.mrb[0].mxu0
      %v4122 = vpop.f32.mrb[0].mxu0
      %v4123 = vadd.f32 %v2990, %v4122
      %v4124 = vpop.f32.mrb[0].mxu0
      %4125 = vmatprep.mubr.bf16.mxu0 0
      %4126 = vmatmul.mubr.bf16.gmra.mrb[0].mxu0 %v3270
      %v4127 = vpop.f32.mrb[0].mxu0
      %v4128 = vadd.f32 %v2990, %v4127
      %v4129 = vpop.f32.mrb[0].mxu0
      %v4130 = vpop.f32.mrb[0].mxu0
      %v4131 = vadd.f32 %v2990, %v4130
      %v4132 = vpop.f32.mrb[0].mxu0
      %4133 = vmatprep.mubr.bf16.mxu0 0
      %4134 = vmatmul.mubr.bf16.gmra.mrb[0].mxu0 %v3273
      %v4135 = vpop.f32.mrb[0].mxu0
      %v4136 = vadd.f32 %v2990, %v4135
      %v4137 = vpop.f32.mrb[0].mxu0
      %v4138 = vpop.f32.mrb[0].mxu0
      %v4139 = vadd.f32 %v2990, %v4138
      %v4140 = vpop.f32.mrb[0].mxu0
      %4141 = vmatprep.mubr.bf16.mxu0 0
      %4142 = vmatmul.mubr.bf16.gmra.mrb[0].mxu0 %v3276
      %v4143 = vpop.f32.mrb[0].mxu0
      %v4144 = vadd.f32 %v2990, %v4143
      %v4145 = vpop.f32.mrb[0].mxu0
      %v4146 = vpop.f32.mrb[0].mxu0
      %v4147 = vadd.f32 %v2990, %v4146
      %v4148 = vpop.f32.mrb[0].mxu0
      %4149 = vmatprep.mubr.bf16.mxu0 0
      %4150 = vmatmul.mubr.bf16.gmra.mrb[0].mxu0 %v3279
      %v4151 = vpop.f32.mrb[0].mxu0
      %v4152 = vadd.f32 %v2990, %v4151
      %v4153 = vpop.f32.mrb[0].mxu0
      %v4154 = vpop.f32.mrb[0].mxu0
      %v4155 = vadd.f32 %v2990, %v4154
      %v4156 = vpop.f32.mrb[0].mxu0
      %4157 = vmatprep.mubr.bf16.mxu0 0
      %4158 = vmatmul.mubr.bf16.gmra.mrb[0].mxu0 %v3282
      %v4159 = vpop.f32.mrb[0].mxu0
      %v4160 = vadd.f32 %v2990, %v4159
      %v4161 = vpop.f32.mrb[0].mxu0
      %v4162 = vpop.f32.mrb[0].mxu0
      %v4163 = vadd.f32 %v2990, %v4162
      %v4164 = vpop.f32.mrb[0].mxu0
      %4165 = vmatprep.mubr.bf16.mxu0 0
      %4166 = vmatmul.mubr.bf16.gmra.mrb[0].mxu0 %v3285
      %v4167 = vpop.f32.mrb[0].mxu0
      %v4168 = vadd.f32 %v2990, %v4167
      %v4169 = vpop.f32.mrb[0].mxu0
      %v4170 = vpop.f32.mrb[0].mxu0
      %v4171 = vadd.f32 %v2990, %v4170
      %v4172 = vpop.f32.mrb[0].mxu0
      %4173 = vmatprep.mubr.bf16.mxu0 0
      %4174 = vmatmul.mubr.bf16.gmra.mrb[0].mxu0 %v3288
      %v4175 = vpop.f32.mrb[0].mxu0
      %v4176 = vadd.f32 %v2990, %v4175
      %v4177 = vpop.f32.mrb[0].mxu0
      %v4178 = vpop.f32.mrb[0].mxu0
      %v4179 = vadd.f32 %v2990, %v4178
      %v4180 = vpop.f32.mrb[0].mxu0
      %4181 = vmatprep.mubr.bf16.mxu0 0
      %4182 = vmatmul.mubr.bf16.gmra.mrb[0].mxu0 %v3291
      %v4183 = vpop.f32.mrb[0].mxu0
      %v4184 = vadd.f32 %v2990, %v4183
      %v4185 = vpop.f32.mrb[0].mxu0
      %v4186 = vpop.f32.mrb[0].mxu0
      %v4187 = vadd.f32 %v2990, %v4186
      %v4188 = vpop.f32.mrb[0].mxu0
      %4189 = vmatprep.mubr.bf16.mxu0 0
      %4190 = vmatmul.mubr.bf16.gmra.mrb[0].mxu0 %v3294
      %v4191 = vpop.f32.mrb[0].mxu0
      %v4192 = vadd.f32 %v2990, %v4191
      %v4193 = vpop.f32.mrb[0].mxu0
      %v4194 = vpop.f32.mrb[0].mxu0
      %v4195 = vadd.f32 %v2990, %v4194
      %v4196 = vpop.f32.mrb[0].mxu0
      %4197 = vmatprep.mubr.bf16.mxu0 0
      %4198 = vmatmul.mubr.bf16.gmra.mrb[0].mxu0 %v3297
      %v4199 = vpop.f32.mrb[0].mxu0
      %v4200 = vadd.f32 %v2990, %v4199
      %v4201 = vpop.f32.mrb[0].mxu0
      %v4202 = vpop.f32.mrb[0].mxu0
      %v4203 = vadd.f32 %v2990, %v4202
      %v4204 = vpop.f32.mrb[0].mxu0
      %4205 = vmatprep.mubr.bf16.mxu0 0
      %4206 = vmatmul.mubr.bf16.gmra.mrb[0].mxu0 %v3300
      %v4207 = vpop.f32.mrb[0].mxu0
      %v4208 = vadd.f32 %v2990, %v4207
      %v4209 = vpop.f32.mrb[0].mxu0
      %v4210 = vpop.f32.mrb[0].mxu0
      %v4211 = vadd.f32 %v2990, %v4210
      %v4212 = vpop.f32.mrb[0].mxu0
      %4213 = vmatprep.mubr.bf16.mxu0 0
      %4214 = vmatmul.mubr.bf16.gmra.mrb[0].mxu0 %v3303
      %v4215 = vpop.f32.mrb[0].mxu0
      %v4216 = vadd.f32 %v2990, %v4215
      %v4217 = vpop.f32.mrb[0].mxu0
      %v4218 = vpop.f32.mrb[0].mxu0
      %v4219 = vadd.f32 %v2990, %v4218
      %v4220 = vpop.f32.mrb[0].mxu0
      %4221 = vmatprep.mubr.bf16.mxu0 0
      %4222 = vmatmul.mubr.bf16.gmra.mrb[0].mxu0 %v3306
      %v4223 = vpop.f32.mrb[0].mxu0
      %v4224 = vadd.f32 %v2990, %v4223
      %v4225 = vpop.f32.mrb[0].mxu0
      %v4226 = vpop.f32.mrb[0].mxu0
      %v4227 = vadd.f32 %v2990, %v4226
      %v4228 = vpop.f32.mrb[0].mxu0
      %4229 = vmatprep.mubr.bf16.mxu0 0
      %4230 = vmatmul.mubr.bf16.gmra.mrb[0].mxu0 %v3309
      %v4231 = vpop.f32.mrb[0].mxu0
      %v4232 = vadd.f32 %v2990, %v4231
      %v4233 = vpop.f32.mrb[0].mxu0
      %v4234 = vpop.f32.mrb[0].mxu0
      %v4235 = vadd.f32 %v2990, %v4234
      %v4236 = vpop.f32.mrb[0].mxu0
      %4237 = vmatprep.mubr.bf16.mxu0 0
      %4238 = vmatmul.mubr.bf16.gmra.mrb[0].mxu0 %v3312
      %v4239 = vpop.f32.mrb[0].mxu0
      %v4240 = vadd.f32 %v2990, %v4239
      %v4241 = vpop.f32.mrb[0].mxu0
      %v4242 = vpop.f32.mrb[0].mxu0
      %v4243 = vadd.f32 %v2990, %v4242
      %v4244 = vpop.f32.mrb[0].mxu0
      %4245 = vmatprep.mubr.bf16.mxu0 0
      %4246 = vmatmul.mubr.bf16.gmra.mrb[0].mxu0 %v3315
      %v4247 = vpop.f32.mrb[0].mxu0
      %v4248 = vadd.f32 %v2990, %v4247
      %v4249 = vpop.f32.mrb[0].mxu0
      %v4250 = vpop.f32.mrb[0].mxu0
      %v4251 = vadd.f32 %v2990, %v4250
      %v4252 = vpop.f32.mrb[0].mxu0
      %4253 = vmatprep.mubr.bf16.mxu0 0
      %4254 = vmatmul.mubr.bf16.gmra.mrb[0].mxu0 %v3318
      %v4255 = vpop.f32.mrb[0].mxu0
      %v4256 = vadd.f32 %v2990, %v4255
      %v4257 = vpop.f32.mrb[0].mxu0
      %v4258 = vpop.f32.mrb[0].mxu0
      %v4259 = vadd.f32 %v2990, %v4258
      %v4260 = vpop.f32.mrb[0].mxu0
      %4261 = vmatprep.mubr.bf16.mxu0 0
      %4262 = vmatmul.mubr.bf16.gmra.mrb[0].mxu0 %v3321
      %v4263 = vpop.f32.mrb[0].mxu0
      %v4264 = vadd.f32 %v2990, %v4263
      %v4265 = vpop.f32.mrb[0].mxu0
      %v4266 = vpop.f32.mrb[0].mxu0
      %v4267 = vadd.f32 %v2990, %v4266
      %v4268 = vpop.f32.mrb[0].mxu0
      %4269 = vmatprep.mubr.bf16.mxu0 0
      %4270 = vmatmul.mubr.bf16.gmra.mrb[0].mxu0 %v3324
      %v4271 = vpop.f32.mrb[0].mxu0
      %v4272 = vadd.f32 %v2990, %v4271
      %v4273 = vpop.f32.mrb[0].mxu0
      %v4274 = vpop.f32.mrb[0].mxu0
      %v4275 = vadd.f32 %v2990, %v4274
      %v4276 = vpop.f32.mrb[0].mxu0
      %4277 = vmatprep.mubr.bf16.mxu0 0
      %4278 = vmatmul.mubr.bf16.gmra.mrb[0].mxu0 %v3327
      %v4279 = vpop.f32.mrb[0].mxu0
      %v4280 = vadd.f32 %v2990, %v4279
      %v4281 = vpop.f32.mrb[0].mxu0
      %v4282 = vpop.f32.mrb[0].mxu0
      %v4283 = vadd.f32 %v2990, %v4282
      %v4284 = vpop.f32.mrb[0].mxu0
      %4285 = vmatprep.mubr.bf16.mxu0 0
      %4286 = vmatmul.mubr.bf16.gmra.mrb[0].mxu0 %v3330
      %v4287 = vpop.f32.mrb[0].mxu0
      %v4288 = vadd.f32 %v2990, %v4287
      %v4289 = vpop.f32.mrb[0].mxu0
      %v4290 = vpop.f32.mrb[0].mxu0
      %v4291 = vadd.f32 %v2990, %v4290
      %v4292 = vpop.f32.mrb[0].mxu0
      %4293 = vmatprep.mubr.bf16.mxu0 0
      %4294 = vmatmul.mubr.bf16.gmra.mrb[0].mxu0 %v3333
      %v4295 = vpop.f32.mrb[0].mxu0
      %v4296 = vadd.f32 %v2990, %v4295
      %v4297 = vpop.f32.mrb[0].mxu0
      %v4298 = vpop.f32.mrb[0].mxu0
      %v4299 = vadd.f32 %v2990, %v4298
      %v4300 = vpop.f32.mrb[0].mxu0
      %4301 = vmatprep.mubr.bf16.mxu0 0
      %4302 = vmatmul.mubr.bf16.gmra.mrb[0].mxu0 %v3336
      %v4303 = vpop.f32.mrb[0].mxu0
      %v4304 = vadd.f32 %v2990, %v4303
      %v4305 = vpop.f32.mrb[0].mxu0
      %v4306 = vpop.f32.mrb[0].mxu0
      %v4307 = vadd.f32 %v2990, %v4306
      %v4308 = vpop.f32.mrb[0].mxu0
      %4309 = vmatprep.mubr.bf16.mxu0 0
      %4310 = vmatmul.mubr.bf16.gmra.mrb[0].mxu0 %v3339
      %v4311 = vpop.f32.mrb[0].mxu0
      %v4312 = vadd.f32 %v2990, %v4311
      %v4313 = vpop.f32.mrb[0].mxu0
      %v4314 = vpop.f32.mrb[0].mxu0
      %v4315 = vadd.f32 %v2990, %v4314
      %v4316 = vpop.f32.mrb[0].mxu0
      %4317 = vmatprep.mubr.bf16.mxu0 0
      %4318 = vmatmul.mubr.bf16.gmra.mrb[0].mxu0 %v3342
      %v4319 = vpop.f32.mrb[0].mxu0
      %v4320 = vadd.f32 %v2990, %v4319
      %v4321 = vpop.f32.mrb[0].mxu0
      %v4322 = vpop.f32.mrb[0].mxu0
      %v4323 = vadd.f32 %v2990, %v4322
      %v4324 = vpop.f32.mrb[0].mxu0
      %4325 = vmatprep.mubr.bf16.mxu0 0
      %4326 = vmatmul.mubr.bf16.gmra.mrb[0].mxu0 %v3345
      %v4327 = vpop.f32.mrb[0].mxu0
      %v4328 = vadd.f32 %v2990, %v4327
      %v4329 = vpop.f32.mrb[0].mxu0
      %v4330 = vpop.f32.mrb[0].mxu0
      %v4331 = vadd.f32 %v2990, %v4330
      %v4332 = vpop.f32.mrb[0].mxu0
      %4333 = vmatprep.mubr.bf16.mxu0 0
      %4334 = vmatmul.mubr.bf16.gmra.mrb[0].mxu0 %v3348
      %v4335 = vpop.f32.mrb[0].mxu0
      %v4336 = vadd.f32 %v2990, %v4335
      %v4337 = vpop.f32.mrb[0].mxu0
      %v4338 = vpop.f32.mrb[0].mxu0
      %v4339 = vadd.f32 %v2990, %v4338
      %v4340 = vpop.f32.mrb[0].mxu0
      %4341 = vmatprep.mubr.bf16.mxu0 0
      %4342 = vmatmul.mubr.bf16.gmra.mrb[0].mxu0 %v3351
      %v4343 = vpop.f32.mrb[0].mxu0
      %v4344 = vadd.f32 %v2990, %v4343
      %v4345 = vpop.f32.mrb[0].mxu0
      %v4346 = vpop.f32.mrb[0].mxu0
      %v4347 = vadd.f32 %v2990, %v4346
      %v4348 = vpop.f32.mrb[0].mxu0
      %4349 = vmatprep.mubr.bf16.mxu0 0
      %4350 = vmatmul.mubr.bf16.gmra.mrb[0].mxu0 %v3354
      %v4351 = vpop.f32.mrb[0].mxu0
      %v4352 = vadd.f32 %v2990, %v4351
      %v4353 = vpop.f32.mrb[0].mxu0
      %v4354 = vpop.f32.mrb[0].mxu0
      %v4355 = vadd.f32 %v2990, %v4354
      %v4356 = vpop.f32.mrb[0].mxu0
      %4357 = vmatprep.mubr.bf16.mxu0 0
      %4358 = vmatmul.mubr.bf16.gmra.mrb[0].mxu0 %v3357
      %v4359 = vpop.f32.mrb[0].mxu0
      %v4360 = vadd.f32 %v2990, %v4359
      %v4361 = vpop.f32.mrb[0].mxu0
      %v4362 = vpop.f32.mrb[0].mxu0
      %v4363 = vadd.f32 %v2990, %v4362
      %v4364 = vpop.f32.mrb[0].mxu0
      %4365 = vmatprep.mubr.bf16.mxu0 0
      %4366 = vmatmul.mubr.bf16.gmra.mrb[0].mxu0 %v3360
      %v4367 = vpop.f32.mrb[0].mxu0
      %v4368 = vadd.f32 %v2990, %v4367
      %v4369 = vpop.f32.mrb[0].mxu0
      %v4370 = vpop.f32.mrb[0].mxu0
      %v4371 = vadd.f32 %v2990, %v4370
      %v4372 = vpop.f32.mrb[0].mxu0
      %4373 = vmatprep.mubr.bf16.mxu0 0
      %4374 = vmatmul.mubr.bf16.gmra.mrb[0].mxu0 %v3363
      %v4375 = vpop.f32.mrb[0].mxu0
      %v4376 = vadd.f32 %v2990, %v4375
      %v4377 = vpop.f32.mrb[0].mxu0
      %v4378 = vpop.f32.mrb[0].mxu0
      %v4379 = vadd.f32 %v2990, %v4378
      %v4380 = vpop.f32.mrb[0].mxu0
      %4381 = vmatprep.mubr.bf16.mxu0 0
      %4382 = vmatmul.mubr.bf16.gmra.mrb[0].mxu0 %v3366
      %v4383 = vpop.f32.mrb[0].mxu0
      %v4384 = vadd.f32 %v2990, %v4383
      %v4385 = vpop.f32.mrb[0].mxu0
      %v4386 = vpop.f32.mrb[0].mxu0
      %v4387 = vadd.f32 %v2990, %v4386
      %v4388 = vpop.f32.mrb[0].mxu0
      %4389 = vmatprep.mubr.bf16.mxu0 0
      %4390 = vmatmul.mubr.bf16.gmra.mrb[0].mxu0 %v3369
      %v4391 = vpop.f32.mrb[0].mxu0
      %v4392 = vadd.f32 %v2990, %v4391
      %v4393 = vpop.f32.mrb[0].mxu0
      %v4394 = vpop.f32.mrb[0].mxu0
      %v4395 = vadd.f32 %v2990, %v4394
      %v4396 = vpop.f32.mrb[0].mxu0
      %4397 = vmatprep.mubr.bf16.mxu0 0
      %4398 = vmatmul.mubr.bf16.gmra.mrb[0].mxu0 %v3372
      %v4399 = vpop.f32.mrb[0].mxu0
      %v4400 = vadd.f32 %v2990, %v4399
      %v4401 = vpop.f32.mrb[0].mxu0
      %v4402 = vpop.f32.mrb[0].mxu0
      %v4403 = vadd.f32 %v2990, %v4402
      %v4404 = vpop.f32.mrb[0].mxu0
      %4405 = vmatprep.mubr.bf16.mxu0 0
      %4406 = vmatmul.mubr.bf16.gmra.mrb[0].mxu0 %v3375
      %v4407 = vpop.f32.mrb[0].mxu0
      %v4408 = vadd.f32 %v2990, %v4407
      %v4409 = vpop.f32.mrb[0].mxu0
      %v4410 = vpop.f32.mrb[0].mxu0
      %v4411 = vadd.f32 %v2990, %v4410
      %v4412 = vpop.f32.mrb[0].mxu0
      %4413 = vmatprep.mubr.bf16.mxu0 0
      %4414 = vmatmul.mubr.bf16.gmra.mrb[0].mxu0 %v3378
      %v4415 = vpop.f32.mrb[0].mxu0
      %v4416 = vadd.f32 %v2990, %v4415
      %v4417 = vpop.f32.mrb[0].mxu0
      %v4418 = vpop.f32.mrb[0].mxu0
      %v4419 = vadd.f32 %v2990, %v4418
      %v4420 = vpop.f32.mrb[0].mxu0
      %4421 = vmatprep.mubr.bf16.mxu0 0
      %4422 = vmatmul.mubr.bf16.gmra.mrb[0].mxu0 %v3381
      %v4423 = vpop.f32.mrb[0].mxu0
      %v4424 = vadd.f32 %v2990, %v4423
      %v4425 = vpop.f32.mrb[0].mxu0
      %v4426 = vpop.f32.mrb[0].mxu0
      %v4427 = vadd.f32 %v2990, %v4426
      %v4428 = vpop.f32.mrb[0].mxu0
      %4429 = vmatprep.mubr.bf16.mxu0 0
      %4430 = vmatmul.mubr.bf16.gmra.mrb[0].mxu0 %v3384
      %v4431 = vpop.f32.mrb[0].mxu0
      %v4432 = vadd.f32 %v2990, %v4431
      %v4433 = vpop.f32.mrb[0].mxu0
      %v4434 = vpop.f32.mrb[0].mxu0
      %v4435 = vadd.f32 %v2990, %v4434
      %v4436 = vpop.f32.mrb[0].mxu0
      %4437 = vmatprep.mubr.bf16.mxu0 0
      %4438 = vmatmul.mubr.bf16.gmra.mrb[0].mxu0 %v3387
      %v4439 = vpop.f32.mrb[0].mxu0
      %v4440 = vadd.f32 %v2990, %v4439
      %v4441 = vpop.f32.mrb[0].mxu0
      %v4442 = vpop.f32.mrb[0].mxu0
      %v4443 = vadd.f32 %v2990, %v4442
      %v4444 = vpop.f32.mrb[0].mxu0
      %4445 = vdwg.mxu0
      %v4446 = vmax.f32 %v3424, 0.0
      %v4447 = vmax.f32 %v3427, 0.0
      %v4448 = vmax.f32 %v3432, 0.0
      %v4449 = vmax.f32 %v3435, 0.0
      %v4450 = vmax.f32 %v3440, 0.0
      %v4451 = vmax.f32 %v3443, 0.0
      %v4452 = vmax.f32 %v3448, 0.0
      %v4453 = vmax.f32 %v3451, 0.0
      %v4454 = vmax.f32 %v3456, 0.0
      %v4455 = vmax.f32 %v3459, 0.0
      %v4456 = vmax.f32 %v3464, 0.0
      %v4457 = vmax.f32 %v3467, 0.0
      %v4458 = vmax.f32 %v3472, 0.0
      %v4459 = vmax.f32 %v3475, 0.0
      %v4460 = vmax.f32 %v3480, 0.0
      %v4461 = vmax.f32 %v3483, 0.0
      %v4462 = vmax.f32 %v3488, 0.0
      %v4463 = vmax.f32 %v3491, 0.0
      %v4464 = vmax.f32 %v3496, 0.0
      %v4465 = vmax.f32 %v3499, 0.0
      %v4466 = vmax.f32 %v3504, 0.0
      %v4467 = vmax.f32 %v3507, 0.0
      %v4468 = vmax.f32 %v3512, 0.0
      %v4469 = vmax.f32 %v3515, 0.0
      %v4470 = vmax.f32 %v3520, 0.0
      %v4471 = vmax.f32 %v3523, 0.0
      %v4472 = vmax.f32 %v3528, 0.0
      %v4473 = vmax.f32 %v3531, 0.0
      %v4474 = vmax.f32 %v3536, 0.0
      %v4475 = vmax.f32 %v3539, 0.0
      %v4476 = vmax.f32 %v3544, 0.0
      %v4477 = vmax.f32 %v3547, 0.0
      %v4478 = vmax.f32 %v3552, 0.0
      %v4479 = vmax.f32 %v3555, 0.0
      %v4480 = vmax.f32 %v3560, 0.0
      %v4481 = vmax.f32 %v3563, 0.0
      %v4482 = vmax.f32 %v3568, 0.0
      %v4483 = vmax.f32 %v3571, 0.0
      %v4484 = vmax.f32 %v3576, 0.0
      %v4485 = vmax.f32 %v3579, 0.0
      %v4486 = vmax.f32 %v3584, 0.0
      %v4487 = vmax.f32 %v3587, 0.0
      %v4488 = vmax.f32 %v3592, 0.0
      %v4489 = vmax.f32 %v3595, 0.0
      %v4490 = vmax.f32 %v3600, 0.0
      %v4491 = vmax.f32 %v3603, 0.0
      %v4492 = vmax.f32 %v3608, 0.0
      %v4493 = vmax.f32 %v3611, 0.0
      %v4494 = vmax.f32 %v3616, 0.0
      %v4495 = vmax.f32 %v3619, 0.0
      %v4496 = vmax.f32 %v3624, 0.0
      %v4497 = vmax.f32 %v3627, 0.0
      %v4498 = vmax.f32 %v3632, 0.0
      %v4499 = vmax.f32 %v3635, 0.0
      %v4500 = vmax.f32 %v3640, 0.0
      %v4501 = vmax.f32 %v3643, 0.0
      %v4502 = vmax.f32 %v3648, 0.0
      %v4503 = vmax.f32 %v3651, 0.0
      %v4504 = vmax.f32 %v3656, 0.0
      %v4505 = vmax.f32 %v3659, 0.0
      %v4506 = vmax.f32 %v3664, 0.0
      %v4507 = vmax.f32 %v3667, 0.0
      %v4508 = vmax.f32 %v3672, 0.0
      %v4509 = vmax.f32 %v3675, 0.0
      %v4510 = vmax.f32 %v3680, 0.0
      %v4511 = vmax.f32 %v3683, 0.0
      %v4512 = vmax.f32 %v3688, 0.0
      %v4513 = vmax.f32 %v3691, 0.0
      %v4514 = vmax.f32 %v3696, 0.0
      %v4515 = vmax.f32 %v3699, 0.0
      %v4516 = vmax.f32 %v3704, 0.0
      %v4517 = vmax.f32 %v3707, 0.0
      %v4518 = vmax.f32 %v3712, 0.0
      %v4519 = vmax.f32 %v3715, 0.0
      %v4520 = vmax.f32 %v3720, 0.0
      %v4521 = vmax.f32 %v3723, 0.0
      %v4522 = vmax.f32 %v3728, 0.0
      %v4523 = vmax.f32 %v3731, 0.0
      %v4524 = vmax.f32 %v3736, 0.0
      %v4525 = vmax.f32 %v3739, 0.0
      %v4526 = vmax.f32 %v3744, 0.0
      %v4527 = vmax.f32 %v3747, 0.0
      %v4528 = vmax.f32 %v3752, 0.0
      %v4529 = vmax.f32 %v3755, 0.0
      %v4530 = vmax.f32 %v3760, 0.0
      %v4531 = vmax.f32 %v3763, 0.0
      %v4532 = vmax.f32 %v3768, 0.0
      %v4533 = vmax.f32 %v3771, 0.0
      %v4534 = vmax.f32 %v3776, 0.0
      %v4535 = vmax.f32 %v3779, 0.0
      %v4536 = vmax.f32 %v3784, 0.0
      %v4537 = vmax.f32 %v3787, 0.0
      %v4538 = vmax.f32 %v3792, 0.0
      %v4539 = vmax.f32 %v3795, 0.0
      %v4540 = vmax.f32 %v3800, 0.0
      %v4541 = vmax.f32 %v3803, 0.0
      %v4542 = vmax.f32 %v3808, 0.0
      %v4543 = vmax.f32 %v3811, 0.0
      %v4544 = vmax.f32 %v3816, 0.0
      %v4545 = vmax.f32 %v3819, 0.0
      %v4546 = vmax.f32 %v3824, 0.0
      %v4547 = vmax.f32 %v3827, 0.0
      %v4548 = vmax.f32 %v3832, 0.0
      %v4549 = vmax.f32 %v3835, 0.0
      %v4550 = vmax.f32 %v3840, 0.0
      %v4551 = vmax.f32 %v3843, 0.0
      %v4552 = vmax.f32 %v3848, 0.0
      %v4553 = vmax.f32 %v3851, 0.0
      %v4554 = vmax.f32 %v3856, 0.0
      %v4555 = vmax.f32 %v3859, 0.0
      %v4556 = vmax.f32 %v3864, 0.0
      %v4557 = vmax.f32 %v3867, 0.0
      %v4558 = vmax.f32 %v3872, 0.0
      %v4559 = vmax.f32 %v3875, 0.0
      %v4560 = vmax.f32 %v3880, 0.0
      %v4561 = vmax.f32 %v3883, 0.0
      %v4562 = vmax.f32 %v3888, 0.0
      %v4563 = vmax.f32 %v3891, 0.0
      %v4564 = vmax.f32 %v3896, 0.0
      %v4565 = vmax.f32 %v3899, 0.0
      %v4566 = vmax.f32 %v3904, 0.0
      %v4567 = vmax.f32 %v3907, 0.0
      %v4568 = vmax.f32 %v3912, 0.0
      %v4569 = vmax.f32 %v3915, 0.0
      %v4570 = vmax.f32 %v3920, 0.0
      %v4571 = vmax.f32 %v3923, 0.0
      %v4572 = vmax.f32 %v3928, 0.0
      %v4573 = vmax.f32 %v3931, 0.0
      %v4574 = vmax.f32 %v3936, 0.0
      %v4575 = vmax.f32 %v3939, 0.0
      %v4576 = vmax.f32 %v3944, 0.0
      %v4577 = vmax.f32 %v3947, 0.0
      %v4578 = vmax.f32 %v3952, 0.0
      %v4579 = vmax.f32 %v3955, 0.0
      %v4580 = vmax.f32 %v3960, 0.0
      %v4581 = vmax.f32 %v3963, 0.0
      %v4582 = vmax.f32 %v3968, 0.0
      %v4583 = vmax.f32 %v3971, 0.0
      %v4584 = vmax.f32 %v3976, 0.0
      %v4585 = vmax.f32 %v3979, 0.0
      %v4586 = vmax.f32 %v3984, 0.0
      %v4587 = vmax.f32 %v3987, 0.0
      %v4588 = vmax.f32 %v3992, 0.0
      %v4589 = vmax.f32 %v3995, 0.0
      %v4590 = vmax.f32 %v4000, 0.0
      %v4591 = vmax.f32 %v4003, 0.0
      %v4592 = vmax.f32 %v4008, 0.0
      %v4593 = vmax.f32 %v4011, 0.0
      %v4594 = vmax.f32 %v4016, 0.0
      %v4595 = vmax.f32 %v4019, 0.0
      %v4596 = vmax.f32 %v4024, 0.0
      %v4597 = vmax.f32 %v4027, 0.0
      %v4598 = vmax.f32 %v4032, 0.0
      %v4599 = vmax.f32 %v4035, 0.0
      %v4600 = vmax.f32 %v4040, 0.0
      %v4601 = vmax.f32 %v4043, 0.0
      %v4602 = vmax.f32 %v4048, 0.0
      %v4603 = vmax.f32 %v4051, 0.0
      %v4604 = vmax.f32 %v4056, 0.0
      %v4605 = vmax.f32 %v4059, 0.0
      %v4606 = vmax.f32 %v4064, 0.0
      %v4607 = vmax.f32 %v4067, 0.0
      %v4608 = vmax.f32 %v4072, 0.0
      %v4609 = vmax.f32 %v4075, 0.0
      %v4610 = vmax.f32 %v4080, 0.0
      %v4611 = vmax.f32 %v4083, 0.0
      %v4612 = vmax.f32 %v4088, 0.0
      %v4613 = vmax.f32 %v4091, 0.0
      %v4614 = vmax.f32 %v4096, 0.0
      %v4615 = vmax.f32 %v4099, 0.0
      %v4616 = vmax.f32 %v4104, 0.0
      %v4617 = vmax.f32 %v4107, 0.0
      %v4618 = vmax.f32 %v4112, 0.0
      %v4619 = vmax.f32 %v4115, 0.0
      %v4620 = vmax.f32 %v4120, 0.0
      %v4621 = vmax.f32 %v4123, 0.0
      %v4622 = vmax.f32 %v4128, 0.0
      %v4623 = vmax.f32 %v4131, 0.0
      %v4624 = vmax.f32 %v4136, 0.0
      %v4625 = vmax.f32 %v4139, 0.0
      %v4626 = vmax.f32 %v4144, 0.0
      %v4627 = vmax.f32 %v4147, 0.0
      %v4628 = vmax.f32 %v4152, 0.0
      %v4629 = vmax.f32 %v4155, 0.0
      %v4630 = vmax.f32 %v4160, 0.0
      %v4631 = vmax.f32 %v4163, 0.0
      %v4632 = vmax.f32 %v4168, 0.0
      %v4633 = vmax.f32 %v4171, 0.0
      %v4634 = vmax.f32 %v4176, 0.0
      %v4635 = vmax.f32 %v4179, 0.0
      %v4636 = vmax.f32 %v4184, 0.0
      %v4637 = vmax.f32 %v4187, 0.0
      %v4638 = vmax.f32 %v4192, 0.0
      %v4639 = vmax.f32 %v4195, 0.0
      %v4640 = vmax.f32 %v4200, 0.0
      %v4641 = vmax.f32 %v4203, 0.0
      %v4642 = vmax.f32 %v4208, 0.0
      %v4643 = vmax.f32 %v4211, 0.0
      %v4644 = vmax.f32 %v4216, 0.0
      %v4645 = vmax.f32 %v4219, 0.0
      %v4646 = vmax.f32 %v4224, 0.0
      %v4647 = vmax.f32 %v4227, 0.0
      %v4648 = vmax.f32 %v4232, 0.0
      %v4649 = vmax.f32 %v4235, 0.0
      %v4650 = vmax.f32 %v4240, 0.0
      %v4651 = vmax.f32 %v4243, 0.0
      %v4652 = vmax.f32 %v4248, 0.0
      %v4653 = vmax.f32 %v4251, 0.0
      %v4654 = vmax.f32 %v4256, 0.0
      %v4655 = vmax.f32 %v4259, 0.0
      %v4656 = vmax.f32 %v4264, 0.0
      %v4657 = vmax.f32 %v4267, 0.0
      %v4658 = vmax.f32 %v4272, 0.0
      %v4659 = vmax.f32 %v4275, 0.0
      %v4660 = vmax.f32 %v4280, 0.0
      %v4661 = vmax.f32 %v4283, 0.0
      %v4662 = vmax.f32 %v4288, 0.0
      %v4663 = vmax.f32 %v4291, 0.0
      %v4664 = vmax.f32 %v4296, 0.0
      %v4665 = vmax.f32 %v4299, 0.0
      %v4666 = vmax.f32 %v4304, 0.0
      %v4667 = vmax.f32 %v4307, 0.0
      %v4668 = vmax.f32 %v4312, 0.0
      %v4669 = vmax.f32 %v4315, 0.0
      %v4670 = vmax.f32 %v4320, 0.0
      %v4671 = vmax.f32 %v4323, 0.0
      %v4672 = vmax.f32 %v4328, 0.0
      %v4673 = vmax.f32 %v4331, 0.0
      %v4674 = vmax.f32 %v4336, 0.0
      %v4675 = vmax.f32 %v4339, 0.0
      %v4676 = vmax.f32 %v4344, 0.0
      %v4677 = vmax.f32 %v4347, 0.0
      %v4678 = vmax.f32 %v4352, 0.0
      %v4679 = vmax.f32 %v4355, 0.0
      %v4680 = vmax.f32 %v4360, 0.0
      %v4681 = vmax.f32 %v4363, 0.0
      %v4682 = vmax.f32 %v4368, 0.0
      %v4683 = vmax.f32 %v4371, 0.0
      %v4684 = vmax.f32 %v4376, 0.0
      %v4685 = vmax.f32 %v4379, 0.0
      %v4686 = vmax.f32 %v4384, 0.0
      %v4687 = vmax.f32 %v4387, 0.0
      %v4688 = vmax.f32 %v4392, 0.0
      %v4689 = vmax.f32 %v4395, 0.0
      %v4690 = vmax.f32 %v4400, 0.0
      %v4691 = vmax.f32 %v4403, 0.0
      %v4692 = vmax.f32 %v4408, 0.0
      %v4693 = vmax.f32 %v4411, 0.0
      %v4694 = vmax.f32 %v4416, 0.0
      %v4695 = vmax.f32 %v4419, 0.0
      %v4696 = vmax.f32 %v4424, 0.0
      %v4697 = vmax.f32 %v4427, 0.0
      %v4698 = vmax.f32 %v4432, 0.0
      %v4699 = vmax.f32 %v4435, 0.0
      %v4700 = vmax.f32 %v4440, 0.0
      %v4701 = vmax.f32 %v4443, 0.0
      %v4702 = vld [vmem:[%s245] sm:$0xff]
      %v4703 = vld [vmem:[%s245 + $0x8] sm:$0xff]
      %v4704 = vld [vmem:[%s245 + $0x10] sm:$0xff]
      %v4705 = vld [vmem:[%s245 + $0x18] sm:$0xff]
      %v4706 = vsub.f32 %v4702, 1.0
      %v4707 = vsub.f32 %v4703, 1.0
      %v4708 = vsub.f32 %v4704, 1.0
      %v4709 = vsub.f32 %v4705, 1.0
      %v4710 = vmul.f32 %v4706, 1e+30
      %v4711 = vmul.f32 %v4707, 1e+30
      %v4712 = vmul.f32 %v4708, 1e+30
      %v4713 = vmul.f32 %v4709, 1e+30
      %v4714 = vlaneseq
      %v4715 = vshrl.u32 %v4714, 7
      %v4716 = vsub.s32 0, %v4715
      %v4717 = vrot.slane %v4710, %v4716
      %4719 = vbcast.lane.b32.xlu0 %v4717, 256
      %v4720 = vpop.permute.xlu0 %4719
      %s4722 = sor.u32 256, 8
      %4723 = vbcast.lane.b32.xlu0 %v4717, %s4722
      %v4724 = vpop.permute.xlu0 %4723
      %s4726 = sor.u32 256, 16
      %4727 = vbcast.lane.b32.xlu0 %v4717, %s4726
      %v4728 = vpop.permute.xlu0 %4727
      %s4730 = sor.u32 256, 24
      %4731 = vbcast.lane.b32.xlu0 %v4717, %s4730
      %v4732 = vpop.permute.xlu0 %4731
      %s4734 = sor.u32 256, 32
      %4735 = vbcast.lane.b32.xlu0 %v4717, %s4734
      %v4736 = vpop.permute.xlu0 %4735
      %s4738 = sor.u32 256, 40
      %4739 = vbcast.lane.b32.xlu0 %v4717, %s4738
      %v4740 = vpop.permute.xlu0 %4739
      %s4742 = sor.u32 256, 48
      %4743 = vbcast.lane.b32.xlu0 %v4717, %s4742
      %v4744 = vpop.permute.xlu0 %4743
      %s4746 = sor.u32 256, 56
      %4747 = vbcast.lane.b32.xlu0 %v4717, %s4746
      %v4748 = vpop.permute.xlu0 %4747
      %v4749 = vlaneseq
      %v4750 = vshrl.u32 %v4749, 7
      %v4751 = vsub.s32 1, %v4750
      %v4752 = vrot.slane %v4710, %v4751
      %4754 = vbcast.lane.b32.xlu0 %v4752, 256
      %v4755 = vpop.permute.xlu0 %4754
      %s4757 = sor.u32 256, 8
      %4758 = vbcast.lane.b32.xlu0 %v4752, %s4757
      %v4759 = vpop.permute.xlu0 %4758
      %s4761 = sor.u32 256, 16
      %4762 = vbcast.lane.b32.xlu0 %v4752, %s4761
      %v4763 = vpop.permute.xlu0 %4762
      %s4765 = sor.u32 256, 24
      %4766 = vbcast.lane.b32.xlu0 %v4752, %s4765
      %v4767 = vpop.permute.xlu0 %4766
      %s4769 = sor.u32 256, 32
      %4770 = vbcast.lane.b32.xlu0 %v4752, %s4769
      %v4771 = vpop.permute.xlu0 %4770
      %s4773 = sor.u32 256, 40
      %4774 = vbcast.lane.b32.xlu0 %v4752, %s4773
      %v4775 = vpop.permute.xlu0 %4774
      %s4777 = sor.u32 256, 48
      %4778 = vbcast.lane.b32.xlu0 %v4752, %s4777
      %v4779 = vpop.permute.xlu0 %4778
      %s4781 = sor.u32 256, 56
      %4782 = vbcast.lane.b32.xlu0 %v4752, %s4781
      %v4783 = vpop.permute.xlu0 %4782
      %v4784 = vlaneseq
      %v4785 = vshrl.u32 %v4784, 7
      %v4786 = vsub.s32 2, %v4785
      %v4787 = vrot.slane %v4710, %v4786
      %4789 = vbcast.lane.b32.xlu0 %v4787, 256
      %v4790 = vpop.permute.xlu0 %4789
      %s4792 = sor.u32 256, 8
      %4793 = vbcast.lane.b32.xlu0 %v4787, %s4792
      %v4794 = vpop.permute.xlu0 %4793
      %s4796 = sor.u32 256, 16
      %4797 = vbcast.lane.b32.xlu0 %v4787, %s4796
      %v4798 = vpop.permute.xlu0 %4797
      %s4800 = sor.u32 256, 24
      %4801 = vbcast.lane.b32.xlu0 %v4787, %s4800
      %v4802 = vpop.permute.xlu0 %4801
      %s4804 = sor.u32 256, 32
      %4805 = vbcast.lane.b32.xlu0 %v4787, %s4804
      %v4806 = vpop.permute.xlu0 %4805
      %s4808 = sor.u32 256, 40
      %4809 = vbcast.lane.b32.xlu0 %v4787, %s4808
      %v4810 = vpop.permute.xlu0 %4809
      %s4812 = sor.u32 256, 48
      %4813 = vbcast.lane.b32.xlu0 %v4787, %s4812
      %v4814 = vpop.permute.xlu0 %4813
      %s4816 = sor.u32 256, 56
      %4817 = vbcast.lane.b32.xlu0 %v4787, %s4816
      %v4818 = vpop.permute.xlu0 %4817
      %v4819 = vlaneseq
      %v4820 = vshrl.u32 %v4819, 7
      %v4821 = vsub.s32 3, %v4820
      %v4822 = vrot.slane %v4710, %v4821
      %4824 = vbcast.lane.b32.xlu0 %v4822, 256
      %v4825 = vpop.permute.xlu0 %4824
      %s4827 = sor.u32 256, 8
      %4828 = vbcast.lane.b32.xlu0 %v4822, %s4827
      %v4829 = vpop.permute.xlu0 %4828
      %s4831 = sor.u32 256, 16
      %4832 = vbcast.lane.b32.xlu0 %v4822, %s4831
      %v4833 = vpop.permute.xlu0 %4832
      %s4835 = sor.u32 256, 24
      %4836 = vbcast.lane.b32.xlu0 %v4822, %s4835
      %v4837 = vpop.permute.xlu0 %4836
      %s4839 = sor.u32 256, 32
      %4840 = vbcast.lane.b32.xlu0 %v4822, %s4839
      %v4841 = vpop.permute.xlu0 %4840
      %s4843 = sor.u32 256, 40
      %4844 = vbcast.lane.b32.xlu0 %v4822, %s4843
      %v4845 = vpop.permute.xlu0 %4844
      %s4847 = sor.u32 256, 48
      %4848 = vbcast.lane.b32.xlu0 %v4822, %s4847
      %v4849 = vpop.permute.xlu0 %4848
      %s4851 = sor.u32 256, 56
      %4852 = vbcast.lane.b32.xlu0 %v4822, %s4851
      %v4853 = vpop.permute.xlu0 %4852
      %v4854 = vlaneseq
      %v4855 = vshrl.u32 %v4854, 7
      %v4856 = vsub.s32 4, %v4855
      %v4857 = vrot.slane %v4710, %v4856
      %4859 = vbcast.lane.b32.xlu0 %v4857, 256
      %v4860 = vpop.permute.xlu0 %4859
      %s4862 = sor.u32 256, 8
      %4863 = vbcast.lane.b32.xlu0 %v4857, %s4862
      %v4864 = vpop.permute.xlu0 %4863
      %s4866 = sor.u32 256, 16
      %4867 = vbcast.lane.b32.xlu0 %v4857, %s4866
      %v4868 = vpop.permute.xlu0 %4867
      %s4870 = sor.u32 256, 24
      %4871 = vbcast.lane.b32.xlu0 %v4857, %s4870
      %v4872 = vpop.permute.xlu0 %4871
      %s4874 = sor.u32 256, 32
      %4875 = vbcast.lane.b32.xlu0 %v4857, %s4874
      %v4876 = vpop.permute.xlu0 %4875
      %s4878 = sor.u32 256, 40
      %4879 = vbcast.lane.b32.xlu0 %v4857, %s4878
      %v4880 = vpop.permute.xlu0 %4879
      %s4882 = sor.u32 256, 48
      %4883 = vbcast.lane.b32.xlu0 %v4857, %s4882
      %v4884 = vpop.permute.xlu0 %4883
      %s4886 = sor.u32 256, 56
      %4887 = vbcast.lane.b32.xlu0 %v4857, %s4886
      %v4888 = vpop.permute.xlu0 %4887
      %v4889 = vlaneseq
      %v4890 = vshrl.u32 %v4889, 7
      %v4891 = vsub.s32 5, %v4890
      %v4892 = vrot.slane %v4710, %v4891
      %4894 = vbcast.lane.b32.xlu0 %v4892, 256
      %v4895 = vpop.permute.xlu0 %4894
      %s4897 = sor.u32 256, 8
      %4898 = vbcast.lane.b32.xlu0 %v4892, %s4897
      %v4899 = vpop.permute.xlu0 %4898
      %s4901 = sor.u32 256, 16
      %4902 = vbcast.lane.b32.xlu0 %v4892, %s4901
      %v4903 = vpop.permute.xlu0 %4902
      %s4905 = sor.u32 256, 24
      %4906 = vbcast.lane.b32.xlu0 %v4892, %s4905
      %v4907 = vpop.permute.xlu0 %4906
      %s4909 = sor.u32 256, 32
      %4910 = vbcast.lane.b32.xlu0 %v4892, %s4909
      %v4911 = vpop.permute.xlu0 %4910
      %s4913 = sor.u32 256, 40
      %4914 = vbcast.lane.b32.xlu0 %v4892, %s4913
      %v4915 = vpop.permute.xlu0 %4914
      %s4917 = sor.u32 256, 48
      %4918 = vbcast.lane.b32.xlu0 %v4892, %s4917
      %v4919 = vpop.permute.xlu0 %4918
      %s4921 = sor.u32 256, 56
      %4922 = vbcast.lane.b32.xlu0 %v4892, %s4921
      %v4923 = vpop.permute.xlu0 %4922
      %v4924 = vlaneseq
      %v4925 = vshrl.u32 %v4924, 7
      %v4926 = vsub.s32 6, %v4925
      %v4927 = vrot.slane %v4710, %v4926
      %4929 = vbcast.lane.b32.xlu0 %v4927, 256
      %v4930 = vpop.permute.xlu0 %4929
      %s4932 = sor.u32 256, 8
      %4933 = vbcast.lane.b32.xlu0 %v4927, %s4932
      %v4934 = vpop.permute.xlu0 %4933
      %s4936 = sor.u32 256, 16
      %4937 = vbcast.lane.b32.xlu0 %v4927, %s4936
      %v4938 = vpop.permute.xlu0 %4937
      %s4940 = sor.u32 256, 24
      %4941 = vbcast.lane.b32.xlu0 %v4927, %s4940
      %v4942 = vpop.permute.xlu0 %4941
      %s4944 = sor.u32 256, 32
      %4945 = vbcast.lane.b32.xlu0 %v4927, %s4944
      %v4946 = vpop.permute.xlu0 %4945
      %s4948 = sor.u32 256, 40
      %4949 = vbcast.lane.b32.xlu0 %v4927, %s4948
      %v4950 = vpop.permute.xlu0 %4949
      %s4952 = sor.u32 256, 48
      %4953 = vbcast.lane.b32.xlu0 %v4927, %s4952
      %v4954 = vpop.permute.xlu0 %4953
      %s4956 = sor.u32 256, 56
      %4957 = vbcast.lane.b32.xlu0 %v4927, %s4956
      %v4958 = vpop.permute.xlu0 %4957
      %v4959 = vlaneseq
      %v4960 = vshrl.u32 %v4959, 7
      %v4961 = vsub.s32 7, %v4960
      %v4962 = vrot.slane %v4710, %v4961
      %4964 = vbcast.lane.b32.xlu0 %v4962, 256
      %v4965 = vpop.permute.xlu0 %4964
      %s4967 = sor.u32 256, 8
      %4968 = vbcast.lane.b32.xlu0 %v4962, %s4967
      %v4969 = vpop.permute.xlu0 %4968
      %s4971 = sor.u32 256, 16
      %4972 = vbcast.lane.b32.xlu0 %v4962, %s4971
      %v4973 = vpop.permute.xlu0 %4972
      %s4975 = sor.u32 256, 24
      %4976 = vbcast.lane.b32.xlu0 %v4962, %s4975
      %v4977 = vpop.permute.xlu0 %4976
      %s4979 = sor.u32 256, 32
      %4980 = vbcast.lane.b32.xlu0 %v4962, %s4979
      %v4981 = vpop.permute.xlu0 %4980
      %s4983 = sor.u32 256, 40
      %4984 = vbcast.lane.b32.xlu0 %v4962, %s4983
      %v4985 = vpop.permute.xlu0 %4984
      %s4987 = sor.u32 256, 48
      %4988 = vbcast.lane.b32.xlu0 %v4962, %s4987
      %v4989 = vpop.permute.xlu0 %4988
      %s4991 = sor.u32 256, 56
      %4992 = vbcast.lane.b32.xlu0 %v4962, %s4991
      %v4993 = vpop.permute.xlu0 %4992
      %v4994 = vlaneseq
      %v4995 = vshrl.u32 %v4994, 7
      %v4996 = vsub.s32 0, %v4995
      %v4997 = vrot.slane %v4711, %v4996
      %4999 = vbcast.lane.b32.xlu0 %v4997, 256
      %v5000 = vpop.permute.xlu0 %4999
      %s5002 = sor.u32 256, 8
      %5003 = vbcast.lane.b32.xlu0 %v4997, %s5002
      %v5004 = vpop.permute.xlu0 %5003
      %s5006 = sor.u32 256, 16
      %5007 = vbcast.lane.b32.xlu0 %v4997, %s5006
      %v5008 = vpop.permute.xlu0 %5007
      %s5010 = sor.u32 256, 24
      %5011 = vbcast.lane.b32.xlu0 %v4997, %s5010
      %v5012 = vpop.permute.xlu0 %5011
      %s5014 = sor.u32 256, 32
      %5015 = vbcast.lane.b32.xlu0 %v4997, %s5014
      %v5016 = vpop.permute.xlu0 %5015
      %s5018 = sor.u32 256, 40
      %5019 = vbcast.lane.b32.xlu0 %v4997, %s5018
      %v5020 = vpop.permute.xlu0 %5019
      %s5022 = sor.u32 256, 48
      %5023 = vbcast.lane.b32.xlu0 %v4997, %s5022
      %v5024 = vpop.permute.xlu0 %5023
      %s5026 = sor.u32 256, 56
      %5027 = vbcast.lane.b32.xlu0 %v4997, %s5026
      %v5028 = vpop.permute.xlu0 %5027
      %v5029 = vlaneseq
      %v5030 = vshrl.u32 %v5029, 7
      %v5031 = vsub.s32 1, %v5030
      %v5032 = vrot.slane %v4711, %v5031
      %5034 = vbcast.lane.b32.xlu0 %v5032, 256
      %v5035 = vpop.permute.xlu0 %5034
      %s5037 = sor.u32 256, 8
      %5038 = vbcast.lane.b32.xlu0 %v5032, %s5037
      %v5039 = vpop.permute.xlu0 %5038
      %s5041 = sor.u32 256, 16
      %5042 = vbcast.lane.b32.xlu0 %v5032, %s5041
      %v5043 = vpop.permute.xlu0 %5042
      %s5045 = sor.u32 256, 24
      %5046 = vbcast.lane.b32.xlu0 %v5032, %s5045
      %v5047 = vpop.permute.xlu0 %5046
      %s5049 = sor.u32 256, 32
      %5050 = vbcast.lane.b32.xlu0 %v5032, %s5049
      %v5051 = vpop.permute.xlu0 %5050
      %s5053 = sor.u32 256, 40
      %5054 = vbcast.lane.b32.xlu0 %v5032, %s5053
      %v5055 = vpop.permute.xlu0 %5054
      %s5057 = sor.u32 256, 48
      %5058 = vbcast.lane.b32.xlu0 %v5032, %s5057
      %v5059 = vpop.permute.xlu0 %5058
      %s5061 = sor.u32 256, 56
      %5062 = vbcast.lane.b32.xlu0 %v5032, %s5061
      %v5063 = vpop.permute.xlu0 %5062
      %v5064 = vlaneseq
      %v5065 = vshrl.u32 %v5064, 7
      %v5066 = vsub.s32 2, %v5065
      %v5067 = vrot.slane %v4711, %v5066
      %5069 = vbcast.lane.b32.xlu0 %v5067, 256
      %v5070 = vpop.permute.xlu0 %5069
      %s5072 = sor.u32 256, 8
      %5073 = vbcast.lane.b32.xlu0 %v5067, %s5072
      %v5074 = vpop.permute.xlu0 %5073
      %s5076 = sor.u32 256, 16
      %5077 = vbcast.lane.b32.xlu0 %v5067, %s5076
      %v5078 = vpop.permute.xlu0 %5077
      %s5080 = sor.u32 256, 24
      %5081 = vbcast.lane.b32.xlu0 %v5067, %s5080
      %v5082 = vpop.permute.xlu0 %5081
      %s5084 = sor.u32 256, 32
      %5085 = vbcast.lane.b32.xlu0 %v5067, %s5084
      %v5086 = vpop.permute.xlu0 %5085
      %s5088 = sor.u32 256, 40
      %5089 = vbcast.lane.b32.xlu0 %v5067, %s5088
      %v5090 = vpop.permute.xlu0 %5089
      %s5092 = sor.u32 256, 48
      %5093 = vbcast.lane.b32.xlu0 %v5067, %s5092
      %v5094 = vpop.permute.xlu0 %5093
      %s5096 = sor.u32 256, 56
      %5097 = vbcast.lane.b32.xlu0 %v5067, %s5096
      %v5098 = vpop.permute.xlu0 %5097
      %v5099 = vlaneseq
      %v5100 = vshrl.u32 %v5099, 7
      %v5101 = vsub.s32 3, %v5100
      %v5102 = vrot.slane %v4711, %v5101
      %5104 = vbcast.lane.b32.xlu0 %v5102, 256
      %v5105 = vpop.permute.xlu0 %5104
      %s5107 = sor.u32 256, 8
      %5108 = vbcast.lane.b32.xlu0 %v5102, %s5107
      %v5109 = vpop.permute.xlu0 %5108
      %s5111 = sor.u32 256, 16
      %5112 = vbcast.lane.b32.xlu0 %v5102, %s5111
      %v5113 = vpop.permute.xlu0 %5112
      %s5115 = sor.u32 256, 24
      %5116 = vbcast.lane.b32.xlu0 %v5102, %s5115
      %v5117 = vpop.permute.xlu0 %5116
      %s5119 = sor.u32 256, 32
      %5120 = vbcast.lane.b32.xlu0 %v5102, %s5119
      %v5121 = vpop.permute.xlu0 %5120
      %s5123 = sor.u32 256, 40
      %5124 = vbcast.lane.b32.xlu0 %v5102, %s5123
      %v5125 = vpop.permute.xlu0 %5124
      %s5127 = sor.u32 256, 48
      %5128 = vbcast.lane.b32.xlu0 %v5102, %s5127
      %v5129 = vpop.permute.xlu0 %5128
      %s5131 = sor.u32 256, 56
      %5132 = vbcast.lane.b32.xlu0 %v5102, %s5131
      %v5133 = vpop.permute.xlu0 %5132
      %v5134 = vlaneseq
      %v5135 = vshrl.u32 %v5134, 7
      %v5136 = vsub.s32 4, %v5135
      %v5137 = vrot.slane %v4711, %v5136
      %5139 = vbcast.lane.b32.xlu0 %v5137, 256
      %v5140 = vpop.permute.xlu0 %5139
      %s5142 = sor.u32 256, 8
      %5143 = vbcast.lane.b32.xlu0 %v5137, %s5142
      %v5144 = vpop.permute.xlu0 %5143
      %s5146 = sor.u32 256, 16
      %5147 = vbcast.lane.b32.xlu0 %v5137, %s5146
      %v5148 = vpop.permute.xlu0 %5147
      %s5150 = sor.u32 256, 24
      %5151 = vbcast.lane.b32.xlu0 %v5137, %s5150
      %v5152 = vpop.permute.xlu0 %5151
      %s5154 = sor.u32 256, 32
      %5155 = vbcast.lane.b32.xlu0 %v5137, %s5154
      %v5156 = vpop.permute.xlu0 %5155
      %s5158 = sor.u32 256, 40
      %5159 = vbcast.lane.b32.xlu0 %v5137, %s5158
      %v5160 = vpop.permute.xlu0 %5159
      %s5162 = sor.u32 256, 48
      %5163 = vbcast.lane.b32.xlu0 %v5137, %s5162
      %v5164 = vpop.permute.xlu0 %5163
      %s5166 = sor.u32 256, 56
      %5167 = vbcast.lane.b32.xlu0 %v5137, %s5166
      %v5168 = vpop.permute.xlu0 %5167
      %v5169 = vlaneseq
      %v5170 = vshrl.u32 %v5169, 7
      %v5171 = vsub.s32 5, %v5170
      %v5172 = vrot.slane %v4711, %v5171
      %5174 = vbcast.lane.b32.xlu0 %v5172, 256
      %v5175 = vpop.permute.xlu0 %5174
      %s5177 = sor.u32 256, 8
      %5178 = vbcast.lane.b32.xlu0 %v5172, %s5177
      %v5179 = vpop.permute.xlu0 %5178
      %s5181 = sor.u32 256, 16
      %5182 = vbcast.lane.b32.xlu0 %v5172, %s5181
      %v5183 = vpop.permute.xlu0 %5182
      %s5185 = sor.u32 256, 24
      %5186 = vbcast.lane.b32.xlu0 %v5172, %s5185
      %v5187 = vpop.permute.xlu0 %5186
      %s5189 = sor.u32 256, 32
      %5190 = vbcast.lane.b32.xlu0 %v5172, %s5189
      %v5191 = vpop.permute.xlu0 %5190
      %s5193 = sor.u32 256, 40
      %5194 = vbcast.lane.b32.xlu0 %v5172, %s5193
      %v5195 = vpop.permute.xlu0 %5194
      %s5197 = sor.u32 256, 48
      %5198 = vbcast.lane.b32.xlu0 %v5172, %s5197
      %v5199 = vpop.permute.xlu0 %5198
      %s5201 = sor.u32 256, 56
      %5202 = vbcast.lane.b32.xlu0 %v5172, %s5201
      %v5203 = vpop.permute.xlu0 %5202
      %v5204 = vlaneseq
      %v5205 = vshrl.u32 %v5204, 7
      %v5206 = vsub.s32 6, %v5205
      %v5207 = vrot.slane %v4711, %v5206
      %5209 = vbcast.lane.b32.xlu0 %v5207, 256
      %v5210 = vpop.permute.xlu0 %5209
      %s5212 = sor.u32 256, 8
      %5213 = vbcast.lane.b32.xlu0 %v5207, %s5212
      %v5214 = vpop.permute.xlu0 %5213
      %s5216 = sor.u32 256, 16
      %5217 = vbcast.lane.b32.xlu0 %v5207, %s5216
      %v5218 = vpop.permute.xlu0 %5217
      %s5220 = sor.u32 256, 24
      %5221 = vbcast.lane.b32.xlu0 %v5207, %s5220
      %v5222 = vpop.permute.xlu0 %5221
      %s5224 = sor.u32 256, 32
      %5225 = vbcast.lane.b32.xlu0 %v5207, %s5224
      %v5226 = vpop.permute.xlu0 %5225
      %s5228 = sor.u32 256, 40
      %5229 = vbcast.lane.b32.xlu0 %v5207, %s5228
      %v5230 = vpop.permute.xlu0 %5229
      %s5232 = sor.u32 256, 48
      %5233 = vbcast.lane.b32.xlu0 %v5207, %s5232
      %v5234 = vpop.permute.xlu0 %5233
      %s5236 = sor.u32 256, 56
      %5237 = vbcast.lane.b32.xlu0 %v5207, %s5236
      %v5238 = vpop.permute.xlu0 %5237
      %v5239 = vlaneseq
      %v5240 = vshrl.u32 %v5239, 7
      %v5241 = vsub.s32 7, %v5240
      %v5242 = vrot.slane %v4711, %v5241
      %5244 = vbcast.lane.b32.xlu0 %v5242, 256
      %v5245 = vpop.permute.xlu0 %5244
      %s5247 = sor.u32 256, 8
      %5248 = vbcast.lane.b32.xlu0 %v5242, %s5247
      %v5249 = vpop.permute.xlu0 %5248
      %s5251 = sor.u32 256, 16
      %5252 = vbcast.lane.b32.xlu0 %v5242, %s5251
      %v5253 = vpop.permute.xlu0 %5252
      %s5255 = sor.u32 256, 24
      %5256 = vbcast.lane.b32.xlu0 %v5242, %s5255
      %v5257 = vpop.permute.xlu0 %5256
      %s5259 = sor.u32 256, 32
      %5260 = vbcast.lane.b32.xlu0 %v5242, %s5259
      %v5261 = vpop.permute.xlu0 %5260
      %s5263 = sor.u32 256, 40
      %5264 = vbcast.lane.b32.xlu0 %v5242, %s5263
      %v5265 = vpop.permute.xlu0 %5264
      %s5267 = sor.u32 256, 48
      %5268 = vbcast.lane.b32.xlu0 %v5242, %s5267
      %v5269 = vpop.permute.xlu0 %5268
      %s5271 = sor.u32 256, 56
      %5272 = vbcast.lane.b32.xlu0 %v5242, %s5271
      %v5273 = vpop.permute.xlu0 %5272
      %v5274 = vlaneseq
      %v5275 = vshrl.u32 %v5274, 7
      %v5276 = vsub.s32 0, %v5275
      %v5277 = vrot.slane %v4712, %v5276
      %5279 = vbcast.lane.b32.xlu0 %v5277, 256
      %v5280 = vpop.permute.xlu0 %5279
      %s5282 = sor.u32 256, 8
      %5283 = vbcast.lane.b32.xlu0 %v5277, %s5282
      %v5284 = vpop.permute.xlu0 %5283
      %s5286 = sor.u32 256, 16
      %5287 = vbcast.lane.b32.xlu0 %v5277, %s5286
      %v5288 = vpop.permute.xlu0 %5287
      %s5290 = sor.u32 256, 24
      %5291 = vbcast.lane.b32.xlu0 %v5277, %s5290
      %v5292 = vpop.permute.xlu0 %5291
      %s5294 = sor.u32 256, 32
      %5295 = vbcast.lane.b32.xlu0 %v5277, %s5294
      %v5296 = vpop.permute.xlu0 %5295
      %s5298 = sor.u32 256, 40
      %5299 = vbcast.lane.b32.xlu0 %v5277, %s5298
      %v5300 = vpop.permute.xlu0 %5299
      %s5302 = sor.u32 256, 48
      %5303 = vbcast.lane.b32.xlu0 %v5277, %s5302
      %v5304 = vpop.permute.xlu0 %5303
      %s5306 = sor.u32 256, 56
      %5307 = vbcast.lane.b32.xlu0 %v5277, %s5306
      %v5308 = vpop.permute.xlu0 %5307
      %v5309 = vlaneseq
      %v5310 = vshrl.u32 %v5309, 7
      %v5311 = vsub.s32 1, %v5310
      %v5312 = vrot.slane %v4712, %v5311
      %5314 = vbcast.lane.b32.xlu0 %v5312, 256
      %v5315 = vpop.permute.xlu0 %5314
      %s5317 = sor.u32 256, 8
      %5318 = vbcast.lane.b32.xlu0 %v5312, %s5317
      %v5319 = vpop.permute.xlu0 %5318
      %s5321 = sor.u32 256, 16
      %5322 = vbcast.lane.b32.xlu0 %v5312, %s5321
      %v5323 = vpop.permute.xlu0 %5322
      %s5325 = sor.u32 256, 24
      %5326 = vbcast.lane.b32.xlu0 %v5312, %s5325
      %v5327 = vpop.permute.xlu0 %5326
      %s5329 = sor.u32 256, 32
      %5330 = vbcast.lane.b32.xlu0 %v5312, %s5329
      %v5331 = vpop.permute.xlu0 %5330
      %s5333 = sor.u32 256, 40
      %5334 = vbcast.lane.b32.xlu0 %v5312, %s5333
      %v5335 = vpop.permute.xlu0 %5334
      %s5337 = sor.u32 256, 48
      %5338 = vbcast.lane.b32.xlu0 %v5312, %s5337
      %v5339 = vpop.permute.xlu0 %5338
      %s5341 = sor.u32 256, 56
      %5342 = vbcast.lane.b32.xlu0 %v5312, %s5341
      %v5343 = vpop.permute.xlu0 %5342
      %v5344 = vlaneseq
      %v5345 = vshrl.u32 %v5344, 7
      %v5346 = vsub.s32 2, %v5345
      %v5347 = vrot.slane %v4712, %v5346
      %5349 = vbcast.lane.b32.xlu0 %v5347, 256
      %v5350 = vpop.permute.xlu0 %5349
      %s5352 = sor.u32 256, 8
      %5353 = vbcast.lane.b32.xlu0 %v5347, %s5352
      %v5354 = vpop.permute.xlu0 %5353
      %s5356 = sor.u32 256, 16
      %5357 = vbcast.lane.b32.xlu0 %v5347, %s5356
      %v5358 = vpop.permute.xlu0 %5357
      %s5360 = sor.u32 256, 24
      %5361 = vbcast.lane.b32.xlu0 %v5347, %s5360
      %v5362 = vpop.permute.xlu0 %5361
      %s5364 = sor.u32 256, 32
      %5365 = vbcast.lane.b32.xlu0 %v5347, %s5364
      %v5366 = vpop.permute.xlu0 %5365
      %s5368 = sor.u32 256, 40
      %5369 = vbcast.lane.b32.xlu0 %v5347, %s5368
      %v5370 = vpop.permute.xlu0 %5369
      %s5372 = sor.u32 256, 48
      %5373 = vbcast.lane.b32.xlu0 %v5347, %s5372
      %v5374 = vpop.permute.xlu0 %5373
      %s5376 = sor.u32 256, 56
      %5377 = vbcast.lane.b32.xlu0 %v5347, %s5376
      %v5378 = vpop.permute.xlu0 %5377
      %v5379 = vlaneseq
      %v5380 = vshrl.u32 %v5379, 7
      %v5381 = vsub.s32 3, %v5380
      %v5382 = vrot.slane %v4712, %v5381
      %5384 = vbcast.lane.b32.xlu0 %v5382, 256
      %v5385 = vpop.permute.xlu0 %5384
      %s5387 = sor.u32 256, 8
      %5388 = vbcast.lane.b32.xlu0 %v5382, %s5387
      %v5389 = vpop.permute.xlu0 %5388
      %s5391 = sor.u32 256, 16
      %5392 = vbcast.lane.b32.xlu0 %v5382, %s5391
      %v5393 = vpop.permute.xlu0 %5392
      %s5395 = sor.u32 256, 24
      %5396 = vbcast.lane.b32.xlu0 %v5382, %s5395
      %v5397 = vpop.permute.xlu0 %5396
      %s5399 = sor.u32 256, 32
      %5400 = vbcast.lane.b32.xlu0 %v5382, %s5399
      %v5401 = vpop.permute.xlu0 %5400
      %s5403 = sor.u32 256, 40
      %5404 = vbcast.lane.b32.xlu0 %v5382, %s5403
      %v5405 = vpop.permute.xlu0 %5404
      %s5407 = sor.u32 256, 48
      %5408 = vbcast.lane.b32.xlu0 %v5382, %s5407
      %v5409 = vpop.permute.xlu0 %5408
      %s5411 = sor.u32 256, 56
      %5412 = vbcast.lane.b32.xlu0 %v5382, %s5411
      %v5413 = vpop.permute.xlu0 %5412
      %v5414 = vlaneseq
      %v5415 = vshrl.u32 %v5414, 7
      %v5416 = vsub.s32 4, %v5415
      %v5417 = vrot.slane %v4712, %v5416
      %5419 = vbcast.lane.b32.xlu0 %v5417, 256
      %v5420 = vpop.permute.xlu0 %5419
      %s5422 = sor.u32 256, 8
      %5423 = vbcast.lane.b32.xlu0 %v5417, %s5422
      %v5424 = vpop.permute.xlu0 %5423
      %s5426 = sor.u32 256, 16
      %5427 = vbcast.lane.b32.xlu0 %v5417, %s5426
      %v5428 = vpop.permute.xlu0 %5427
      %s5430 = sor.u32 256, 24
      %5431 = vbcast.lane.b32.xlu0 %v5417, %s5430
      %v5432 = vpop.permute.xlu0 %5431
      %s5434 = sor.u32 256, 32
      %5435 = vbcast.lane.b32.xlu0 %v5417, %s5434
      %v5436 = vpop.permute.xlu0 %5435
      %s5438 = sor.u32 256, 40
      %5439 = vbcast.lane.b32.xlu0 %v5417, %s5438
      %v5440 = vpop.permute.xlu0 %5439
      %s5442 = sor.u32 256, 48
      %5443 = vbcast.lane.b32.xlu0 %v5417, %s5442
      %v5444 = vpop.permute.xlu0 %5443
      %s5446 = sor.u32 256, 56
      %5447 = vbcast.lane.b32.xlu0 %v5417, %s5446
      %v5448 = vpop.permute.xlu0 %5447
      %v5449 = vlaneseq
      %v5450 = vshrl.u32 %v5449, 7
      %v5451 = vsub.s32 5, %v5450
      %v5452 = vrot.slane %v4712, %v5451
      %5454 = vbcast.lane.b32.xlu0 %v5452, 256
      %v5455 = vpop.permute.xlu0 %5454
      %s5457 = sor.u32 256, 8
      %5458 = vbcast.lane.b32.xlu0 %v5452, %s5457
      %v5459 = vpop.permute.xlu0 %5458
      %s5461 = sor.u32 256, 16
      %5462 = vbcast.lane.b32.xlu0 %v5452, %s5461
      %v5463 = vpop.permute.xlu0 %5462
      %s5465 = sor.u32 256, 24
      %5466 = vbcast.lane.b32.xlu0 %v5452, %s5465
      %v5467 = vpop.permute.xlu0 %5466
      %s5469 = sor.u32 256, 32
      %5470 = vbcast.lane.b32.xlu0 %v5452, %s5469
      %v5471 = vpop.permute.xlu0 %5470
      %s5473 = sor.u32 256, 40
      %5474 = vbcast.lane.b32.xlu0 %v5452, %s5473
      %v5475 = vpop.permute.xlu0 %5474
      %s5477 = sor.u32 256, 48
      %5478 = vbcast.lane.b32.xlu0 %v5452, %s5477
      %v5479 = vpop.permute.xlu0 %5478
      %s5481 = sor.u32 256, 56
      %5482 = vbcast.lane.b32.xlu0 %v5452, %s5481
      %v5483 = vpop.permute.xlu0 %5482
      %v5484 = vlaneseq
      %v5485 = vshrl.u32 %v5484, 7
      %v5486 = vsub.s32 6, %v5485
      %v5487 = vrot.slane %v4712, %v5486
      %5489 = vbcast.lane.b32.xlu0 %v5487, 256
      %v5490 = vpop.permute.xlu0 %5489
      %s5492 = sor.u32 256, 8
      %5493 = vbcast.lane.b32.xlu0 %v5487, %s5492
      %v5494 = vpop.permute.xlu0 %5493
      %s5496 = sor.u32 256, 16
      %5497 = vbcast.lane.b32.xlu0 %v5487, %s5496
      %v5498 = vpop.permute.xlu0 %5497
      %s5500 = sor.u32 256, 24
      %5501 = vbcast.lane.b32.xlu0 %v5487, %s5500
      %v5502 = vpop.permute.xlu0 %5501
      %s5504 = sor.u32 256, 32
      %5505 = vbcast.lane.b32.xlu0 %v5487, %s5504
      %v5506 = vpop.permute.xlu0 %5505
      %s5508 = sor.u32 256, 40
      %5509 = vbcast.lane.b32.xlu0 %v5487, %s5508
      %v5510 = vpop.permute.xlu0 %5509
      %s5512 = sor.u32 256, 48
      %5513 = vbcast.lane.b32.xlu0 %v5487, %s5512
      %v5514 = vpop.permute.xlu0 %5513
      %s5516 = sor.u32 256, 56
      %5517 = vbcast.lane.b32.xlu0 %v5487, %s5516
      %v5518 = vpop.permute.xlu0 %5517
      %v5519 = vlaneseq
      %v5520 = vshrl.u32 %v5519, 7
      %v5521 = vsub.s32 7, %v5520
      %v5522 = vrot.slane %v4712, %v5521
      %5524 = vbcast.lane.b32.xlu0 %v5522, 256
      %v5525 = vpop.permute.xlu0 %5524
      %s5527 = sor.u32 256, 8
      %5528 = vbcast.lane.b32.xlu0 %v5522, %s5527
      %v5529 = vpop.permute.xlu0 %5528
      %s5531 = sor.u32 256, 16
      %5532 = vbcast.lane.b32.xlu0 %v5522, %s5531
      %v5533 = vpop.permute.xlu0 %5532
      %s5535 = sor.u32 256, 24
      %5536 = vbcast.lane.b32.xlu0 %v5522, %s5535
      %v5537 = vpop.permute.xlu0 %5536
      %s5539 = sor.u32 256, 32
      %5540 = vbcast.lane.b32.xlu0 %v5522, %s5539
      %v5541 = vpop.permute.xlu0 %5540
      %s5543 = sor.u32 256, 40
      %5544 = vbcast.lane.b32.xlu0 %v5522, %s5543
      %v5545 = vpop.permute.xlu0 %5544
      %s5547 = sor.u32 256, 48
      %5548 = vbcast.lane.b32.xlu0 %v5522, %s5547
      %v5549 = vpop.permute.xlu0 %5548
      %s5551 = sor.u32 256, 56
      %5552 = vbcast.lane.b32.xlu0 %v5522, %s5551
      %v5553 = vpop.permute.xlu0 %5552
      %v5554 = vlaneseq
      %v5555 = vshrl.u32 %v5554, 7
      %v5556 = vsub.s32 0, %v5555
      %v5557 = vrot.slane %v4713, %v5556
      %5559 = vbcast.lane.b32.xlu0 %v5557, 256
      %v5560 = vpop.permute.xlu0 %5559
      %s5562 = sor.u32 256, 8
      %5563 = vbcast.lane.b32.xlu0 %v5557, %s5562
      %v5564 = vpop.permute.xlu0 %5563
      %s5566 = sor.u32 256, 16
      %5567 = vbcast.lane.b32.xlu0 %v5557, %s5566
      %v5568 = vpop.permute.xlu0 %5567
      %s5570 = sor.u32 256, 24
      %5571 = vbcast.lane.b32.xlu0 %v5557, %s5570
      %v5572 = vpop.permute.xlu0 %5571
      %s5574 = sor.u32 256, 32
      %5575 = vbcast.lane.b32.xlu0 %v5557, %s5574
      %v5576 = vpop.permute.xlu0 %5575
      %s5578 = sor.u32 256, 40
      %5579 = vbcast.lane.b32.xlu0 %v5557, %s5578
      %v5580 = vpop.permute.xlu0 %5579
      %s5582 = sor.u32 256, 48
      %5583 = vbcast.lane.b32.xlu0 %v5557, %s5582
      %v5584 = vpop.permute.xlu0 %5583
      %s5586 = sor.u32 256, 56
      %5587 = vbcast.lane.b32.xlu0 %v5557, %s5586
      %v5588 = vpop.permute.xlu0 %5587
      %v5589 = vlaneseq
      %v5590 = vshrl.u32 %v5589, 7
      %v5591 = vsub.s32 1, %v5590
      %v5592 = vrot.slane %v4713, %v5591
      %5594 = vbcast.lane.b32.xlu0 %v5592, 256
      %v5595 = vpop.permute.xlu0 %5594
      %s5597 = sor.u32 256, 8
      %5598 = vbcast.lane.b32.xlu0 %v5592, %s5597
      %v5599 = vpop.permute.xlu0 %5598
      %s5601 = sor.u32 256, 16
      %5602 = vbcast.lane.b32.xlu0 %v5592, %s5601
      %v5603 = vpop.permute.xlu0 %5602
      %s5605 = sor.u32 256, 24
      %5606 = vbcast.lane.b32.xlu0 %v5592, %s5605
      %v5607 = vpop.permute.xlu0 %5606
      %s5609 = sor.u32 256, 32
      %5610 = vbcast.lane.b32.xlu0 %v5592, %s5609
      %v5611 = vpop.permute.xlu0 %5610
      %s5613 = sor.u32 256, 40
      %5614 = vbcast.lane.b32.xlu0 %v5592, %s5613
      %v5615 = vpop.permute.xlu0 %5614
      %s5617 = sor.u32 256, 48
      %5618 = vbcast.lane.b32.xlu0 %v5592, %s5617
      %v5619 = vpop.permute.xlu0 %5618
      %s5621 = sor.u32 256, 56
      %5622 = vbcast.lane.b32.xlu0 %v5592, %s5621
      %v5623 = vpop.permute.xlu0 %5622
      %v5624 = vlaneseq
      %v5625 = vshrl.u32 %v5624, 7
      %v5626 = vsub.s32 2, %v5625
      %v5627 = vrot.slane %v4713, %v5626
      %5629 = vbcast.lane.b32.xlu0 %v5627, 256
      %v5630 = vpop.permute.xlu0 %5629
      %s5632 = sor.u32 256, 8
      %5633 = vbcast.lane.b32.xlu0 %v5627, %s5632
      %v5634 = vpop.permute.xlu0 %5633
      %s5636 = sor.u32 256, 16
      %5637 = vbcast.lane.b32.xlu0 %v5627, %s5636
      %v5638 = vpop.permute.xlu0 %5637
      %s5640 = sor.u32 256, 24
      %5641 = vbcast.lane.b32.xlu0 %v5627, %s5640
      %v5642 = vpop.permute.xlu0 %5641
      %s5644 = sor.u32 256, 32
      %5645 = vbcast.lane.b32.xlu0 %v5627, %s5644
      %v5646 = vpop.permute.xlu0 %5645
      %s5648 = sor.u32 256, 40
      %5649 = vbcast.lane.b32.xlu0 %v5627, %s5648
      %v5650 = vpop.permute.xlu0 %5649
      %s5652 = sor.u32 256, 48
      %5653 = vbcast.lane.b32.xlu0 %v5627, %s5652
      %v5654 = vpop.permute.xlu0 %5653
      %s5656 = sor.u32 256, 56
      %5657 = vbcast.lane.b32.xlu0 %v5627, %s5656
      %v5658 = vpop.permute.xlu0 %5657
      %v5659 = vlaneseq
      %v5660 = vshrl.u32 %v5659, 7
      %v5661 = vsub.s32 3, %v5660
      %v5662 = vrot.slane %v4713, %v5661
      %5664 = vbcast.lane.b32.xlu0 %v5662, 256
      %v5665 = vpop.permute.xlu0 %5664
      %s5667 = sor.u32 256, 8
      %5668 = vbcast.lane.b32.xlu0 %v5662, %s5667
      %v5669 = vpop.permute.xlu0 %5668
      %s5671 = sor.u32 256, 16
      %5672 = vbcast.lane.b32.xlu0 %v5662, %s5671
      %v5673 = vpop.permute.xlu0 %5672
      %s5675 = sor.u32 256, 24
      %5676 = vbcast.lane.b32.xlu0 %v5662, %s5675
      %v5677 = vpop.permute.xlu0 %5676
      %s5679 = sor.u32 256, 32
      %5680 = vbcast.lane.b32.xlu0 %v5662, %s5679
      %v5681 = vpop.permute.xlu0 %5680
      %s5683 = sor.u32 256, 40
      %5684 = vbcast.lane.b32.xlu0 %v5662, %s5683
      %v5685 = vpop.permute.xlu0 %5684
      %s5687 = sor.u32 256, 48
      %5688 = vbcast.lane.b32.xlu0 %v5662, %s5687
      %v5689 = vpop.permute.xlu0 %5688
      %s5691 = sor.u32 256, 56
      %5692 = vbcast.lane.b32.xlu0 %v5662, %s5691
      %v5693 = vpop.permute.xlu0 %5692
      %v5694 = vlaneseq
      %v5695 = vshrl.u32 %v5694, 7
      %v5696 = vsub.s32 4, %v5695
      %v5697 = vrot.slane %v4713, %v5696
      %5699 = vbcast.lane.b32.xlu0 %v5697, 256
      %v5700 = vpop.permute.xlu0 %5699
      %s5702 = sor.u32 256, 8
      %5703 = vbcast.lane.b32.xlu0 %v5697, %s5702
      %v5704 = vpop.permute.xlu0 %5703
      %s5706 = sor.u32 256, 16
      %5707 = vbcast.lane.b32.xlu0 %v5697, %s5706
      %v5708 = vpop.permute.xlu0 %5707
      %s5710 = sor.u32 256, 24
      %5711 = vbcast.lane.b32.xlu0 %v5697, %s5710
      %v5712 = vpop.permute.xlu0 %5711
      %s5714 = sor.u32 256, 32
      %5715 = vbcast.lane.b32.xlu0 %v5697, %s5714
      %v5716 = vpop.permute.xlu0 %5715
      %s5718 = sor.u32 256, 40
      %5719 = vbcast.lane.b32.xlu0 %v5697, %s5718
      %v5720 = vpop.permute.xlu0 %5719
      %s5722 = sor.u32 256, 48
      %5723 = vbcast.lane.b32.xlu0 %v5697, %s5722
      %v5724 = vpop.permute.xlu0 %5723
      %s5726 = sor.u32 256, 56
      %5727 = vbcast.lane.b32.xlu0 %v5697, %s5726
      %v5728 = vpop.permute.xlu0 %5727
      %v5729 = vlaneseq
      %v5730 = vshrl.u32 %v5729, 7
      %v5731 = vsub.s32 5, %v5730
      %v5732 = vrot.slane %v4713, %v5731
      %5734 = vbcast.lane.b32.xlu0 %v5732, 256
      %v5735 = vpop.permute.xlu0 %5734
      %s5737 = sor.u32 256, 8
      %5738 = vbcast.lane.b32.xlu0 %v5732, %s5737
      %v5739 = vpop.permute.xlu0 %5738
      %s5741 = sor.u32 256, 16
      %5742 = vbcast.lane.b32.xlu0 %v5732, %s5741
      %v5743 = vpop.permute.xlu0 %5742
      %s5745 = sor.u32 256, 24
      %5746 = vbcast.lane.b32.xlu0 %v5732, %s5745
      %v5747 = vpop.permute.xlu0 %5746
      %s5749 = sor.u32 256, 32
      %5750 = vbcast.lane.b32.xlu0 %v5732, %s5749
      %v5751 = vpop.permute.xlu0 %5750
      %s5753 = sor.u32 256, 40
      %5754 = vbcast.lane.b32.xlu0 %v5732, %s5753
      %v5755 = vpop.permute.xlu0 %5754
      %s5757 = sor.u32 256, 48
      %5758 = vbcast.lane.b32.xlu0 %v5732, %s5757
      %v5759 = vpop.permute.xlu0 %5758
      %s5761 = sor.u32 256, 56
      %5762 = vbcast.lane.b32.xlu0 %v5732, %s5761
      %v5763 = vpop.permute.xlu0 %5762
      %v5764 = vlaneseq
      %v5765 = vshrl.u32 %v5764, 7
      %v5766 = vsub.s32 6, %v5765
      %v5767 = vrot.slane %v4713, %v5766
      %5769 = vbcast.lane.b32.xlu0 %v5767, 256
      %v5770 = vpop.permute.xlu0 %5769
      %s5772 = sor.u32 256, 8
      %5773 = vbcast.lane.b32.xlu0 %v5767, %s5772
      %v5774 = vpop.permute.xlu0 %5773
      %s5776 = sor.u32 256, 16
      %5777 = vbcast.lane.b32.xlu0 %v5767, %s5776
      %v5778 = vpop.permute.xlu0 %5777
      %s5780 = sor.u32 256, 24
      %5781 = vbcast.lane.b32.xlu0 %v5767, %s5780
      %v5782 = vpop.permute.xlu0 %5781
      %s5784 = sor.u32 256, 32
      %5785 = vbcast.lane.b32.xlu0 %v5767, %s5784
      %v5786 = vpop.permute.xlu0 %5785
      %s5788 = sor.u32 256, 40
      %5789 = vbcast.lane.b32.xlu0 %v5767, %s5788
      %v5790 = vpop.permute.xlu0 %5789
      %s5792 = sor.u32 256, 48
      %5793 = vbcast.lane.b32.xlu0 %v5767, %s5792
      %v5794 = vpop.permute.xlu0 %5793
      %s5796 = sor.u32 256, 56
      %5797 = vbcast.lane.b32.xlu0 %v5767, %s5796
      %v5798 = vpop.permute.xlu0 %5797
      %v5799 = vlaneseq
      %v5800 = vshrl.u32 %v5799, 7
      %v5801 = vsub.s32 7, %v5800
      %v5802 = vrot.slane %v4713, %v5801
      %5804 = vbcast.lane.b32.xlu0 %v5802, 256
      %v5805 = vpop.permute.xlu0 %5804
      %s5807 = sor.u32 256, 8
      %5808 = vbcast.lane.b32.xlu0 %v5802, %s5807
      %v5809 = vpop.permute.xlu0 %5808
      %s5811 = sor.u32 256, 16
      %5812 = vbcast.lane.b32.xlu0 %v5802, %s5811
      %v5813 = vpop.permute.xlu0 %5812
      %s5815 = sor.u32 256, 24
      %5816 = vbcast.lane.b32.xlu0 %v5802, %s5815
      %v5817 = vpop.permute.xlu0 %5816
      %s5819 = sor.u32 256, 32
      %5820 = vbcast.lane.b32.xlu0 %v5802, %s5819
      %v5821 = vpop.permute.xlu0 %5820
      %s5823 = sor.u32 256, 40
      %5824 = vbcast.lane.b32.xlu0 %v5802, %s5823
      %v5825 = vpop.permute.xlu0 %5824
      %s5827 = sor.u32 256, 48
      %5828 = vbcast.lane.b32.xlu0 %v5802, %s5827
      %v5829 = vpop.permute.xlu0 %5828
      %s5831 = sor.u32 256, 56
      %5832 = vbcast.lane.b32.xlu0 %v5802, %s5831
      %v5833 = vpop.permute.xlu0 %5832
      %v5834 = vadd.f32 %v4446, %v4720
      %v5835 = vadd.f32 %v4447, %v4724
      %v5836 = vadd.f32 %v4448, %v4728
      %v5837 = vadd.f32 %v4449, %v4732
      %v5838 = vadd.f32 %v4450, %v4736
      %v5839 = vadd.f32 %v4451, %v4740
      %v5840 = vadd.f32 %v4452, %v4744
      %v5841 = vadd.f32 %v4453, %v4748
      %v5842 = vadd.f32 %v4454, %v4755
      %v5843 = vadd.f32 %v4455, %v4759
      %v5844 = vadd.f32 %v4456, %v4763
      %v5845 = vadd.f32 %v4457, %v4767
      %v5846 = vadd.f32 %v4458, %v4771
      %v5847 = vadd.f32 %v4459, %v4775
      %v5848 = vadd.f32 %v4460, %v4779
      %v5849 = vadd.f32 %v4461, %v4783
      %v5850 = vadd.f32 %v4462, %v4790
      %v5851 = vadd.f32 %v4463, %v4794
      %v5852 = vadd.f32 %v4464, %v4798
      %v5853 = vadd.f32 %v4465, %v4802
      %v5854 = vadd.f32 %v4466, %v4806
      %v5855 = vadd.f32 %v4467, %v4810
      %v5856 = vadd.f32 %v4468, %v4814
      %v5857 = vadd.f32 %v4469, %v4818
      %v5858 = vadd.f32 %v4470, %v4825
      %v5859 = vadd.f32 %v4471, %v4829
      %v5860 = vadd.f32 %v4472, %v4833
      %v5861 = vadd.f32 %v4473, %v4837
      %v5862 = vadd.f32 %v4474, %v4841
      %v5863 = vadd.f32 %v4475, %v4845
      %v5864 = vadd.f32 %v4476, %v4849
      %v5865 = vadd.f32 %v4477, %v4853
      %v5866 = vadd.f32 %v4478, %v4860
      %v5867 = vadd.f32 %v4479, %v4864
      %v5868 = vadd.f32 %v4480, %v4868
      %v5869 = vadd.f32 %v4481, %v4872
      %v5870 = vadd.f32 %v4482, %v4876
      %v5871 = vadd.f32 %v4483, %v4880
      %v5872 = vadd.f32 %v4484, %v4884
      %v5873 = vadd.f32 %v4485, %v4888
      %v5874 = vadd.f32 %v4486, %v4895
      %v5875 = vadd.f32 %v4487, %v4899
      %v5876 = vadd.f32 %v4488, %v4903
      %v5877 = vadd.f32 %v4489, %v4907
      %v5878 = vadd.f32 %v4490, %v4911
      %v5879 = vadd.f32 %v4491, %v4915
      %v5880 = vadd.f32 %v4492, %v4919
      %v5881 = vadd.f32 %v4493, %v4923
      %v5882 = vadd.f32 %v4494, %v4930
      %v5883 = vadd.f32 %v4495, %v4934
      %v5884 = vadd.f32 %v4496, %v4938
      %v5885 = vadd.f32 %v4497, %v4942
      %v5886 = vadd.f32 %v4498, %v4946
      %v5887 = vadd.f32 %v4499, %v4950
      %v5888 = vadd.f32 %v4500, %v4954
      %v5889 = vadd.f32 %v4501, %v4958
      %v5890 = vadd.f32 %v4502, %v4965
      %v5891 = vadd.f32 %v4503, %v4969
      %v5892 = vadd.f32 %v4504, %v4973
      %v5893 = vadd.f32 %v4505, %v4977
      %v5894 = vadd.f32 %v4506, %v4981
      %v5895 = vadd.f32 %v4507, %v4985
      %v5896 = vadd.f32 %v4508, %v4989
      %v5897 = vadd.f32 %v4509, %v4993
      %v5898 = vadd.f32 %v4510, %v5000
      %v5899 = vadd.f32 %v4511, %v5004
      %v5900 = vadd.f32 %v4512, %v5008
      %v5901 = vadd.f32 %v4513, %v5012
      %v5902 = vadd.f32 %v4514, %v5016
      %v5903 = vadd.f32 %v4515, %v5020
      %v5904 = vadd.f32 %v4516, %v5024
      %v5905 = vadd.f32 %v4517, %v5028
      %v5906 = vadd.f32 %v4518, %v5035
      %v5907 = vadd.f32 %v4519, %v5039
      %v5908 = vadd.f32 %v4520, %v5043
      %v5909 = vadd.f32 %v4521, %v5047
      %v5910 = vadd.f32 %v4522, %v5051
      %v5911 = vadd.f32 %v4523, %v5055
      %v5912 = vadd.f32 %v4524, %v5059
      %v5913 = vadd.f32 %v4525, %v5063
      %v5914 = vadd.f32 %v4526, %v5070
      %v5915 = vadd.f32 %v4527, %v5074
      %v5916 = vadd.f32 %v4528, %v5078
      %v5917 = vadd.f32 %v4529, %v5082
      %v5918 = vadd.f32 %v4530, %v5086
      %v5919 = vadd.f32 %v4531, %v5090
      %v5920 = vadd.f32 %v4532, %v5094
      %v5921 = vadd.f32 %v4533, %v5098
      %v5922 = vadd.f32 %v4534, %v5105
      %v5923 = vadd.f32 %v4535, %v5109
      %v5924 = vadd.f32 %v4536, %v5113
      %v5925 = vadd.f32 %v4537, %v5117
      %v5926 = vadd.f32 %v4538, %v5121
      %v5927 = vadd.f32 %v4539, %v5125
      %v5928 = vadd.f32 %v4540, %v5129
      %v5929 = vadd.f32 %v4541, %v5133
      %v5930 = vadd.f32 %v4542, %v5140
      %v5931 = vadd.f32 %v4543, %v5144
      %v5932 = vadd.f32 %v4544, %v5148
      %v5933 = vadd.f32 %v4545, %v5152
      %v5934 = vadd.f32 %v4546, %v5156
      %v5935 = vadd.f32 %v4547, %v5160
      %v5936 = vadd.f32 %v4548, %v5164
      %v5937 = vadd.f32 %v4549, %v5168
      %v5938 = vadd.f32 %v4550, %v5175
      %v5939 = vadd.f32 %v4551, %v5179
      %v5940 = vadd.f32 %v4552, %v5183
      %v5941 = vadd.f32 %v4553, %v5187
      %v5942 = vadd.f32 %v4554, %v5191
      %v5943 = vadd.f32 %v4555, %v5195
      %v5944 = vadd.f32 %v4556, %v5199
      %v5945 = vadd.f32 %v4557, %v5203
      %v5946 = vadd.f32 %v4558, %v5210
      %v5947 = vadd.f32 %v4559, %v5214
      %v5948 = vadd.f32 %v4560, %v5218
      %v5949 = vadd.f32 %v4561, %v5222
      %v5950 = vadd.f32 %v4562, %v5226
      %v5951 = vadd.f32 %v4563, %v5230
      %v5952 = vadd.f32 %v4564, %v5234
      %v5953 = vadd.f32 %v4565, %v5238
      %v5954 = vadd.f32 %v4566, %v5245
      %v5955 = vadd.f32 %v4567, %v5249
      %v5956 = vadd.f32 %v4568, %v5253
      %v5957 = vadd.f32 %v4569, %v5257
      %v5958 = vadd.f32 %v4570, %v5261
      %v5959 = vadd.f32 %v4571, %v5265
      %v5960 = vadd.f32 %v4572, %v5269
      %v5961 = vadd.f32 %v4573, %v5273
      %v5962 = vadd.f32 %v4574, %v5280
      %v5963 = vadd.f32 %v4575, %v5284
      %v5964 = vadd.f32 %v4576, %v5288
      %v5965 = vadd.f32 %v4577, %v5292
      %v5966 = vadd.f32 %v4578, %v5296
      %v5967 = vadd.f32 %v4579, %v5300
      %v5968 = vadd.f32 %v4580, %v5304
      %v5969 = vadd.f32 %v4581, %v5308
      %v5970 = vadd.f32 %v4582, %v5315
      %v5971 = vadd.f32 %v4583, %v5319
      %v5972 = vadd.f32 %v4584, %v5323
      %v5973 = vadd.f32 %v4585, %v5327
      %v5974 = vadd.f32 %v4586, %v5331
      %v5975 = vadd.f32 %v4587, %v5335
      %v5976 = vadd.f32 %v4588, %v5339
      %v5977 = vadd.f32 %v4589, %v5343
      %v5978 = vadd.f32 %v4590, %v5350
      %v5979 = vadd.f32 %v4591, %v5354
      %v5980 = vadd.f32 %v4592, %v5358
      %v5981 = vadd.f32 %v4593, %v5362
      %v5982 = vadd.f32 %v4594, %v5366
      %v5983 = vadd.f32 %v4595, %v5370
      %v5984 = vadd.f32 %v4596, %v5374
      %v5985 = vadd.f32 %v4597, %v5378
      %v5986 = vadd.f32 %v4598, %v5385
      %v5987 = vadd.f32 %v4599, %v5389
      %v5988 = vadd.f32 %v4600, %v5393
      %v5989 = vadd.f32 %v4601, %v5397
      %v5990 = vadd.f32 %v4602, %v5401
      %v5991 = vadd.f32 %v4603, %v5405
      %v5992 = vadd.f32 %v4604, %v5409
      %v5993 = vadd.f32 %v4605, %v5413
      %v5994 = vadd.f32 %v4606, %v5420
      %v5995 = vadd.f32 %v4607, %v5424
      %v5996 = vadd.f32 %v4608, %v5428
      %v5997 = vadd.f32 %v4609, %v5432
      %v5998 = vadd.f32 %v4610, %v5436
      %v5999 = vadd.f32 %v4611, %v5440
      %v6000 = vadd.f32 %v4612, %v5444
      %v6001 = vadd.f32 %v4613, %v5448
      %v6002 = vadd.f32 %v4614, %v5455
      %v6003 = vadd.f32 %v4615, %v5459
      %v6004 = vadd.f32 %v4616, %v5463
      %v6005 = vadd.f32 %v4617, %v5467
      %v6006 = vadd.f32 %v4618, %v5471
      %v6007 = vadd.f32 %v4619, %v5475
      %v6008 = vadd.f32 %v4620, %v5479
      %v6009 = vadd.f32 %v4621, %v5483
      %v6010 = vadd.f32 %v4622, %v5490
      %v6011 = vadd.f32 %v4623, %v5494
      %v6012 = vadd.f32 %v4624, %v5498
      %v6013 = vadd.f32 %v4625, %v5502
      %v6014 = vadd.f32 %v4626, %v5506
      %v6015 = vadd.f32 %v4627, %v5510
      %v6016 = vadd.f32 %v4628, %v5514
      %v6017 = vadd.f32 %v4629, %v5518
      %v6018 = vadd.f32 %v4630, %v5525
      %v6019 = vadd.f32 %v4631, %v5529
      %v6020 = vadd.f32 %v4632, %v5533
      %v6021 = vadd.f32 %v4633, %v5537
      %v6022 = vadd.f32 %v4634, %v5541
      %v6023 = vadd.f32 %v4635, %v5545
      %v6024 = vadd.f32 %v4636, %v5549
      %v6025 = vadd.f32 %v4637, %v5553
      %v6026 = vadd.f32 %v4638, %v5560
      %v6027 = vadd.f32 %v4639, %v5564
      %v6028 = vadd.f32 %v4640, %v5568
      %v6029 = vadd.f32 %v4641, %v5572
      %v6030 = vadd.f32 %v4642, %v5576
      %v6031 = vadd.f32 %v4643, %v5580
      %v6032 = vadd.f32 %v4644, %v5584
      %v6033 = vadd.f32 %v4645, %v5588
      %v6034 = vadd.f32 %v4646, %v5595
      %v6035 = vadd.f32 %v4647, %v5599
      %v6036 = vadd.f32 %v4648, %v5603
      %v6037 = vadd.f32 %v4649, %v5607
      %v6038 = vadd.f32 %v4650, %v5611
      %v6039 = vadd.f32 %v4651, %v5615
      %v6040 = vadd.f32 %v4652, %v5619
      %v6041 = vadd.f32 %v4653, %v5623
      %v6042 = vadd.f32 %v4654, %v5630
      %v6043 = vadd.f32 %v4655, %v5634
      %v6044 = vadd.f32 %v4656, %v5638
      %v6045 = vadd.f32 %v4657, %v5642
      %v6046 = vadd.f32 %v4658, %v5646
      %v6047 = vadd.f32 %v4659, %v5650
      %v6048 = vadd.f32 %v4660, %v5654
      %v6049 = vadd.f32 %v4661, %v5658
      %v6050 = vadd.f32 %v4662, %v5665
      %v6051 = vadd.f32 %v4663, %v5669
      %v6052 = vadd.f32 %v4664, %v5673
      %v6053 = vadd.f32 %v4665, %v5677
      %v6054 = vadd.f32 %v4666, %v5681
      %v6055 = vadd.f32 %v4667, %v5685
      %v6056 = vadd.f32 %v4668, %v5689
      %v6057 = vadd.f32 %v4669, %v5693
      %v6058 = vadd.f32 %v4670, %v5700
      %v6059 = vadd.f32 %v4671, %v5704
      %v6060 = vadd.f32 %v4672, %v5708
      %v6061 = vadd.f32 %v4673, %v5712
      %v6062 = vadd.f32 %v4674, %v5716
      %v6063 = vadd.f32 %v4675, %v5720
      %v6064 = vadd.f32 %v4676, %v5724
      %v6065 = vadd.f32 %v4677, %v5728
      %v6066 = vadd.f32 %v4678, %v5735
      %v6067 = vadd.f32 %v4679, %v5739
      %v6068 = vadd.f32 %v4680, %v5743
      %v6069 = vadd.f32 %v4681, %v5747
      %v6070 = vadd.f32 %v4682, %v5751
      %v6071 = vadd.f32 %v4683, %v5755
      %v6072 = vadd.f32 %v4684, %v5759
      %v6073 = vadd.f32 %v4685, %v5763
      %v6074 = vadd.f32 %v4686, %v5770
      %v6075 = vadd.f32 %v4687, %v5774
      %v6076 = vadd.f32 %v4688, %v5778
      %v6077 = vadd.f32 %v4689, %v5782
      %v6078 = vadd.f32 %v4690, %v5786
      %v6079 = vadd.f32 %v4691, %v5790
      %v6080 = vadd.f32 %v4692, %v5794
      %v6081 = vadd.f32 %v4693, %v5798
      %v6082 = vadd.f32 %v4694, %v5805
      %v6083 = vadd.f32 %v4695, %v5809
      %v6084 = vadd.f32 %v4696, %v5813
      %v6085 = vadd.f32 %v4697, %v5817
      %v6086 = vadd.f32 %v4698, %v5821
      %v6087 = vadd.f32 %v4699, %v5825
      %v6088 = vadd.f32 %v4700, %v5829
      %v6089 = vadd.f32 %v4701, %v5833
      %v6090 = vmax.f32 %v5834, %v5835
      %v6091 = vmax.f32 %v6090, %v5836
      %v6092 = vmax.f32 %v6091, %v5837
      %v6093 = vmax.f32 %v6092, %v5838
      %v6094 = vmax.f32 %v6093, %v5839
      %v6095 = vmax.f32 %v6094, %v5840
      %v6096 = vmax.f32 %v6095, %v5841
      %v6097 = vrot.slane %v6096, 4
      %v6098 = vmax.f32 %v6096, %v6097
      %v6099 = vrot.slane %v6098, 2
      %v6100 = vmax.f32 %v6098, %v6099
      %v6101 = vrot.slane %v6100, 1
      %v6102 = vmax.f32 %v6100, %v6101
      %v6103 = vmax.f32 %v5842, %v5843
      %v6104 = vmax.f32 %v6103, %v5844
      %v6105 = vmax.f32 %v6104, %v5845
      %v6106 = vmax.f32 %v6105, %v5846
      %v6107 = vmax.f32 %v6106, %v5847
      %v6108 = vmax.f32 %v6107, %v5848
      %v6109 = vmax.f32 %v6108, %v5849
      %v6110 = vrot.slane %v6109, 4
      %v6111 = vmax.f32 %v6109, %v6110
      %v6112 = vrot.slane %v6111, 2
      %v6113 = vmax.f32 %v6111, %v6112
      %v6114 = vrot.slane %v6113, 1
      %v6115 = vmax.f32 %v6113, %v6114
      %v6116 = vmax.f32 %v5850, %v5851
      %v6117 = vmax.f32 %v6116, %v5852
      %v6118 = vmax.f32 %v6117, %v5853
      %v6119 = vmax.f32 %v6118, %v5854
      %v6120 = vmax.f32 %v6119, %v5855
      %v6121 = vmax.f32 %v6120, %v5856
      %v6122 = vmax.f32 %v6121, %v5857
      %v6123 = vrot.slane %v6122, 4
      %v6124 = vmax.f32 %v6122, %v6123
      %v6125 = vrot.slane %v6124, 2
      %v6126 = vmax.f32 %v6124, %v6125
      %v6127 = vrot.slane %v6126, 1
      %v6128 = vmax.f32 %v6126, %v6127
      %v6129 = vmax.f32 %v5858, %v5859
      %v6130 = vmax.f32 %v6129, %v5860
      %v6131 = vmax.f32 %v6130, %v5861
      %v6132 = vmax.f32 %v6131, %v5862
      %v6133 = vmax.f32 %v6132, %v5863
      %v6134 = vmax.f32 %v6133, %v5864
      %v6135 = vmax.f32 %v6134, %v5865
      %v6136 = vrot.slane %v6135, 4
      %v6137 = vmax.f32 %v6135, %v6136
      %v6138 = vrot.slane %v6137, 2
      %v6139 = vmax.f32 %v6137, %v6138
      %v6140 = vrot.slane %v6139, 1
      %v6141 = vmax.f32 %v6139, %v6140
      %v6142 = vmax.f32 %v5866, %v5867
      %v6143 = vmax.f32 %v6142, %v5868
      %v6144 = vmax.f32 %v6143, %v5869
      %v6145 = vmax.f32 %v6144, %v5870
      %v6146 = vmax.f32 %v6145, %v5871
      %v6147 = vmax.f32 %v6146, %v5872
      %v6148 = vmax.f32 %v6147, %v5873
      %v6149 = vrot.slane %v6148, 4
      %v6150 = vmax.f32 %v6148, %v6149
      %v6151 = vrot.slane %v6150, 2
      %v6152 = vmax.f32 %v6150, %v6151
      %v6153 = vrot.slane %v6152, 1
      %v6154 = vmax.f32 %v6152, %v6153
      %v6155 = vmax.f32 %v5874, %v5875
      %v6156 = vmax.f32 %v6155, %v5876
      %v6157 = vmax.f32 %v6156, %v5877
      %v6158 = vmax.f32 %v6157, %v5878
      %v6159 = vmax.f32 %v6158, %v5879
      %v6160 = vmax.f32 %v6159, %v5880
      %v6161 = vmax.f32 %v6160, %v5881
      %v6162 = vrot.slane %v6161, 4
      %v6163 = vmax.f32 %v6161, %v6162
      %v6164 = vrot.slane %v6163, 2
      %v6165 = vmax.f32 %v6163, %v6164
      %v6166 = vrot.slane %v6165, 1
      %v6167 = vmax.f32 %v6165, %v6166
      %v6168 = vmax.f32 %v5882, %v5883
      %v6169 = vmax.f32 %v6168, %v5884
      %v6170 = vmax.f32 %v6169, %v5885
      %v6171 = vmax.f32 %v6170, %v5886
      %v6172 = vmax.f32 %v6171, %v5887
      %v6173 = vmax.f32 %v6172, %v5888
      %v6174 = vmax.f32 %v6173, %v5889
      %v6175 = vrot.slane %v6174, 4
      %v6176 = vmax.f32 %v6174, %v6175
      %v6177 = vrot.slane %v6176, 2
      %v6178 = vmax.f32 %v6176, %v6177
      %v6179 = vrot.slane %v6178, 1
      %v6180 = vmax.f32 %v6178, %v6179
      %v6181 = vmax.f32 %v5890, %v5891
      %v6182 = vmax.f32 %v6181, %v5892
      %v6183 = vmax.f32 %v6182, %v5893
      %v6184 = vmax.f32 %v6183, %v5894
      %v6185 = vmax.f32 %v6184, %v5895
      %v6186 = vmax.f32 %v6185, %v5896
      %v6187 = vmax.f32 %v6186, %v5897
      %v6188 = vrot.slane %v6187, 4
      %v6189 = vmax.f32 %v6187, %v6188
      %v6190 = vrot.slane %v6189, 2
      %v6191 = vmax.f32 %v6189, %v6190
      %v6192 = vrot.slane %v6191, 1
      %v6193 = vmax.f32 %v6191, %v6192
      %v6194 = vmax.f32 %v5898, %v5899
      %v6195 = vmax.f32 %v6194, %v5900
      %v6196 = vmax.f32 %v6195, %v5901
      %v6197 = vmax.f32 %v6196, %v5902
      %v6198 = vmax.f32 %v6197, %v5903
      %v6199 = vmax.f32 %v6198, %v5904
      %v6200 = vmax.f32 %v6199, %v5905
      %v6201 = vrot.slane %v6200, 4
      %v6202 = vmax.f32 %v6200, %v6201
      %v6203 = vrot.slane %v6202, 2
      %v6204 = vmax.f32 %v6202, %v6203
      %v6205 = vrot.slane %v6204, 1
      %v6206 = vmax.f32 %v6204, %v6205
      %v6207 = vmax.f32 %v5906, %v5907
      %v6208 = vmax.f32 %v6207, %v5908
      %v6209 = vmax.f32 %v6208, %v5909
      %v6210 = vmax.f32 %v6209, %v5910
      %v6211 = vmax.f32 %v6210, %v5911
      %v6212 = vmax.f32 %v6211, %v5912
      %v6213 = vmax.f32 %v6212, %v5913
      %v6214 = vrot.slane %v6213, 4
      %v6215 = vmax.f32 %v6213, %v6214
      %v6216 = vrot.slane %v6215, 2
      %v6217 = vmax.f32 %v6215, %v6216
      %v6218 = vrot.slane %v6217, 1
      %v6219 = vmax.f32 %v6217, %v6218
      %v6220 = vmax.f32 %v5914, %v5915
      %v6221 = vmax.f32 %v6220, %v5916
      %v6222 = vmax.f32 %v6221, %v5917
      %v6223 = vmax.f32 %v6222, %v5918
      %v6224 = vmax.f32 %v6223, %v5919
      %v6225 = vmax.f32 %v6224, %v5920
      %v6226 = vmax.f32 %v6225, %v5921
      %v6227 = vrot.slane %v6226, 4
      %v6228 = vmax.f32 %v6226, %v6227
      %v6229 = vrot.slane %v6228, 2
      %v6230 = vmax.f32 %v6228, %v6229
      %v6231 = vrot.slane %v6230, 1
      %v6232 = vmax.f32 %v6230, %v6231
      %v6233 = vmax.f32 %v5922, %v5923
      %v6234 = vmax.f32 %v6233, %v5924
      %v6235 = vmax.f32 %v6234, %v5925
      %v6236 = vmax.f32 %v6235, %v5926
      %v6237 = vmax.f32 %v6236, %v5927
      %v6238 = vmax.f32 %v6237, %v5928
      %v6239 = vmax.f32 %v6238, %v5929
      %v6240 = vrot.slane %v6239, 4
      %v6241 = vmax.f32 %v6239, %v6240
      %v6242 = vrot.slane %v6241, 2
      %v6243 = vmax.f32 %v6241, %v6242
      %v6244 = vrot.slane %v6243, 1
      %v6245 = vmax.f32 %v6243, %v6244
      %v6246 = vmax.f32 %v5930, %v5931
      %v6247 = vmax.f32 %v6246, %v5932
      %v6248 = vmax.f32 %v6247, %v5933
      %v6249 = vmax.f32 %v6248, %v5934
      %v6250 = vmax.f32 %v6249, %v5935
      %v6251 = vmax.f32 %v6250, %v5936
      %v6252 = vmax.f32 %v6251, %v5937
      %v6253 = vrot.slane %v6252, 4
      %v6254 = vmax.f32 %v6252, %v6253
      %v6255 = vrot.slane %v6254, 2
      %v6256 = vmax.f32 %v6254, %v6255
      %v6257 = vrot.slane %v6256, 1
      %v6258 = vmax.f32 %v6256, %v6257
      %v6259 = vmax.f32 %v5938, %v5939
      %v6260 = vmax.f32 %v6259, %v5940
      %v6261 = vmax.f32 %v6260, %v5941
      %v6262 = vmax.f32 %v6261, %v5942
      %v6263 = vmax.f32 %v6262, %v5943
      %v6264 = vmax.f32 %v6263, %v5944
      %v6265 = vmax.f32 %v6264, %v5945
      %v6266 = vrot.slane %v6265, 4
      %v6267 = vmax.f32 %v6265, %v6266
      %v6268 = vrot.slane %v6267, 2
      %v6269 = vmax.f32 %v6267, %v6268
      %v6270 = vrot.slane %v6269, 1
      %v6271 = vmax.f32 %v6269, %v6270
      %v6272 = vmax.f32 %v5946, %v5947
      %v6273 = vmax.f32 %v6272, %v5948
      %v6274 = vmax.f32 %v6273, %v5949
      %v6275 = vmax.f32 %v6274, %v5950
      %v6276 = vmax.f32 %v6275, %v5951
      %v6277 = vmax.f32 %v6276, %v5952
      %v6278 = vmax.f32 %v6277, %v5953
      %v6279 = vrot.slane %v6278, 4
      %v6280 = vmax.f32 %v6278, %v6279
      %v6281 = vrot.slane %v6280, 2
      %v6282 = vmax.f32 %v6280, %v6281
      %v6283 = vrot.slane %v6282, 1
      %v6284 = vmax.f32 %v6282, %v6283
      %v6285 = vmax.f32 %v5954, %v5955
      %v6286 = vmax.f32 %v6285, %v5956
      %v6287 = vmax.f32 %v6286, %v5957
      %v6288 = vmax.f32 %v6287, %v5958
      %v6289 = vmax.f32 %v6288, %v5959
      %v6290 = vmax.f32 %v6289, %v5960
      %v6291 = vmax.f32 %v6290, %v5961
      %v6292 = vrot.slane %v6291, 4
      %v6293 = vmax.f32 %v6291, %v6292
      %v6294 = vrot.slane %v6293, 2
      %v6295 = vmax.f32 %v6293, %v6294
      %v6296 = vrot.slane %v6295, 1
      %v6297 = vmax.f32 %v6295, %v6296
      %v6298 = vmax.f32 %v5962, %v5963
      %v6299 = vmax.f32 %v6298, %v5964
      %v6300 = vmax.f32 %v6299, %v5965
      %v6301 = vmax.f32 %v6300, %v5966
      %v6302 = vmax.f32 %v6301, %v5967
      %v6303 = vmax.f32 %v6302, %v5968
      %v6304 = vmax.f32 %v6303, %v5969
      %v6305 = vrot.slane %v6304, 4
      %v6306 = vmax.f32 %v6304, %v6305
      %v6307 = vrot.slane %v6306, 2
      %v6308 = vmax.f32 %v6306, %v6307
      %v6309 = vrot.slane %v6308, 1
      %v6310 = vmax.f32 %v6308, %v6309
      %v6311 = vmax.f32 %v5970, %v5971
      %v6312 = vmax.f32 %v6311, %v5972
      %v6313 = vmax.f32 %v6312, %v5973
      %v6314 = vmax.f32 %v6313, %v5974
      %v6315 = vmax.f32 %v6314, %v5975
      %v6316 = vmax.f32 %v6315, %v5976
      %v6317 = vmax.f32 %v6316, %v5977
      %v6318 = vrot.slane %v6317, 4
      %v6319 = vmax.f32 %v6317, %v6318
      %v6320 = vrot.slane %v6319, 2
      %v6321 = vmax.f32 %v6319, %v6320
      %v6322 = vrot.slane %v6321, 1
      %v6323 = vmax.f32 %v6321, %v6322
      %v6324 = vmax.f32 %v5978, %v5979
      %v6325 = vmax.f32 %v6324, %v5980
      %v6326 = vmax.f32 %v6325, %v5981
      %v6327 = vmax.f32 %v6326, %v5982
      %v6328 = vmax.f32 %v6327, %v5983
      %v6329 = vmax.f32 %v6328, %v5984
      %v6330 = vmax.f32 %v6329, %v5985
      %v6331 = vrot.slane %v6330, 4
      %v6332 = vmax.f32 %v6330, %v6331
      %v6333 = vrot.slane %v6332, 2
      %v6334 = vmax.f32 %v6332, %v6333
      %v6335 = vrot.slane %v6334, 1
      %v6336 = vmax.f32 %v6334, %v6335
      %v6337 = vmax.f32 %v5986, %v5987
      %v6338 = vmax.f32 %v6337, %v5988
      %v6339 = vmax.f32 %v6338, %v5989
      %v6340 = vmax.f32 %v6339, %v5990
      %v6341 = vmax.f32 %v6340, %v5991
      %v6342 = vmax.f32 %v6341, %v5992
      %v6343 = vmax.f32 %v6342, %v5993
      %v6344 = vrot.slane %v6343, 4
      %v6345 = vmax.f32 %v6343, %v6344
      %v6346 = vrot.slane %v6345, 2
      %v6347 = vmax.f32 %v6345, %v6346
      %v6348 = vrot.slane %v6347, 1
      %v6349 = vmax.f32 %v6347, %v6348
      %v6350 = vmax.f32 %v5994, %v5995
      %v6351 = vmax.f32 %v6350, %v5996
      %v6352 = vmax.f32 %v6351, %v5997
      %v6353 = vmax.f32 %v6352, %v5998
      %v6354 = vmax.f32 %v6353, %v5999
      %v6355 = vmax.f32 %v6354, %v6000
      %v6356 = vmax.f32 %v6355, %v6001
      %v6357 = vrot.slane %v6356, 4
      %v6358 = vmax.f32 %v6356, %v6357
      %v6359 = vrot.slane %v6358, 2
      %v6360 = vmax.f32 %v6358, %v6359
      %v6361 = vrot.slane %v6360, 1
      %v6362 = vmax.f32 %v6360, %v6361
      %v6363 = vmax.f32 %v6002, %v6003
      %v6364 = vmax.f32 %v6363, %v6004
      %v6365 = vmax.f32 %v6364, %v6005
      %v6366 = vmax.f32 %v6365, %v6006
      %v6367 = vmax.f32 %v6366, %v6007
      %v6368 = vmax.f32 %v6367, %v6008
      %v6369 = vmax.f32 %v6368, %v6009
      %v6370 = vrot.slane %v6369, 4
      %v6371 = vmax.f32 %v6369, %v6370
      %v6372 = vrot.slane %v6371, 2
      %v6373 = vmax.f32 %v6371, %v6372
      %v6374 = vrot.slane %v6373, 1
      %v6375 = vmax.f32 %v6373, %v6374
      %v6376 = vmax.f32 %v6010, %v6011
      %v6377 = vmax.f32 %v6376, %v6012
      %v6378 = vmax.f32 %v6377, %v6013
      %v6379 = vmax.f32 %v6378, %v6014
      %v6380 = vmax.f32 %v6379, %v6015
      %v6381 = vmax.f32 %v6380, %v6016
      %v6382 = vmax.f32 %v6381, %v6017
      %v6383 = vrot.slane %v6382, 4
      %v6384 = vmax.f32 %v6382, %v6383
      %v6385 = vrot.slane %v6384, 2
      %v6386 = vmax.f32 %v6384, %v6385
      %v6387 = vrot.slane %v6386, 1
      %v6388 = vmax.f32 %v6386, %v6387
      %v6389 = vmax.f32 %v6018, %v6019
      %v6390 = vmax.f32 %v6389, %v6020
      %v6391 = vmax.f32 %v6390, %v6021
      %v6392 = vmax.f32 %v6391, %v6022
      %v6393 = vmax.f32 %v6392, %v6023
      %v6394 = vmax.f32 %v6393, %v6024
      %v6395 = vmax.f32 %v6394, %v6025
      %v6396 = vrot.slane %v6395, 4
      %v6397 = vmax.f32 %v6395, %v6396
      %v6398 = vrot.slane %v6397, 2
      %v6399 = vmax.f32 %v6397, %v6398
      %v6400 = vrot.slane %v6399, 1
      %v6401 = vmax.f32 %v6399, %v6400
      %v6402 = vmax.f32 %v6026, %v6027
      %v6403 = vmax.f32 %v6402, %v6028
      %v6404 = vmax.f32 %v6403, %v6029
      %v6405 = vmax.f32 %v6404, %v6030
      %v6406 = vmax.f32 %v6405, %v6031
      %v6407 = vmax.f32 %v6406, %v6032
      %v6408 = vmax.f32 %v6407, %v6033
      %v6409 = vrot.slane %v6408, 4
      %v6410 = vmax.f32 %v6408, %v6409
      %v6411 = vrot.slane %v6410, 2
      %v6412 = vmax.f32 %v6410, %v6411
      %v6413 = vrot.slane %v6412, 1
      %v6414 = vmax.f32 %v6412, %v6413
      %v6415 = vmax.f32 %v6034, %v6035
      %v6416 = vmax.f32 %v6415, %v6036
      %v6417 = vmax.f32 %v6416, %v6037
      %v6418 = vmax.f32 %v6417, %v6038
      %v6419 = vmax.f32 %v6418, %v6039
      %v6420 = vmax.f32 %v6419, %v6040
      %v6421 = vmax.f32 %v6420, %v6041
      %v6422 = vrot.slane %v6421, 4
      %v6423 = vmax.f32 %v6421, %v6422
      %v6424 = vrot.slane %v6423, 2
      %v6425 = vmax.f32 %v6423, %v6424
      %v6426 = vrot.slane %v6425, 1
      %v6427 = vmax.f32 %v6425, %v6426
      %v6428 = vmax.f32 %v6042, %v6043
      %v6429 = vmax.f32 %v6428, %v6044
      %v6430 = vmax.f32 %v6429, %v6045
      %v6431 = vmax.f32 %v6430, %v6046
      %v6432 = vmax.f32 %v6431, %v6047
      %v6433 = vmax.f32 %v6432, %v6048
      %v6434 = vmax.f32 %v6433, %v6049
      %v6435 = vrot.slane %v6434, 4
      %v6436 = vmax.f32 %v6434, %v6435
      %v6437 = vrot.slane %v6436, 2
      %v6438 = vmax.f32 %v6436, %v6437
      %v6439 = vrot.slane %v6438, 1
      %v6440 = vmax.f32 %v6438, %v6439
      %v6441 = vmax.f32 %v6050, %v6051
      %v6442 = vmax.f32 %v6441, %v6052
      %v6443 = vmax.f32 %v6442, %v6053
      %v6444 = vmax.f32 %v6443, %v6054
      %v6445 = vmax.f32 %v6444, %v6055
      %v6446 = vmax.f32 %v6445, %v6056
      %v6447 = vmax.f32 %v6446, %v6057
      %v6448 = vrot.slane %v6447, 4
      %v6449 = vmax.f32 %v6447, %v6448
      %v6450 = vrot.slane %v6449, 2
      %v6451 = vmax.f32 %v6449, %v6450
      %v6452 = vrot.slane %v6451, 1
      %v6453 = vmax.f32 %v6451, %v6452
      %v6454 = vmax.f32 %v6058, %v6059
      %v6455 = vmax.f32 %v6454, %v6060
      %v6456 = vmax.f32 %v6455, %v6061
      %v6457 = vmax.f32 %v6456, %v6062
      %v6458 = vmax.f32 %v6457, %v6063
      %v6459 = vmax.f32 %v6458, %v6064
      %v6460 = vmax.f32 %v6459, %v6065
      %v6461 = vrot.slane %v6460, 4
      %v6462 = vmax.f32 %v6460, %v6461
      %v6463 = vrot.slane %v6462, 2
      %v6464 = vmax.f32 %v6462, %v6463
      %v6465 = vrot.slane %v6464, 1
      %v6466 = vmax.f32 %v6464, %v6465
      %v6467 = vmax.f32 %v6066, %v6067
      %v6468 = vmax.f32 %v6467, %v6068
      %v6469 = vmax.f32 %v6468, %v6069
      %v6470 = vmax.f32 %v6469, %v6070
      %v6471 = vmax.f32 %v6470, %v6071
      %v6472 = vmax.f32 %v6471, %v6072
      %v6473 = vmax.f32 %v6472, %v6073
      %v6474 = vrot.slane %v6473, 4
      %v6475 = vmax.f32 %v6473, %v6474
      %v6476 = vrot.slane %v6475, 2
      %v6477 = vmax.f32 %v6475, %v6476
      %v6478 = vrot.slane %v6477, 1
      %v6479 = vmax.f32 %v6477, %v6478
      %v6480 = vmax.f32 %v6074, %v6075
      %v6481 = vmax.f32 %v6480, %v6076
      %v6482 = vmax.f32 %v6481, %v6077
      %v6483 = vmax.f32 %v6482, %v6078
      %v6484 = vmax.f32 %v6483, %v6079
      %v6485 = vmax.f32 %v6484, %v6080
      %v6486 = vmax.f32 %v6485, %v6081
      %v6487 = vrot.slane %v6486, 4
      %v6488 = vmax.f32 %v6486, %v6487
      %v6489 = vrot.slane %v6488, 2
      %v6490 = vmax.f32 %v6488, %v6489
      %v6491 = vrot.slane %v6490, 1
      %v6492 = vmax.f32 %v6490, %v6491
      %v6493 = vmax.f32 %v6082, %v6083
      %v6494 = vmax.f32 %v6493, %v6084
      %v6495 = vmax.f32 %v6494, %v6085
      %v6496 = vmax.f32 %v6495, %v6086
      %v6497 = vmax.f32 %v6496, %v6087
      %v6498 = vmax.f32 %v6497, %v6088
      %v6499 = vmax.f32 %v6498, %v6089
      %v6500 = vrot.slane %v6499, 4
      %v6501 = vmax.f32 %v6499, %v6500
      %v6502 = vrot.slane %v6501, 2
      %v6503 = vmax.f32 %v6501, %v6502
      %v6504 = vrot.slane %v6503, 1
      %v6505 = vmax.f32 %v6503, %v6504
      %vm6538 = vcmask 1041409
      %v6539 = vsel %vm6538, %v6115, %v6102
      %vm6540 = vcmask 1042434
      %v6541 = vsel %vm6540, %v6128, %v6539
      %vm6542 = vcmask 1043459
      %v6543 = vsel %vm6542, %v6141, %v6541
      %vm6544 = vcmask 1044484
      %v6545 = vsel %vm6544, %v6154, %v6543
      %vm6546 = vcmask 1045509
      %v6547 = vsel %vm6546, %v6167, %v6545
      %vm6548 = vcmask 1046534
      %v6549 = vsel %vm6548, %v6180, %v6547
      %vm6550 = vcmask 1047559
      %v6551 = vsel %vm6550, %v6193, %v6549
      %v6552 = vsel %vm6538, %v6219, %v6206
      %v6553 = vsel %vm6540, %v6232, %v6552
      %v6554 = vsel %vm6542, %v6245, %v6553
      %v6555 = vsel %vm6544, %v6258, %v6554
      %v6556 = vsel %vm6546, %v6271, %v6555
      %v6557 = vsel %vm6548, %v6284, %v6556
      %v6558 = vsel %vm6550, %v6297, %v6557
      %v6559 = vsel %vm6538, %v6323, %v6310
      %v6560 = vsel %vm6540, %v6336, %v6559
      %v6561 = vsel %vm6542, %v6349, %v6560
      %v6562 = vsel %vm6544, %v6362, %v6561
      %v6563 = vsel %vm6546, %v6375, %v6562
      %v6564 = vsel %vm6548, %v6388, %v6563
      %v6565 = vsel %vm6550, %v6401, %v6564
      %v6566 = vsel %vm6538, %v6427, %v6414
      %v6567 = vsel %vm6540, %v6440, %v6566
      %v6568 = vsel %vm6542, %v6453, %v6567
      %v6569 = vsel %vm6544, %v6466, %v6568
      %v6570 = vsel %vm6546, %v6479, %v6569
      %v6571 = vsel %vm6548, %v6492, %v6570
      %v6572 = vsel %vm6550, %v6505, %v6571
      %6577 = vst [vmem:[%s251] sm:$0xff] %v6551
      %6578 = vst [vmem:[%s251 + $0x8] sm:$0xff] %v6558
      %6579 = vst [vmem:[%s251 + $0x10] sm:$0xff] %v6565
      %6580 = vst [vmem:[%s251 + $0x18] sm:$0xff] %v6572
      %s6581 = smul.u32 4, %s16
      %p6582 = scmp.lt.s32.totalorder %s6581, 7
      %s6583 = scalar_select %p6582, %s6581, 7
      %s6584 = smul.addr %s6583, 8
      %s6585 = scalar_lea.vmem %s5, %s6584
      // Predicated region
      $region41: #{sa_module_forward.1} parent=39 // pred_check
        %p6586 = pneg %p149
      $region42: #{sa_module_forward.1} parent=39 // pred_check_branch
        %6588 = sbr.rel (%p6586) target = $region44
      $region43: #{sa_module_forward.1} parent=39 // pred_region
        %s6589 = smul.u32 4, %s16
      $region44: #{sa_module_forward.1} parent=39 // pred_fallthru
        _
    $region40: #{sa_module_forward.1} parent=5 // pred_fallthru
      _
    %p6590 = scmp.le.s32.totalorder 2, %s11
    // Predicated region
    $region45: #{sa_module_forward.1} parent=5 // pred_check
      %p6591 = pneg %p6590
    $region46: #{sa_module_forward.1} parent=5 // pred_check_branch
      %6593 = sbr.rel (%p6591) target = $region48
    $region47: #{sa_module_forward.1} parent=5 // pred_region
      %s6594 = ssub.s32 %s11, 2
      // Predicated region
      $region49: #{sa_module_forward.1} parent=47 // pred_check
        %p6595 = pneg %p155
      $region50: #{sa_module_forward.1} parent=47 // pred_check_branch
        %6597 = sbr.rel (%p6595) target = $region52
      $region51: #{sa_module_forward.1} parent=47 // pred_region
        %s6598 = smul.u32 4, %s17
        %p6599 = scmp.lt.s32.totalorder %s6598, 7
        %s6600 = scalar_select %p6599, %s6598, 7
        %s6601 = smul.addr %s6600, 8
        %s6602 = scalar_lea.vmem %s5, %s6601
      $region52: #{sa_module_forward.1} parent=47 // pred_fallthru
        _
    $region48: #{sa_module_forward.1} parent=5 // pred_fallthru
      _
  $region6: #{sa_module_forward.1} parent=0 // loop_footer
    %s15 = sadd.s32 1, %s11
  $region7: #{sa_module_forward.1} parent=0 // loop_footer_branch
    %10 = sbr.rel target = $region3
  $region8: #{sa_module_forward.1} parent=0 // loop_exit
    _

</llo_original>
